<compile_context>
chip_gen: v7x
topology: tpu7x:2x2x1
jax: 0.10.0
libtpu: 0.0.40
codegen_flags: <defaults>
</compile_context>

<pallas_src>
import math

import jax
import jax.numpy as jnp
from jax.experimental import pallas as pl
from jax.experimental.pallas import tpu as pltpu

_VMEM_LIMIT = 48 * 1024 * 1024  # safe on v5e/v6e (128 MiB) and v7x (64 MiB)


# --------------------------------------------------------------------------
# Kernel A: GroupNorm + per-head q/k/v projection
# --------------------------------------------------------------------------
def _make_norm_qkv_kernel(n_head: int, norm_groups: int):
    def kernel(x_ref, gamma_ref, beta_ref, oh_ref, oht_ref,
               wq_ref, wk_ref, wv_ref, q_ref, k_ref, v_ref):
        x = x_ref[0]                                   # (S, C) f32
        S, C = x.shape
        cnt = float(S * (C // norm_groups))

        # ---- GroupNorm (two-pass: mean, then centered sum of squares) ----
        colsum = jnp.sum(x, axis=0, keepdims=True)                      # (1, C)
        mean_g = jnp.dot(colsum, oh_ref[...],
                         preferred_element_type=jnp.float32) / cnt      # (1, G)
        mean_c = jnp.dot(mean_g, oht_ref[...],
                         preferred_element_type=jnp.float32)            # (1, C)
        d = x - mean_c
        colsq = jnp.sum(d * d, axis=0, keepdims=True)                   # (1, C)
        var_g = jnp.dot(colsq, oh_ref[...],
                        preferred_element_type=jnp.float32) / cnt       # (1, G)
        var_c = jnp.dot(var_g, oht_ref[...],
                        preferred_element_type=jnp.float32)             # (1, C)
        xn = d * jax.lax.rsqrt(var_c + 1e-5) * gamma_ref[...] + beta_ref[...]
        xnb = xn.astype(jnp.bfloat16)

        # ---- per-head projections: bf16 MXU operands, f32 accumulation ----
        # (scale 1/sqrt(C) already folded into wq in the wrapper)
        for h in range(n_head):
            q_ref[0, h, :, :] = jnp.dot(
                xnb, wq_ref[h], preferred_element_type=jnp.float32
            ).astype(jnp.bfloat16)
            k_ref[0, h, :, :] = jnp.dot(
                xnb, wk_ref[h], preferred_element_type=jnp.float32
            ).astype(jnp.bfloat16)
            v_ref[0, h, :, :] = jnp.dot(
                xnb, wv_ref[h], preferred_element_type=jnp.float32
            ).astype(jnp.bfloat16)

    return kernel


# --------------------------------------------------------------------------
# Kernel B: flash attention + fused per-head out-projection + bias + residual
# --------------------------------------------------------------------------
def _flash_attn_out_kernel(x_ref, q_ref, k_ref, v_ref, wout_ref, bout_ref,
                           o_ref, m_ref, l_ref, acc_ref, oacc_ref):
    h = pl.program_id(2)
    j = pl.program_id(3)
    nh = pl.num_programs(2)
    nj = pl.num_programs(3)

    @pl.when(jnp.logical_and(h == 0, j == 0))
    def _():
        oacc_ref[...] = jnp.zeros(oacc_ref.shape, jnp.float32)

    @pl.when(j == 0)
    def _():
        m_ref[...] = jnp.full(m_ref.shape, -jnp.inf, jnp.float32)
        l_ref[...] = jnp.zeros(l_ref.shape, jnp.float32)
        acc_ref[...] = jnp.zeros(acc_ref.shape, jnp.float32)

    q = q_ref[0, 0, :, :]                 # (tq, hd) bf16 (softmax scale folded)
    k = k_ref[0, 0, :, :]                 # (tk, hd) bf16
    v = v_ref[0, 0, :, :]                 # (tk, hd) bf16

    # q @ k^T expressed as dot_general contracting last dims (no relayout of k)
    s = jax.lax.dot_general(q, k, (((1,), (1,)), ((), ())),
                            preferred_element_type=jnp.float32)       # (tq, tk)

    m_prev = m_ref[...]
    m_new = jnp.maximum(m_prev, jnp.max(s, axis=-1, keepdims=True))
    alpha = jnp.exp(m_prev - m_new)
    p = jnp.exp(s - m_new)
    l_ref[...] = alpha * l_ref[...] + jnp.sum(p, axis=-1, keepdims=True)
    acc_ref[...] = alpha * acc_ref[...] + jnp.dot(
        p.astype(jnp.bfloat16), v, preferred_element_type=jnp.float32)
    m_ref[...] = m_new

    @pl.when(j == nj - 1)
    def _():
        # finalize this head: normalize once, project into the output columns
        attn_h = acc_ref[...] * pl.reciprocal(l_ref[...], approx=True)  # (tq, hd)
        oacc_ref[...] += jnp.dot(attn_h.astype(jnp.bfloat16), wout_ref[0],
                                 preferred_element_type=jnp.float32)

    @pl.when(jnp.logical_and(h == nh - 1, j == nj - 1))
    def _():
        o_ref[0] = oacc_ref[...] + bout_ref[...] + x_ref[0]


# --------------------------------------------------------------------------
# Wrapper
# --------------------------------------------------------------------------
def self_attention_pallas(x_nchw, gamma, beta, w_qkv, w_out, b_out,
                          n_head: int, norm_groups: int,
                          *, tq: int = 128, tk: int = 128):
    """x_nchw: (B, C, H, W) f32. w_qkv: (3C, C), w_out: (C, C), b_out: (C,)."""
    B, C, H, W = x_nchw.shape
    S = H * W
    assert C % n_head == 0 and C % norm_groups == 0
    hd = C // n_head
    G = norm_groups
    tq = min(tq, S)
    tk = min(tk, S)
    assert S % tq == 0 and S % tk == 0
    assert (tq % 8 == 0 or tq == S) and (tk % 8 == 0 or tk == S)

    x = jnp.transpose(x_nchw, (0, 2, 3, 1)).reshape(B, S, C).astype(jnp.float32)

    onehot = ((jnp.arange(C) // (C // G))[:, None]
              == jnp.arange(G)[None, :]).astype(jnp.float32)            # (C, G)
    onehot_t = onehot.T                                                 # (G, C)
    gamma2 = gamma.reshape(1, C).astype(jnp.float32)
    beta2 = beta.reshape(1, C).astype(jnp.float32)

    # qkv conv weight (3C, C): the module views the 3C output channels as
    # (n_head, 3*hd) with per-head order [q | k | v].
    w = w_qkv.astype(jnp.float32).reshape(n_head, 3, hd, C)
    scale = 1.0 / math.sqrt(C)
    wq = (jnp.transpose(w[:, 0], (0, 2, 1)) * scale).astype(jnp.bfloat16)  # (h,C,hd)
    wk = jnp.transpose(w[:, 1], (0, 2, 1)).astype(jnp.bfloat16)
    wv = jnp.transpose(w[:, 2], (0, 2, 1)).astype(jnp.bfloat16)

    # out conv weight (C_out, C_in): head h feeds rows [h*hd:(h+1)*hd) of W^T.
    wout_h = w_out.astype(jnp.float32).T.reshape(n_head, hd, C).astype(jnp.bfloat16)
    bout2 = b_out.reshape(1, C).astype(jnp.float32)

    # ---- Kernel A: GroupNorm + q/k/v projection --------------------------
    qkv_struct = jax.ShapeDtypeStruct((B, n_head, S, hd), jnp.bfloat16)
    qkv_spec = pl.BlockSpec((1, n_head, S, hd), lambda b: (b, 0, 0, 0))
    q, k, v = pl.pallas_call(
        _make_norm_qkv_kernel(n_head, norm_groups),
        out_shape=(qkv_struct, qkv_struct, qkv_struct),
        grid_spec=pltpu.PrefetchScalarGridSpec(
            num_scalar_prefetch=0,
            grid=(B,),
            in_specs=[
                pl.BlockSpec((1, S, C), lambda b: (b, 0, 0)),           # x
                pl.BlockSpec((1, C), lambda b: (0, 0)),                 # gamma
                pl.BlockSpec((1, C), lambda b: (0, 0)),                 # beta
                pl.BlockSpec((C, G), lambda b: (0, 0)),                 # onehot
                pl.BlockSpec((G, C), lambda b: (0, 0)),                 # onehot^T
                pl.BlockSpec((n_head, C, hd), lambda b: (0, 0, 0)),     # Wq
                pl.BlockSpec((n_head, C, hd), lambda b: (0, 0, 0)),     # Wk
                pl.BlockSpec((n_head, C, hd), lambda b: (0, 0, 0)),     # Wv
            ],
            out_specs=(qkv_spec, qkv_spec, qkv_spec),
        ),
        compiler_params=pltpu.CompilerParams(
            dimension_semantics=("parallel",),
            vmem_limit_bytes=_VMEM_LIMIT),
    )(x, gamma2, beta2, onehot, onehot_t, wq, wk, wv)

    # ---- Kernel B: flash attention + out-proj + bias + residual ----------
    nq, nk = S // tq, S // tk
    flops = (4 * S * S * hd + 2 * S * hd * C) * B * n_head
    transcendentals = B * n_head * S * S
    bytes_accessed = (2 * B * S * C * 4               # residual in + output out
                      + B * S * C * 2                 # q (bf16)
                      + 2 * B * S * C * 2 * nq)       # k, v re-read per q tile

    out = pl.pallas_call(
        _flash_attn_out_kernel,
        out_shape=jax.ShapeDtypeStruct((B, S, C), jnp.float32),
        grid_spec=pltpu.PrefetchScalarGridSpec(
            num_scalar_prefetch=0,
            grid=(B, nq, n_head, nk),
            in_specs=[
                pl.BlockSpec((1, tq, C), lambda b, i, h, j: (b, i, 0)),        # x
                pl.BlockSpec((1, 1, tq, hd), lambda b, i, h, j: (b, h, i, 0)), # q
                pl.BlockSpec((1, 1, tk, hd), lambda b, i, h, j: (b, h, j, 0)), # k
                pl.BlockSpec((1, 1, tk, hd), lambda b, i, h, j: (b, h, j, 0)), # v
                pl.BlockSpec((1, hd, C), lambda b, i, h, j: (h, 0, 0)),        # Wout_h
                pl.BlockSpec((1, C), lambda b, i, h, j: (0, 0)),               # b_out
            ],
            out_specs=pl.BlockSpec((1, tq, C), lambda b, i, h, j: (b, i, 0)),
            scratch_shapes=[
                pltpu.VMEM((tq, 1), jnp.float32),      # running max m
                pltpu.VMEM((tq, 1), jnp.float32),      # running denom l
                pltpu.VMEM((tq, hd), jnp.float32),     # per-head acc
                pltpu.VMEM((tq, C), jnp.float32),      # fused out-proj accumulator
            ],
        ),
        compiler_params=pltpu.CompilerParams(
            dimension_semantics=("parallel", "parallel", "arbitrary", "arbitrary"),
            vmem_limit_bytes=_VMEM_LIMIT),
        cost_estimate=pl.CostEstimate(flops=flops,
                                      transcendentals=transcendentals,
                                      bytes_accessed=bytes_accessed),
    )(x, q, k, v, wout_h, bout2)

    return jnp.transpose(out.reshape(B, H, W, C), (0, 3, 1, 2))


# --------------------------------------------------------------------------
# Pure-JAX reference (matches the PyTorch module semantics, f32)
# --------------------------------------------------------------------------
def self_attention_reference(x, gamma, beta, w_qkv, w_out, b_out,
                             n_head: int, groups: int):
    B, C, H, W = x.shape
    xg = x.reshape(B, groups, C // groups, H, W)
    mean = xg.mean(axis=(2, 3, 4), keepdims=True)
    var = xg.var(axis=(2, 3, 4), keepdims=True)
    xn = (xg - mean) / jnp.sqrt(var + 1e-5)
    xn = xn.reshape(B, C, H, W) * gamma[None, :, None, None] + beta[None, :, None, None]
    qkv = jnp.einsum('bchw,oc->bohw', xn, w_qkv)
    hd = C // n_head
    qkv = qkv.reshape(B, n_head, 3 * hd, H, W)
    q, k, v = qkv[:, :, :hd], qkv[:, :, hd:2 * hd], qkv[:, :, 2 * hd:]
    attn = jnp.einsum('bnchw,bncyx->bnhwyx', q, k) / math.sqrt(C)
    attn = attn.reshape(B, n_head, H, W, H * W)
    attn = jax.nn.softmax(attn, axis=-1)
    attn = attn.reshape(B, n_head, H, W, H, W)
    out = jnp.einsum('bnhwyx,bncyx->bnchw', attn, v)
    out = out.reshape(B, C, H, W)
    out = jnp.einsum('bchw,oc->bohw', out, w_out) + b_out[None, :, None, None]
    return out + x


if __name__ == "__main__":
    B, C, H, W = 2, 32, 16, 16
    n_head, norm_groups = 4, 8

    key = jax.random.PRNGKey(0)
    k_x, k_g, k_b, k_qkv, k_out, k_bo = jax.random.split(key, 6)

    x = jax.random.normal(k_x, (B, C, H, W), dtype=jnp.float32)
    gamma = 1.0 + 0.1 * jax.random.normal(k_g, (C,), dtype=jnp.float32)
    beta = 0.1 * jax.random.normal(k_b, (C,), dtype=jnp.float32)
    w_qkv = 0.2 * jax.random.normal(k_qkv, (3 * C, C), dtype=jnp.float32)
    w_out = 0.2 * jax.random.normal(k_out, (C, C), dtype=jnp.float32)
    b_out = 0.1 * jax.random.normal(k_bo, (C,), dtype=jnp.float32)

    y = self_attention_pallas(x, gamma, beta, w_qkv, w_out, b_out,
                              n_head, norm_groups)
    y = jax.block_until_ready(y)

    y_ref = self_attention_reference(x, gamma, beta, w_qkv, w_out, b_out,
                                     n_head, norm_groups)
    # bf16 MXU operands (with f32 accumulation) -> validate at bf16 tolerance.
    if not jnp.allclose(y, y_ref, atol=5e-2, rtol=5e-2):
        raise AssertionError("Pallas kernel mismatch vs reference")

    print("KERNEL_OK")
</pallas_src>

<mosaic_0001>
module attributes {stable_mosaic.version = 11 : i64} {
  func.func @kernel(%arg0: i32, %arg1: memref<1x256x32xf32, #tpu.memory_space<vmem>>, %arg2: memref<1x32xf32, #tpu.memory_space<vmem>>, %arg3: memref<1x32xf32, #tpu.memory_space<vmem>>, %arg4: memref<32x8xf32, #tpu.memory_space<vmem>>, %arg5: memref<8x32xf32, #tpu.memory_space<vmem>>, %arg6: memref<4x32x8xbf16, #tpu.memory_space<vmem>>, %arg7: memref<4x32x8xbf16, #tpu.memory_space<vmem>>, %arg8: memref<4x32x8xbf16, #tpu.memory_space<vmem>>, %arg9: memref<1x4x256x8xbf16, #tpu.memory_space<vmem>>, %arg10: memref<1x4x256x8xbf16, #tpu.memory_space<vmem>>, %arg11: memref<1x4x256x8xbf16, #tpu.memory_space<vmem>>) attributes {dimension_semantics = [#tpu.dimension_semantics<parallel>], iteration_bounds = array<i64: 2>, scalar_prefetch = 0 : i64, scratch_operands = 0 : i64, tpu.core_type = #tpu.core_type<tc>, window_params = [{transform_indices = @transform_0, window_bounds = array<i64: 1, 256, 32>}, {pipeline_mode = #tpu.pipeline_mode<synchronous>, transform_indices = @transform_1, window_bounds = array<i64: 1, 32>}, {pipeline_mode = #tpu.pipeline_mode<synchronous>, transform_indices = @transform_2, window_bounds = array<i64: 1, 32>}, {pipeline_mode = #tpu.pipeline_mode<synchronous>, transform_indices = @transform_3, window_bounds = array<i64: 32, 8>}, {pipeline_mode = #tpu.pipeline_mode<synchronous>, transform_indices = @transform_4, window_bounds = array<i64: 8, 32>}, {pipeline_mode = #tpu.pipeline_mode<synchronous>, transform_indices = @transform_5, window_bounds = array<i64: 4, 32, 8>}, {pipeline_mode = #tpu.pipeline_mode<synchronous>, transform_indices = @transform_6, window_bounds = array<i64: 4, 32, 8>}, {pipeline_mode = #tpu.pipeline_mode<synchronous>, transform_indices = @transform_7, window_bounds = array<i64: 4, 32, 8>}, {transform_indices = @transform_8, window_bounds = array<i64: 1, 4, 256, 8>}, {transform_indices = @transform_9, window_bounds = array<i64: 1, 4, 256, 8>}, {transform_indices = @transform_10, window_bounds = array<i64: 1, 4, 256, 8>}]} {
    %c0 = arith.constant 0 : index
    %c0_0 = arith.constant 0 : index
    %c0_1 = arith.constant 0 : index
    %0 = vector.load %arg1[%c0, %c0_0, %c0_1] : memref<1x256x32xf32, #tpu.memory_space<vmem>>, vector<1x256x32xf32>
    %1 = vector.shape_cast %0 : vector<1x256x32xf32> to vector<256x32xf32>
    %cst = arith.constant dense<0.000000e+00> : vector<32xf32>
    %2 = vector.multi_reduction <add>, %1, %cst [0] : vector<256x32xf32> to vector<32xf32>
    %3 = vector.shape_cast %2 : vector<32xf32> to vector<1x32xf32>
    %c0_2 = arith.constant 0 : index
    %c0_3 = arith.constant 0 : index
    %4 = vector.load %arg4[%c0_2, %c0_3] : memref<32x8xf32, #tpu.memory_space<vmem>>, vector<32x8xf32>
    %cst_4 = arith.constant dense<0.000000e+00> : vector<1x8xf32>
    %5 = tpu.matmul %3, %4, %cst_4 {dimension_numbers = #tpu.dot_dimension_numbers<[1], [0], [0], [1], [0, 0, 1, 1], [], []>} : vector<1x32xf32>, vector<32x8xf32>, vector<1x8xf32> -> vector<1x8xf32>
    %cst_5 = arith.constant 1.024000e+03 : f32
    %6 = vector.broadcast %cst_5 : f32 to vector<1x8xf32>
    %7 = arith.divf %5, %6 : vector<1x8xf32>
    %c0_6 = arith.constant 0 : index
    %c0_7 = arith.constant 0 : index
    %8 = vector.load %arg5[%c0_6, %c0_7] : memref<8x32xf32, #tpu.memory_space<vmem>>, vector<8x32xf32>
    %cst_8 = arith.constant dense<0.000000e+00> : vector<1x32xf32>
    %9 = tpu.matmul %7, %8, %cst_8 {dimension_numbers = #tpu.dot_dimension_numbers<[1], [0], [0], [1], [0, 0, 1, 1], [], []>} : vector<1x8xf32>, vector<8x32xf32>, vector<1x32xf32> -> vector<1x32xf32>
    %10 = vector.broadcast %9 : vector<1x32xf32> to vector<256x32xf32>
    %11 = arith.subf %1, %10 : vector<256x32xf32>
    %12 = arith.mulf %11, %11 : vector<256x32xf32>
    %cst_9 = arith.constant dense<0.000000e+00> : vector<32xf32>
    %13 = vector.multi_reduction <add>, %12, %cst_9 [0] : vector<256x32xf32> to vector<32xf32>
    %14 = vector.shape_cast %13 : vector<32xf32> to vector<1x32xf32>
    %c0_10 = arith.constant 0 : index
    %c0_11 = arith.constant 0 : index
    %15 = vector.load %arg4[%c0_10, %c0_11] : memref<32x8xf32, #tpu.memory_space<vmem>>, vector<32x8xf32>
    %cst_12 = arith.constant dense<0.000000e+00> : vector<1x8xf32>
    %16 = tpu.matmul %14, %15, %cst_12 {dimension_numbers = #tpu.dot_dimension_numbers<[1], [0], [0], [1], [0, 0, 1, 1], [], []>} : vector<1x32xf32>, vector<32x8xf32>, vector<1x8xf32> -> vector<1x8xf32>
    %cst_13 = arith.constant 1.024000e+03 : f32
    %17 = vector.broadcast %cst_13 : f32 to vector<1x8xf32>
    %18 = arith.divf %16, %17 : vector<1x8xf32>
    %c0_14 = arith.constant 0 : index
    %c0_15 = arith.constant 0 : index
    %19 = vector.load %arg5[%c0_14, %c0_15] : memref<8x32xf32, #tpu.memory_space<vmem>>, vector<8x32xf32>
    %cst_16 = arith.constant dense<0.000000e+00> : vector<1x32xf32>
    %20 = tpu.matmul %18, %19, %cst_16 {dimension_numbers = #tpu.dot_dimension_numbers<[1], [0], [0], [1], [0, 0, 1, 1], [], []>} : vector<1x8xf32>, vector<8x32xf32>, vector<1x32xf32> -> vector<1x32xf32>
    %cst_17 = arith.constant 9.99999974E-6 : f32
    %21 = vector.broadcast %cst_17 : f32 to vector<1x32xf32>
    %22 = arith.addf %20, %21 : vector<1x32xf32>
    %23 = math.rsqrt %22 : vector<1x32xf32>
    %24 = vector.broadcast %23 : vector<1x32xf32> to vector<256x32xf32>
    %25 = arith.mulf %11, %24 : vector<256x32xf32>
    %c0_18 = arith.constant 0 : index
    %c0_19 = arith.constant 0 : index
    %26 = vector.load %arg2[%c0_18, %c0_19] : memref<1x32xf32, #tpu.memory_space<vmem>>, vector<1x32xf32>
    %27 = vector.broadcast %26 : vector<1x32xf32> to vector<256x32xf32>
    %28 = arith.mulf %25, %27 : vector<256x32xf32>
    %c0_20 = arith.constant 0 : index
    %c0_21 = arith.constant 0 : index
    %29 = vector.load %arg3[%c0_20, %c0_21] : memref<1x32xf32, #tpu.memory_space<vmem>>, vector<1x32xf32>
    %30 = vector.broadcast %29 : vector<1x32xf32> to vector<256x32xf32>
    %31 = arith.addf %28, %30 : vector<256x32xf32>
    %32 = arith.truncf %31 : vector<256x32xf32> to vector<256x32xbf16>
    %c0_22 = arith.constant 0 : index
    %c0_23 = arith.constant 0 : index
    %c0_24 = arith.constant 0 : index
    %33 = vector.load %arg6[%c0_22, %c0_23, %c0_24] : memref<4x32x8xbf16, #tpu.memory_space<vmem>>, vector<1x32x8xbf16>
    %34 = vector.shape_cast %33 : vector<1x32x8xbf16> to vector<32x8xbf16>
    %cst_25 = arith.constant dense<0.000000e+00> : vector<256x8xf32>
    %35 = tpu.matmul %32, %34, %cst_25 {dimension_numbers = #tpu.dot_dimension_numbers<[1], [0], [0], [1], [0, 0, 1, 1], [], []>} : vector<256x32xbf16>, vector<32x8xbf16>, vector<256x8xf32> -> vector<256x8xf32>
    %36 = arith.truncf %35 : vector<256x8xf32> to vector<256x8xbf16>
    %c0_26 = arith.constant 0 : index
    %c0_27 = arith.constant 0 : index
    %c0_28 = arith.constant 0 : index
    %c0_29 = arith.constant 0 : index
    %37 = vector.load %arg9[%c0_26, %c0_27, %c0_28, %c0_29] : memref<1x4x256x8xbf16, #tpu.memory_space<vmem>>, vector<1x1x256x8xbf16>
    %38 = vector.shape_cast %37 : vector<1x1x256x8xbf16> to vector<256x8xbf16>
    %39 = vector.shape_cast %36 : vector<256x8xbf16> to vector<1x1x256x8xbf16>
    tpu.vector_store %arg9[%c0_26, %c0_27, %c0_28, %c0_29], %39 {strides = array<i32>} : memref<1x4x256x8xbf16, #tpu.memory_space<vmem>>, vector<1x1x256x8xbf16>,
    %c0_30 = arith.constant 0 : index
    %c0_31 = arith.constant 0 : index
    %c0_32 = arith.constant 0 : index
    %40 = vector.load %arg7[%c0_30, %c0_31, %c0_32] : memref<4x32x8xbf16, #tpu.memory_space<vmem>>, vector<1x32x8xbf16>
    %41 = vector.shape_cast %40 : vector<1x32x8xbf16> to vector<32x8xbf16>
    %cst_33 = arith.constant dense<0.000000e+00> : vector<256x8xf32>
    %42 = tpu.matmul %32, %41, %cst_33 {dimension_numbers = #tpu.dot_dimension_numbers<[1], [0], [0], [1], [0, 0, 1, 1], [], []>} : vector<256x32xbf16>, vector<32x8xbf16>, vector<256x8xf32> -> vector<256x8xf32>
    %43 = arith.truncf %42 : vector<256x8xf32> to vector<256x8xbf16>
    %c0_34 = arith.constant 0 : index
    %c0_35 = arith.constant 0 : index
    %c0_36 = arith.constant 0 : index
    %c0_37 = arith.constant 0 : index
    %44 = vector.load %arg10[%c0_34, %c0_35, %c0_36, %c0_37] : memref<1x4x256x8xbf16, #tpu.memory_space<vmem>>, vector<1x1x256x8xbf16>
    %45 = vector.shape_cast %44 : vector<1x1x256x8xbf16> to vector<256x8xbf16>
    %46 = vector.shape_cast %43 : vector<256x8xbf16> to vector<1x1x256x8xbf16>
    tpu.vector_store %arg10[%c0_34, %c0_35, %c0_36, %c0_37], %46 {strides = array<i32>} : memref<1x4x256x8xbf16, #tpu.memory_space<vmem>>, vector<1x1x256x8xbf16>,
    %c0_38 = arith.constant 0 : index
    %c0_39 = arith.constant 0 : index
    %c0_40 = arith.constant 0 : index
    %47 = vector.load %arg8[%c0_38, %c0_39, %c0_40] : memref<4x32x8xbf16, #tpu.memory_space<vmem>>, vector<1x32x8xbf16>
    %48 = vector.shape_cast %47 : vector<1x32x8xbf16> to vector<32x8xbf16>
    %cst_41 = arith.constant dense<0.000000e+00> : vector<256x8xf32>
    %49 = tpu.matmul %32, %48, %cst_41 {dimension_numbers = #tpu.dot_dimension_numbers<[1], [0], [0], [1], [0, 0, 1, 1], [], []>} : vector<256x32xbf16>, vector<32x8xbf16>, vector<256x8xf32> -> vector<256x8xf32>
    %50 = arith.truncf %49 : vector<256x8xf32> to vector<256x8xbf16>
    %c0_42 = arith.constant 0 : index
    %c0_43 = arith.constant 0 : index
    %c0_44 = arith.constant 0 : index
    %c0_45 = arith.constant 0 : index
    %51 = vector.load %arg11[%c0_42, %c0_43, %c0_44, %c0_45] : memref<1x4x256x8xbf16, #tpu.memory_space<vmem>>, vector<1x1x256x8xbf16>
    %52 = vector.shape_cast %51 : vector<1x1x256x8xbf16> to vector<256x8xbf16>
    %53 = vector.shape_cast %50 : vector<256x8xbf16> to vector<1x1x256x8xbf16>
    tpu.vector_store %arg11[%c0_42, %c0_43, %c0_44, %c0_45], %53 {strides = array<i32>} : memref<1x4x256x8xbf16, #tpu.memory_space<vmem>>, vector<1x1x256x8xbf16>,
    %c1 = arith.constant 1 : index
    %c0_46 = arith.constant 0 : index
    %c0_47 = arith.constant 0 : index
    %54 = vector.load %arg6[%c1, %c0_46, %c0_47] : memref<4x32x8xbf16, #tpu.memory_space<vmem>>, vector<1x32x8xbf16>
    %55 = vector.shape_cast %54 : vector<1x32x8xbf16> to vector<32x8xbf16>
    %cst_48 = arith.constant dense<0.000000e+00> : vector<256x8xf32>
    %56 = tpu.matmul %32, %55, %cst_48 {dimension_numbers = #tpu.dot_dimension_numbers<[1], [0], [0], [1], [0, 0, 1, 1], [], []>} : vector<256x32xbf16>, vector<32x8xbf16>, vector<256x8xf32> -> vector<256x8xf32>
    %57 = arith.truncf %56 : vector<256x8xf32> to vector<256x8xbf16>
    %c0_49 = arith.constant 0 : index
    %c1_50 = arith.constant 1 : index
    %c0_51 = arith.constant 0 : index
    %c0_52 = arith.constant 0 : index
    %58 = vector.load %arg9[%c0_49, %c1_50, %c0_51, %c0_52] : memref<1x4x256x8xbf16, #tpu.memory_space<vmem>>, vector<1x1x256x8xbf16>
    %59 = vector.shape_cast %58 : vector<1x1x256x8xbf16> to vector<256x8xbf16>
    %60 = vector.shape_cast %57 : vector<256x8xbf16> to vector<1x1x256x8xbf16>
    tpu.vector_store %arg9[%c0_49, %c1_50, %c0_51, %c0_52], %60 {strides = array<i32>} : memref<1x4x256x8xbf16, #tpu.memory_space<vmem>>, vector<1x1x256x8xbf16>,
    %c1_53 = arith.constant 1 : index
    %c0_54 = arith.constant 0 : index
    %c0_55 = arith.constant 0 : index
    %61 = vector.load %arg7[%c1_53, %c0_54, %c0_55] : memref<4x32x8xbf16, #tpu.memory_space<vmem>>, vector<1x32x8xbf16>
    %62 = vector.shape_cast %61 : vector<1x32x8xbf16> to vector<32x8xbf16>
    %cst_56 = arith.constant dense<0.000000e+00> : vector<256x8xf32>
    %63 = tpu.matmul %32, %62, %cst_56 {dimension_numbers = #tpu.dot_dimension_numbers<[1], [0], [0], [1], [0, 0, 1, 1], [], []>} : vector<256x32xbf16>, vector<32x8xbf16>, vector<256x8xf32> -> vector<256x8xf32>
    %64 = arith.truncf %63 : vector<256x8xf32> to vector<256x8xbf16>
    %c0_57 = arith.constant 0 : index
    %c1_58 = arith.constant 1 : index
    %c0_59 = arith.constant 0 : index
    %c0_60 = arith.constant 0 : index
    %65 = vector.load %arg10[%c0_57, %c1_58, %c0_59, %c0_60] : memref<1x4x256x8xbf16, #tpu.memory_space<vmem>>, vector<1x1x256x8xbf16>
    %66 = vector.shape_cast %65 : vector<1x1x256x8xbf16> to vector<256x8xbf16>
    %67 = vector.shape_cast %64 : vector<256x8xbf16> to vector<1x1x256x8xbf16>
    tpu.vector_store %arg10[%c0_57, %c1_58, %c0_59, %c0_60], %67 {strides = array<i32>} : memref<1x4x256x8xbf16, #tpu.memory_space<vmem>>, vector<1x1x256x8xbf16>,
    %c1_61 = arith.constant 1 : index
    %c0_62 = arith.constant 0 : index
    %c0_63 = arith.constant 0 : index
    %68 = vector.load %arg8[%c1_61, %c0_62, %c0_63] : memref<4x32x8xbf16, #tpu.memory_space<vmem>>, vector<1x32x8xbf16>
    %69 = vector.shape_cast %68 : vector<1x32x8xbf16> to vector<32x8xbf16>
    %cst_64 = arith.constant dense<0.000000e+00> : vector<256x8xf32>
    %70 = tpu.matmul %32, %69, %cst_64 {dimension_numbers = #tpu.dot_dimension_numbers<[1], [0], [0], [1], [0, 0, 1, 1], [], []>} : vector<256x32xbf16>, vector<32x8xbf16>, vector<256x8xf32> -> vector<256x8xf32>
    %71 = arith.truncf %70 : vector<256x8xf32> to vector<256x8xbf16>
    %c0_65 = arith.constant 0 : index
    %c1_66 = arith.constant 1 : index
    %c0_67 = arith.constant 0 : index
    %c0_68 = arith.constant 0 : index
    %72 = vector.load %arg11[%c0_65, %c1_66, %c0_67, %c0_68] : memref<1x4x256x8xbf16, #tpu.memory_space<vmem>>, vector<1x1x256x8xbf16>
    %73 = vector.shape_cast %72 : vector<1x1x256x8xbf16> to vector<256x8xbf16>
    %74 = vector.shape_cast %71 : vector<256x8xbf16> to vector<1x1x256x8xbf16>
    tpu.vector_store %arg11[%c0_65, %c1_66, %c0_67, %c0_68], %74 {strides = array<i32>} : memref<1x4x256x8xbf16, #tpu.memory_space<vmem>>, vector<1x1x256x8xbf16>,
    %c2 = arith.constant 2 : index
    %c0_69 = arith.constant 0 : index
    %c0_70 = arith.constant 0 : index
    %75 = vector.load %arg6[%c2, %c0_69, %c0_70] : memref<4x32x8xbf16, #tpu.memory_space<vmem>>, vector<1x32x8xbf16>
    %76 = vector.shape_cast %75 : vector<1x32x8xbf16> to vector<32x8xbf16>
    %cst_71 = arith.constant dense<0.000000e+00> : vector<256x8xf32>
    %77 = tpu.matmul %32, %76, %cst_71 {dimension_numbers = #tpu.dot_dimension_numbers<[1], [0], [0], [1], [0, 0, 1, 1], [], []>} : vector<256x32xbf16>, vector<32x8xbf16>, vector<256x8xf32> -> vector<256x8xf32>
    %78 = arith.truncf %77 : vector<256x8xf32> to vector<256x8xbf16>
    %c0_72 = arith.constant 0 : index
    %c2_73 = arith.constant 2 : index
    %c0_74 = arith.constant 0 : index
    %c0_75 = arith.constant 0 : index
    %79 = vector.load %arg9[%c0_72, %c2_73, %c0_74, %c0_75] : memref<1x4x256x8xbf16, #tpu.memory_space<vmem>>, vector<1x1x256x8xbf16>
    %80 = vector.shape_cast %79 : vector<1x1x256x8xbf16> to vector<256x8xbf16>
    %81 = vector.shape_cast %78 : vector<256x8xbf16> to vector<1x1x256x8xbf16>
    tpu.vector_store %arg9[%c0_72, %c2_73, %c0_74, %c0_75], %81 {strides = array<i32>} : memref<1x4x256x8xbf16, #tpu.memory_space<vmem>>, vector<1x1x256x8xbf16>,
    %c2_76 = arith.constant 2 : index
    %c0_77 = arith.constant 0 : index
    %c0_78 = arith.constant 0 : index
    %82 = vector.load %arg7[%c2_76, %c0_77, %c0_78] : memref<4x32x8xbf16, #tpu.memory_space<vmem>>, vector<1x32x8xbf16>
    %83 = vector.shape_cast %82 : vector<1x32x8xbf16> to vector<32x8xbf16>
    %cst_79 = arith.constant dense<0.000000e+00> : vector<256x8xf32>
    %84 = tpu.matmul %32, %83, %cst_79 {dimension_numbers = #tpu.dot_dimension_numbers<[1], [0], [0], [1], [0, 0, 1, 1], [], []>} : vector<256x32xbf16>, vector<32x8xbf16>, vector<256x8xf32> -> vector<256x8xf32>
    %85 = arith.truncf %84 : vector<256x8xf32> to vector<256x8xbf16>
    %c0_80 = arith.constant 0 : index
    %c2_81 = arith.constant 2 : index
    %c0_82 = arith.constant 0 : index
    %c0_83 = arith.constant 0 : index
    %86 = vector.load %arg10[%c0_80, %c2_81, %c0_82, %c0_83] : memref<1x4x256x8xbf16, #tpu.memory_space<vmem>>, vector<1x1x256x8xbf16>
    %87 = vector.shape_cast %86 : vector<1x1x256x8xbf16> to vector<256x8xbf16>
    %88 = vector.shape_cast %85 : vector<256x8xbf16> to vector<1x1x256x8xbf16>
    tpu.vector_store %arg10[%c0_80, %c2_81, %c0_82, %c0_83], %88 {strides = array<i32>} : memref<1x4x256x8xbf16, #tpu.memory_space<vmem>>, vector<1x1x256x8xbf16>,
    %c2_84 = arith.constant 2 : index
    %c0_85 = arith.constant 0 : index
    %c0_86 = arith.constant 0 : index
    %89 = vector.load %arg8[%c2_84, %c0_85, %c0_86] : memref<4x32x8xbf16, #tpu.memory_space<vmem>>, vector<1x32x8xbf16>
    %90 = vector.shape_cast %89 : vector<1x32x8xbf16> to vector<32x8xbf16>
    %cst_87 = arith.constant dense<0.000000e+00> : vector<256x8xf32>
    %91 = tpu.matmul %32, %90, %cst_87 {dimension_numbers = #tpu.dot_dimension_numbers<[1], [0], [0], [1], [0, 0, 1, 1], [], []>} : vector<256x32xbf16>, vector<32x8xbf16>, vector<256x8xf32> -> vector<256x8xf32>
    %92 = arith.truncf %91 : vector<256x8xf32> to vector<256x8xbf16>
    %c0_88 = arith.constant 0 : index
    %c2_89 = arith.constant 2 : index
    %c0_90 = arith.constant 0 : index
    %c0_91 = arith.constant 0 : index
    %93 = vector.load %arg11[%c0_88, %c2_89, %c0_90, %c0_91] : memref<1x4x256x8xbf16, #tpu.memory_space<vmem>>, vector<1x1x256x8xbf16>
    %94 = vector.shape_cast %93 : vector<1x1x256x8xbf16> to vector<256x8xbf16>
    %95 = vector.shape_cast %92 : vector<256x8xbf16> to vector<1x1x256x8xbf16>
    tpu.vector_store %arg11[%c0_88, %c2_89, %c0_90, %c0_91], %95 {strides = array<i32>} : memref<1x4x256x8xbf16, #tpu.memory_space<vmem>>, vector<1x1x256x8xbf16>,
    %c3 = arith.constant 3 : index
    %c0_92 = arith.constant 0 : index
    %c0_93 = arith.constant 0 : index
    %96 = vector.load %arg6[%c3, %c0_92, %c0_93] : memref<4x32x8xbf16, #tpu.memory_space<vmem>>, vector<1x32x8xbf16>
    %97 = vector.shape_cast %96 : vector<1x32x8xbf16> to vector<32x8xbf16>
    %cst_94 = arith.constant dense<0.000000e+00> : vector<256x8xf32>
    %98 = tpu.matmul %32, %97, %cst_94 {dimension_numbers = #tpu.dot_dimension_numbers<[1], [0], [0], [1], [0, 0, 1, 1], [], []>} : vector<256x32xbf16>, vector<32x8xbf16>, vector<256x8xf32> -> vector<256x8xf32>
    %99 = arith.truncf %98 : vector<256x8xf32> to vector<256x8xbf16>
    %c0_95 = arith.constant 0 : index
    %c3_96 = arith.constant 3 : index
    %c0_97 = arith.constant 0 : index
    %c0_98 = arith.constant 0 : index
    %100 = vector.load %arg9[%c0_95, %c3_96, %c0_97, %c0_98] : memref<1x4x256x8xbf16, #tpu.memory_space<vmem>>, vector<1x1x256x8xbf16>
    %101 = vector.shape_cast %100 : vector<1x1x256x8xbf16> to vector<256x8xbf16>
    %102 = vector.shape_cast %99 : vector<256x8xbf16> to vector<1x1x256x8xbf16>
    tpu.vector_store %arg9[%c0_95, %c3_96, %c0_97, %c0_98], %102 {strides = array<i32>} : memref<1x4x256x8xbf16, #tpu.memory_space<vmem>>, vector<1x1x256x8xbf16>,
    %c3_99 = arith.constant 3 : index
    %c0_100 = arith.constant 0 : index
    %c0_101 = arith.constant 0 : index
    %103 = vector.load %arg7[%c3_99, %c0_100, %c0_101] : memref<4x32x8xbf16, #tpu.memory_space<vmem>>, vector<1x32x8xbf16>
    %104 = vector.shape_cast %103 : vector<1x32x8xbf16> to vector<32x8xbf16>
    %cst_102 = arith.constant dense<0.000000e+00> : vector<256x8xf32>
    %105 = tpu.matmul %32, %104, %cst_102 {dimension_numbers = #tpu.dot_dimension_numbers<[1], [0], [0], [1], [0, 0, 1, 1], [], []>} : vector<256x32xbf16>, vector<32x8xbf16>, vector<256x8xf32> -> vector<256x8xf32>
    %106 = arith.truncf %105 : vector<256x8xf32> to vector<256x8xbf16>
    %c0_103 = arith.constant 0 : index
    %c3_104 = arith.constant 3 : index
    %c0_105 = arith.constant 0 : index
    %c0_106 = arith.constant 0 : index
    %107 = vector.load %arg10[%c0_103, %c3_104, %c0_105, %c0_106] : memref<1x4x256x8xbf16, #tpu.memory_space<vmem>>, vector<1x1x256x8xbf16>
    %108 = vector.shape_cast %107 : vector<1x1x256x8xbf16> to vector<256x8xbf16>
    %109 = vector.shape_cast %106 : vector<256x8xbf16> to vector<1x1x256x8xbf16>
    tpu.vector_store %arg10[%c0_103, %c3_104, %c0_105, %c0_106], %109 {strides = array<i32>} : memref<1x4x256x8xbf16, #tpu.memory_space<vmem>>, vector<1x1x256x8xbf16>,
    %c3_107 = arith.constant 3 : index
    %c0_108 = arith.constant 0 : index
    %c0_109 = arith.constant 0 : index
    %110 = vector.load %arg8[%c3_107, %c0_108, %c0_109] : memref<4x32x8xbf16, #tpu.memory_space<vmem>>, vector<1x32x8xbf16>
    %111 = vector.shape_cast %110 : vector<1x32x8xbf16> to vector<32x8xbf16>
    %cst_110 = arith.constant dense<0.000000e+00> : vector<256x8xf32>
    %112 = tpu.matmul %32, %111, %cst_110 {dimension_numbers = #tpu.dot_dimension_numbers<[1], [0], [0], [1], [0, 0, 1, 1], [], []>} : vector<256x32xbf16>, vector<32x8xbf16>, vector<256x8xf32> -> vector<256x8xf32>
    %113 = arith.truncf %112 : vector<256x8xf32> to vector<256x8xbf16>
    %c0_111 = arith.constant 0 : index
    %c3_112 = arith.constant 3 : index
    %c0_113 = arith.constant 0 : index
    %c0_114 = arith.constant 0 : index
    %114 = vector.load %arg11[%c0_111, %c3_112, %c0_113, %c0_114] : memref<1x4x256x8xbf16, #tpu.memory_space<vmem>>, vector<1x1x256x8xbf16>
    %115 = vector.shape_cast %114 : vector<1x1x256x8xbf16> to vector<256x8xbf16>
    %116 = vector.shape_cast %113 : vector<256x8xbf16> to vector<1x1x256x8xbf16>
    tpu.vector_store %arg11[%c0_111, %c3_112, %c0_113, %c0_114], %116 {strides = array<i32>} : memref<1x4x256x8xbf16, #tpu.memory_space<vmem>>, vector<1x1x256x8xbf16>,
    return
  }
  func.func @transform_0(%arg0: i32) -> (i32, i32, i32) {
    %c0_i32 = arith.constant 0 : i32
    %c0_i32_0 = arith.constant 0 : i32
    %c0_i32_1 = arith.constant 0 : i32
    return %arg0, %c0_i32, %c0_i32_0 : i32, i32, i32
  }
  func.func @transform_1(%arg0: i32) -> (i32, i32) {
    %c0_i32 = arith.constant 0 : i32
    %c0_i32_0 = arith.constant 0 : i32
    %c0_i32_1 = arith.constant 0 : i32
    return %c0_i32, %c0_i32_0 : i32, i32
  }
  func.func @transform_2(%arg0: i32) -> (i32, i32) {
    %c0_i32 = arith.constant 0 : i32
    %c0_i32_0 = arith.constant 0 : i32
    %c0_i32_1 = arith.constant 0 : i32
    return %c0_i32, %c0_i32_0 : i32, i32
  }
  func.func @transform_3(%arg0: i32) -> (i32, i32) {
    %c0_i32 = arith.constant 0 : i32
    %c0_i32_0 = arith.constant 0 : i32
    %c0_i32_1 = arith.constant 0 : i32
    return %c0_i32, %c0_i32_0 : i32, i32
  }
  func.func @transform_4(%arg0: i32) -> (i32, i32) {
    %c0_i32 = arith.constant 0 : i32
    %c0_i32_0 = arith.constant 0 : i32
    %c0_i32_1 = arith.constant 0 : i32
    return %c0_i32, %c0_i32_0 : i32, i32
  }
  func.func @transform_5(%arg0: i32) -> (i32, i32, i32) {
    %c0_i32 = arith.constant 0 : i32
    %c0_i32_0 = arith.constant 0 : i32
    %c0_i32_1 = arith.constant 0 : i32
    %c0_i32_2 = arith.constant 0 : i32
    return %c0_i32, %c0_i32_0, %c0_i32_1 : i32, i32, i32
  }
  func.func @transform_6(%arg0: i32) -> (i32, i32, i32) {
    %c0_i32 = arith.constant 0 : i32
    %c0_i32_0 = arith.constant 0 : i32
    %c0_i32_1 = arith.constant 0 : i32
    %c0_i32_2 = arith.constant 0 : i32
    return %c0_i32, %c0_i32_0, %c0_i32_1 : i32, i32, i32
  }
  func.func @transform_7(%arg0: i32) -> (i32, i32, i32) {
    %c0_i32 = arith.constant 0 : i32
    %c0_i32_0 = arith.constant 0 : i32
    %c0_i32_1 = arith.constant 0 : i32
    %c0_i32_2 = arith.constant 0 : i32
    return %c0_i32, %c0_i32_0, %c0_i32_1 : i32, i32, i32
  }
  func.func @transform_8(%arg0: i32) -> (i32, i32, i32, i32) {
    %c0_i32 = arith.constant 0 : i32
    %c0_i32_0 = arith.constant 0 : i32
    %c0_i32_1 = arith.constant 0 : i32
    %c0_i32_2 = arith.constant 0 : i32
    return %arg0, %c0_i32, %c0_i32_0, %c0_i32_1 : i32, i32, i32, i32
  }
  func.func @transform_9(%arg0: i32) -> (i32, i32, i32, i32) {
    %c0_i32 = arith.constant 0 : i32
    %c0_i32_0 = arith.constant 0 : i32
    %c0_i32_1 = arith.constant 0 : i32
    %c0_i32_2 = arith.constant 0 : i32
    return %arg0, %c0_i32, %c0_i32_0, %c0_i32_1 : i32, i32, i32, i32
  }
  func.func @transform_10(%arg0: i32) -> (i32, i32, i32, i32) {
    %c0_i32 = arith.constant 0 : i32
    %c0_i32_0 = arith.constant 0 : i32
    %c0_i32_1 = arith.constant 0 : i32
    %c0_i32_2 = arith.constant 0 : i32
    return %arg0, %c0_i32, %c0_i32_0, %c0_i32_1 : i32, i32, i32, i32
  }
}

</mosaic_0001>

<llo_original>
// kernel: tpu_custom_call.1
$region0: #{tpu_custom_call.1}
  #allocation0 [shape = 'u32[]', space=smem, size = 0x4, offset = 0x4, fixed_abs, tag = 'smem constant byte address 0x4 - core index']
  #allocation1 [shape = 'u32[144,128]{1,0:T(1,128)}', space=vmem, size = 0x12000, scoped, tag = 'internal scratch']
  %s0 = inlined_call_operand.vmem [shape: f32[2,256,32], index: 0, kind: input, shape index: {}]
  %s1 = inlined_call_operand.vmem [shape: f32[1,32], index: 1, kind: input, shape index: {}]
  %s2 = inlined_call_operand.vmem [shape: f32[1,32], index: 2, kind: input, shape index: {}]
  %s3 = inlined_call_operand.vmem [shape: f32[32,8], index: 3, kind: input, shape index: {}]
  %s4 = inlined_call_operand.vmem [shape: f32[8,32], index: 4, kind: input, shape index: {}]
  %s5 = inlined_call_operand.vmem [shape: bf16[4,32,8], index: 5, kind: input, shape index: {}]
  %s6 = inlined_call_operand.vmem [shape: bf16[4,32,8], index: 6, kind: input, shape index: {}]
  %s7 = inlined_call_operand.vmem [shape: bf16[4,32,8], index: 7, kind: input, shape index: {}]
  %s8 = inlined_call_operand.vmem [shape: bf16[2,4,256,8], index: 8, kind: output, shape index: {0}]
  %s9 = inlined_call_operand.vmem [shape: bf16[2,4,256,8], index: 9, kind: output, shape index: {1}]
  %s10 = inlined_call_operand.vmem [shape: bf16[2,4,256,8], index: 10, kind: output, shape index: {2}]
  %11 = xla_tuple %s8, %s9, %s10
  %s12 = sld [smem:[#allocation0]]
  $region81: #{tpu_custom_call.1} parent=0
    _
  %s14 = ssub.s32 1, %s12
  %s15 = scalar_select 0, %s14, %s12
  loop: start=0, step=1, limit=4
  $region2: #{tpu_custom_call.1} parent=0 // loop_pre_header
    _
  $region3: #{tpu_custom_call.1} parent=0 // loop_header
    %s17 = sphi 0, %s21
    %p18 = scmp.ge.s32.totalorder %s17, 4
    %s27 = sphi 0, %s29
    %s30 = sphi 0, %s27
    %s31 = sphi 0, %s30
    %s47 = sphi 0, %s31
    %s51 = sphi 0, %s51
    %s53 = sphi 0, %s51
    %s54 = sphi 0, %s53
    %s68 = sphi 0, %s54
    %s72 = sphi 0, %s72
    %s74 = sphi 0, %s72
    %s75 = sphi 0, %s74
    %s89 = sphi 0, %s75
    %s93 = sphi 0, %s93
    %s95 = sphi 0, %s93
    %s96 = sphi 0, %s95
    %s110 = sphi 0, %s96
    %s114 = sphi 0, %s114
    %s116 = sphi 0, %s114
    %s117 = sphi 0, %s116
    %s131 = sphi 0, %s117
    %s135 = sphi 0, %s135
    %s137 = sphi 0, %s135
    %s138 = sphi 0, %s137
    %s152 = sphi 0, %s138
    %s156 = sphi 0, %s156
    %s158 = sphi 0, %s156
    %s159 = sphi 0, %s158
    %s173 = sphi 0, %s159
    %s177 = sphi 0, %s177
    %s179 = sphi 0, %s177
    %s180 = sphi 0, %s179
    %s194 = sphi 0, %s180
    %s200 = sphi 0, %s202
    %s203 = sphi 0, %s200
    %s204 = sphi 0, %s203
    %s220 = sphi 0, %s204
    %s226 = sphi 0, %s228
    %s229 = sphi 0, %s226
    %s230 = sphi 0, %s229
    %s246 = sphi 0, %s230
    %s252 = sphi 0, %s254
    %s255 = sphi 0, %s252
    %s256 = sphi 0, %s255
    %s272 = sphi 0, %s256
  $region4: #{tpu_custom_call.1} parent=0 // loop_header_branch
    %20 = sbr.rel (%p18) target = $region8
  $region5: #{tpu_custom_call.1} parent=0 // loop_body
    %s22 = ssub.s32 %s17, 1
    %s23 = ssub.s32 %s17, 2
    %s24 = sadd.s32 %s17, 1
    %s25 = ssub.s32 %s17, %s24
    %p26 = scmp.eq.s32.totalorder %s25, 0
    %s28 = sadd.s32 %s27, 1
    %s29 = scalar_select %p26, %s27, %s28
    %p32 = pneg %p26
    %p33 = scmp.eq.s32.totalorder %s17, 1
    %p34 = por %p32, %p33
    %p35 = scmp.ne.s32.totalorder %s27, %s30
    %p36 = scmp.eq.s32.totalorder %s17, 0
    %p37 = por %p35, %p36
    %p38 = scmp.ne.s32.totalorder %s27, %s30
    %p39 = scmp.eq.s32.totalorder %s22, 1
    %p40 = por %p38, %p39
    %p41 = scmp.ne.s32.totalorder %s30, %s31
    %p42 = scmp.eq.s32.totalorder %s22, 0
    %p43 = por %p41, %p42
    %p44 = scmp.ne.s32.totalorder %s30, %s31
    %p45 = scmp.eq.s32.totalorder %s23, 1
    %p46 = por %p44, %p45
    %p48 = scmp.ne.s32.totalorder %s31, %s47
    %p49 = scmp.eq.s32.totalorder %s23, 0
    %p50 = por %p48, %p49
    %s52 = sadd.s32 %s51, 1
    %p55 = scmp.eq.s32.totalorder %s17, 1
    %p56 = scmp.ne.s32.totalorder %s51, %s53
    %p57 = scmp.eq.s32.totalorder %s17, 0
    %p58 = por %p56, %p57
    %p59 = scmp.ne.s32.totalorder %s51, %s53
    %p60 = scmp.eq.s32.totalorder %s22, 1
    %p61 = por %p59, %p60
    %p62 = scmp.ne.s32.totalorder %s53, %s54
    %p63 = scmp.eq.s32.totalorder %s22, 0
    %p64 = por %p62, %p63
    %p65 = scmp.ne.s32.totalorder %s53, %s54
    %p66 = scmp.eq.s32.totalorder %s23, 1
    %p67 = por %p65, %p66
    %p69 = scmp.ne.s32.totalorder %s54, %s68
    %p70 = scmp.eq.s32.totalorder %s23, 0
    %p71 = por %p69, %p70
    %s73 = sadd.s32 %s72, 1
    %p76 = scmp.eq.s32.totalorder %s17, 1
    %p77 = scmp.ne.s32.totalorder %s72, %s74
    %p78 = scmp.eq.s32.totalorder %s17, 0
    %p79 = por %p77, %p78
    %p80 = scmp.ne.s32.totalorder %s72, %s74
    %p81 = scmp.eq.s32.totalorder %s22, 1
    %p82 = por %p80, %p81
    %p83 = scmp.ne.s32.totalorder %s74, %s75
    %p84 = scmp.eq.s32.totalorder %s22, 0
    %p85 = por %p83, %p84
    %p86 = scmp.ne.s32.totalorder %s74, %s75
    %p87 = scmp.eq.s32.totalorder %s23, 1
    %p88 = por %p86, %p87
    %p90 = scmp.ne.s32.totalorder %s75, %s89
    %p91 = scmp.eq.s32.totalorder %s23, 0
    %p92 = por %p90, %p91
    %s94 = sadd.s32 %s93, 1
    %p97 = scmp.eq.s32.totalorder %s17, 1
    %p98 = scmp.ne.s32.totalorder %s93, %s95
    %p99 = scmp.eq.s32.totalorder %s17, 0
    %p100 = por %p98, %p99
    %p101 = scmp.ne.s32.totalorder %s93, %s95
    %p102 = scmp.eq.s32.totalorder %s22, 1
    %p103 = por %p101, %p102
    %p104 = scmp.ne.s32.totalorder %s95, %s96
    %p105 = scmp.eq.s32.totalorder %s22, 0
    %p106 = por %p104, %p105
    %p107 = scmp.ne.s32.totalorder %s95, %s96
    %p108 = scmp.eq.s32.totalorder %s23, 1
    %p109 = por %p107, %p108
    %p111 = scmp.ne.s32.totalorder %s96, %s110
    %p112 = scmp.eq.s32.totalorder %s23, 0
    %p113 = por %p111, %p112
    %s115 = sadd.s32 %s114, 1
    %p118 = scmp.eq.s32.totalorder %s17, 1
    %p119 = scmp.ne.s32.totalorder %s114, %s116
    %p120 = scmp.eq.s32.totalorder %s17, 0
    %p121 = por %p119, %p120
    %p122 = scmp.ne.s32.totalorder %s114, %s116
    %p123 = scmp.eq.s32.totalorder %s22, 1
    %p124 = por %p122, %p123
    %p125 = scmp.ne.s32.totalorder %s116, %s117
    %p126 = scmp.eq.s32.totalorder %s22, 0
    %p127 = por %p125, %p126
    %p128 = scmp.ne.s32.totalorder %s116, %s117
    %p129 = scmp.eq.s32.totalorder %s23, 1
    %p130 = por %p128, %p129
    %p132 = scmp.ne.s32.totalorder %s117, %s131
    %p133 = scmp.eq.s32.totalorder %s23, 0
    %p134 = por %p132, %p133
    %s136 = sadd.s32 %s135, 1
    %p139 = scmp.eq.s32.totalorder %s17, 1
    %p140 = scmp.ne.s32.totalorder %s135, %s137
    %p141 = scmp.eq.s32.totalorder %s17, 0
    %p142 = por %p140, %p141
    %p143 = scmp.ne.s32.totalorder %s135, %s137
    %p144 = scmp.eq.s32.totalorder %s22, 1
    %p145 = por %p143, %p144
    %p146 = scmp.ne.s32.totalorder %s137, %s138
    %p147 = scmp.eq.s32.totalorder %s22, 0
    %p148 = por %p146, %p147
    %p149 = scmp.ne.s32.totalorder %s137, %s138
    %p150 = scmp.eq.s32.totalorder %s23, 1
    %p151 = por %p149, %p150
    %p153 = scmp.ne.s32.totalorder %s138, %s152
    %p154 = scmp.eq.s32.totalorder %s23, 0
    %p155 = por %p153, %p154
    %s157 = sadd.s32 %s156, 1
    %p160 = scmp.eq.s32.totalorder %s17, 1
    %p161 = scmp.ne.s32.totalorder %s156, %s158
    %p162 = scmp.eq.s32.totalorder %s17, 0
    %p163 = por %p161, %p162
    %p164 = scmp.ne.s32.totalorder %s156, %s158
    %p165 = scmp.eq.s32.totalorder %s22, 1
    %p166 = por %p164, %p165
    %p167 = scmp.ne.s32.totalorder %s158, %s159
    %p168 = scmp.eq.s32.totalorder %s22, 0
    %p169 = por %p167, %p168
    %p170 = scmp.ne.s32.totalorder %s158, %s159
    %p171 = scmp.eq.s32.totalorder %s23, 1
    %p172 = por %p170, %p171
    %p174 = scmp.ne.s32.totalorder %s159, %s173
    %p175 = scmp.eq.s32.totalorder %s23, 0
    %p176 = por %p174, %p175
    %s178 = sadd.s32 %s177, 1
    %p181 = scmp.eq.s32.totalorder %s17, 1
    %p182 = scmp.ne.s32.totalorder %s177, %s179
    %p183 = scmp.eq.s32.totalorder %s17, 0
    %p184 = por %p182, %p183
    %p185 = scmp.ne.s32.totalorder %s177, %s179
    %p186 = scmp.eq.s32.totalorder %s22, 1
    %p187 = por %p185, %p186
    %p188 = scmp.ne.s32.totalorder %s179, %s180
    %p189 = scmp.eq.s32.totalorder %s22, 0
    %p190 = por %p188, %p189
    %p191 = scmp.ne.s32.totalorder %s179, %s180
    %p192 = scmp.eq.s32.totalorder %s23, 1
    %p193 = por %p191, %p192
    %p195 = scmp.ne.s32.totalorder %s180, %s194
    %p196 = scmp.eq.s32.totalorder %s23, 0
    %p197 = por %p195, %p196
    %s198 = ssub.s32 %s17, %s24
    %p199 = scmp.eq.s32.totalorder %s198, 0
    %s201 = sadd.s32 %s200, 1
    %s202 = scalar_select %p199, %s200, %s201
    %p205 = pneg %p199
    %p206 = scmp.eq.s32.totalorder %s17, 1
    %p207 = por %p205, %p206
    %p208 = scmp.ne.s32.totalorder %s200, %s203
    %p209 = scmp.eq.s32.totalorder %s17, 0
    %p210 = por %p208, %p209
    %p211 = scmp.ne.s32.totalorder %s200, %s203
    %p212 = scmp.eq.s32.totalorder %s22, 1
    %p213 = por %p211, %p212
    %p214 = scmp.ne.s32.totalorder %s203, %s204
    %p215 = scmp.eq.s32.totalorder %s22, 0
    %p216 = por %p214, %p215
    %p217 = scmp.ne.s32.totalorder %s203, %s204
    %p218 = scmp.eq.s32.totalorder %s23, 1
    %p219 = por %p217, %p218
    %p221 = scmp.ne.s32.totalorder %s204, %s220
    %p222 = scmp.eq.s32.totalorder %s23, 0
    %p223 = por %p221, %p222
    %s224 = ssub.s32 %s17, %s24
    %p225 = scmp.eq.s32.totalorder %s224, 0
    %s227 = sadd.s32 %s226, 1
    %s228 = scalar_select %p225, %s226, %s227
    %p231 = pneg %p225
    %p232 = scmp.eq.s32.totalorder %s17, 1
    %p233 = por %p231, %p232
    %p234 = scmp.ne.s32.totalorder %s226, %s229
    %p235 = scmp.eq.s32.totalorder %s17, 0
    %p236 = por %p234, %p235
    %p237 = scmp.ne.s32.totalorder %s226, %s229
    %p238 = scmp.eq.s32.totalorder %s22, 1
    %p239 = por %p237, %p238
    %p240 = scmp.ne.s32.totalorder %s229, %s230
    %p241 = scmp.eq.s32.totalorder %s22, 0
    %p242 = por %p240, %p241
    %p243 = scmp.ne.s32.totalorder %s229, %s230
    %p244 = scmp.eq.s32.totalorder %s23, 1
    %p245 = por %p243, %p244
    %p247 = scmp.ne.s32.totalorder %s230, %s246
    %p248 = scmp.eq.s32.totalorder %s23, 0
    %p249 = por %p247, %p248
    %s250 = ssub.s32 %s17, %s24
    %p251 = scmp.eq.s32.totalorder %s250, 0
    %s253 = sadd.s32 %s252, 1
    %s254 = scalar_select %p251, %s252, %s253
    %p257 = pneg %p251
    %p258 = scmp.eq.s32.totalorder %s17, 1
    %p259 = por %p257, %p258
    %p260 = scmp.ne.s32.totalorder %s252, %s255
    %p261 = scmp.eq.s32.totalorder %s17, 0
    %p262 = por %p260, %p261
    %p263 = scmp.ne.s32.totalorder %s252, %s255
    %p264 = scmp.eq.s32.totalorder %s22, 1
    %p265 = por %p263, %p264
    %p266 = scmp.ne.s32.totalorder %s255, %s256
    %p267 = scmp.eq.s32.totalorder %s22, 0
    %p268 = por %p266, %p267
    %p269 = scmp.ne.s32.totalorder %s255, %s256
    %p270 = scmp.eq.s32.totalorder %s23, 1
    %p271 = por %p269, %p270
    %p273 = scmp.ne.s32.totalorder %s256, %s272
    %p274 = scmp.eq.s32.totalorder %s23, 0
    %p275 = por %p273, %p274
    %p276 = scmp.le.s32.totalorder 1, %s17
    %p277 = scmp.lt.s32.totalorder %s17, 3
    %p278 = pnand %p276, %p277
    %p279 = pneg %p278
    // Predicated region
    $region9: #{tpu_custom_call.1} parent=5 // pred_check
      _
    $region10: #{tpu_custom_call.1} parent=5 // pred_check_branch
      %281 = sbr.rel (%p278) target = $region12
    $region11: #{tpu_custom_call.1} parent=5 // pred_region
      %s282 = ssub.s32 %s17, 1
      // Predicated region
      $region13: #{tpu_custom_call.1} parent=11 // pred_check
        %p283 = pneg %p64
      $region14: #{tpu_custom_call.1} parent=11 // pred_check_branch
        %285 = sbr.rel (%p283) target = $region16
      $region15: #{tpu_custom_call.1} parent=11 // pred_region
        _
      $region16: #{tpu_custom_call.1} parent=11 // pred_fallthru
        _
      // Predicated region
      $region17: #{tpu_custom_call.1} parent=11 // pred_check
        %p286 = pneg %p85
      $region18: #{tpu_custom_call.1} parent=11 // pred_check_branch
        %288 = sbr.rel (%p286) target = $region20
      $region19: #{tpu_custom_call.1} parent=11 // pred_region
        _
      $region20: #{tpu_custom_call.1} parent=11 // pred_fallthru
        _
      // Predicated region
      $region21: #{tpu_custom_call.1} parent=11 // pred_check
        %p289 = pneg %p106
      $region22: #{tpu_custom_call.1} parent=11 // pred_check_branch
        %291 = sbr.rel (%p289) target = $region24
      $region23: #{tpu_custom_call.1} parent=11 // pred_region
        _
      $region24: #{tpu_custom_call.1} parent=11 // pred_fallthru
        _
      // Predicated region
      $region25: #{tpu_custom_call.1} parent=11 // pred_check
        %p292 = pneg %p127
      $region26: #{tpu_custom_call.1} parent=11 // pred_check_branch
        %294 = sbr.rel (%p292) target = $region28
      $region27: #{tpu_custom_call.1} parent=11 // pred_region
        _
      $region28: #{tpu_custom_call.1} parent=11 // pred_fallthru
        _
      // Predicated region
      $region29: #{tpu_custom_call.1} parent=11 // pred_check
        %p295 = pneg %p148
      $region30: #{tpu_custom_call.1} parent=11 // pred_check_branch
        %297 = sbr.rel (%p295) target = $region32
      $region31: #{tpu_custom_call.1} parent=11 // pred_region
        _
      $region32: #{tpu_custom_call.1} parent=11 // pred_fallthru
        _
      // Predicated region
      $region33: #{tpu_custom_call.1} parent=11 // pred_check
        %p298 = pneg %p169
      $region34: #{tpu_custom_call.1} parent=11 // pred_check_branch
        %300 = sbr.rel (%p298) target = $region36
      $region35: #{tpu_custom_call.1} parent=11 // pred_region
        _
      $region36: #{tpu_custom_call.1} parent=11 // pred_fallthru
        _
      // Predicated region
      $region37: #{tpu_custom_call.1} parent=11 // pred_check
        %p301 = pneg %p190
      $region38: #{tpu_custom_call.1} parent=11 // pred_check_branch
        %303 = sbr.rel (%p301) target = $region40
      $region39: #{tpu_custom_call.1} parent=11 // pred_region
        _
      $region40: #{tpu_custom_call.1} parent=11 // pred_fallthru
        _
    $region12: #{tpu_custom_call.1} parent=5 // pred_fallthru
      _
    %p304 = scmp.lt.s32.totalorder %s17, 2
    // Predicated region
    $region41: #{tpu_custom_call.1} parent=5 // pred_check
      %p305 = pneg %p304
    $region42: #{tpu_custom_call.1} parent=5 // pred_check_branch
      %307 = sbr.rel (%p305) target = $region44
    $region43: #{tpu_custom_call.1} parent=5 // pred_region
      // Predicated region
      $region45: #{tpu_custom_call.1} parent=43 // pred_check
        %p308 = pneg %p37
      $region46: #{tpu_custom_call.1} parent=43 // pred_check_branch
        %310 = sbr.rel (%p308) target = $region48
      $region47: #{tpu_custom_call.1} parent=43 // pred_region
        %p311 = scmp.lt.s32.totalorder %s17, 1
        %s312 = scalar_select %p311, %s17, 1
        %s313 = smul.addr %s312, 32
        %s314 = smul.addr %s313, 8
        %s315 = scalar_lea.vmem %s0, %s314
      $region48: #{tpu_custom_call.1} parent=43 // pred_fallthru
        _
    $region44: #{tpu_custom_call.1} parent=5 // pred_fallthru
      _
    %p316 = scmp.le.s32.totalorder 1, %s17
    %p317 = scmp.lt.s32.totalorder %s17, 3
    %p318 = pnand %p316, %p317
    %p319 = pneg %p318
    // Predicated region
    $region49: #{tpu_custom_call.1} parent=5 // pred_check
      _
    $region50: #{tpu_custom_call.1} parent=5 // pred_check_branch
      %321 = sbr.rel (%p318) target = $region52
    $region51: #{tpu_custom_call.1} parent=5 // pred_region
      %s322 = ssub.s32 %s17, 1
      %p323 = scmp.lt.s32.totalorder %s22, 1
      %s324 = scalar_select %p323, %s22, 1
      %s325 = smul.addr %s324, 32
      %s326 = smul.addr %s325, 8
      %s327 = scalar_lea.vmem %s0, %s326
      %p328 = pneg %p43
      %p329 = pneg %p40
      %p330 = pneg %p64
      %p331 = pneg %p61
      %p332 = pneg %p85
      %p333 = pneg %p82
      %p334 = pneg %p106
      %p335 = pneg %p103
      %p336 = pneg %p127
      %p337 = pneg %p124
      %p338 = pneg %p148
      %p339 = pneg %p145
      %p340 = pneg %p169
      %p341 = pneg %p166
      %p342 = pneg %p190
      %p343 = pneg %p187
      %p344 = pneg %p216
      %p345 = pneg %p213
      %p346 = scmp.lt.s32.totalorder %s22, 1
      %s347 = scalar_select %p346, %s22, 1
      %s348 = smul.addr %s347, 128
      %s349 = smul.addr %s348, 4
      %s350 = scalar_lea.vmem %s8, %s349
      %p351 = pneg %p242
      %p352 = pneg %p239
      %p353 = scmp.lt.s32.totalorder %s22, 1
      %s354 = scalar_select %p353, %s22, 1
      %s355 = smul.addr %s354, 128
      %s356 = smul.addr %s355, 4
      %s357 = scalar_lea.vmem %s9, %s356
      %p358 = pneg %p268
      %p359 = pneg %p265
      %p360 = scmp.lt.s32.totalorder %s22, 1
      %s361 = scalar_select %p360, %s22, 1
      %s362 = smul.addr %s361, 128
      %s363 = smul.addr %s362, 4
      %s364 = scalar_lea.vmem %s10, %s363
      %p365 = scmp.lt.s32.totalorder %s22, 1
      %s366 = scalar_select %p365, %s22, 1
      %s367 = smul.addr %s366, 32
      %s368 = smul.addr %s367, 8
      %s369 = scalar_lea.vmem %s0, %s368
      %p370 = scmp.lt.s32.totalorder %s22, 1
      %s371 = scalar_select %p370, %s22, 1
      %s372 = smul.addr %s371, 128
      %s373 = smul.addr %s372, 4
      %s374 = scalar_lea.vmem %s8, %s373
      %p375 = scmp.lt.s32.totalorder %s22, 1
      %s376 = scalar_select %p375, %s22, 1
      %s377 = smul.addr %s376, 128
      %s378 = smul.addr %s377, 4
      %s379 = scalar_lea.vmem %s9, %s378
      %p380 = scmp.lt.s32.totalorder %s22, 1
      %s381 = scalar_select %p380, %s22, 1
      %s382 = smul.addr %s381, 128
      %s383 = smul.addr %s382, 4
      %s384 = scalar_lea.vmem %s10, %s383
      %v386 = vld [vmem:[%s369] sm:$0xff]
      %v387 = vld [vmem:[%s369 + $0x8] sm:$0xff]
      %v388 = vld [vmem:[%s369 + $0x10] sm:$0xff]
      %v389 = vld [vmem:[%s369 + $0x18] sm:$0xff]
      %v390 = vld [vmem:[%s369 + $0x20] sm:$0xff]
      %v391 = vld [vmem:[%s369 + $0x28] sm:$0xff]
      %v392 = vld [vmem:[%s369 + $0x30] sm:$0xff]
      %v393 = vld [vmem:[%s369 + $0x38] sm:$0xff]
      %v394 = vld [vmem:[%s369 + $0x40] sm:$0xff]
      %v395 = vld [vmem:[%s369 + $0x48] sm:$0xff]
      %v396 = vld [vmem:[%s369 + $0x50] sm:$0xff]
      %v397 = vld [vmem:[%s369 + $0x58] sm:$0xff]
      %v398 = vld [vmem:[%s369 + $0x60] sm:$0xff]
      %v399 = vld [vmem:[%s369 + $0x68] sm:$0xff]
      %v400 = vld [vmem:[%s369 + $0x70] sm:$0xff]
      %v401 = vld [vmem:[%s369 + $0x78] sm:$0xff]
      %v402 = vld [vmem:[%s369 + $0x80] sm:$0xff]
      %v403 = vld [vmem:[%s369 + $0x88] sm:$0xff]
      %v404 = vld [vmem:[%s369 + $0x90] sm:$0xff]
      %v405 = vld [vmem:[%s369 + $0x98] sm:$0xff]
      %v406 = vld [vmem:[%s369 + $0xa0] sm:$0xff]
      %v407 = vld [vmem:[%s369 + $0xa8] sm:$0xff]
      %v408 = vld [vmem:[%s369 + $0xb0] sm:$0xff]
      %v409 = vld [vmem:[%s369 + $0xb8] sm:$0xff]
      %v410 = vld [vmem:[%s369 + $0xc0] sm:$0xff]
      %v411 = vld [vmem:[%s369 + $0xc8] sm:$0xff]
      %v412 = vld [vmem:[%s369 + $0xd0] sm:$0xff]
      %v413 = vld [vmem:[%s369 + $0xd8] sm:$0xff]
      %v414 = vld [vmem:[%s369 + $0xe0] sm:$0xff]
      %v415 = vld [vmem:[%s369 + $0xe8] sm:$0xff]
      %v416 = vld [vmem:[%s369 + $0xf0] sm:$0xff]
      %v417 = vld [vmem:[%s369 + $0xf8] sm:$0xff]
      %vm418 = vcmask 261120
      %v419 = vsel %vm418, %v386, 0.0
      %v420 = vsel %vm418, %v387, 0.0
      %v421 = vadd.f32 %v419, %v420
      %v422 = vsel %vm418, %v388, 0.0
      %v423 = vadd.f32 %v421, %v422
      %v424 = vsel %vm418, %v389, 0.0
      %v425 = vadd.f32 %v423, %v424
      %v426 = vsel %vm418, %v390, 0.0
      %v427 = vadd.f32 %v425, %v426
      %v428 = vsel %vm418, %v391, 0.0
      %v429 = vadd.f32 %v427, %v428
      %v430 = vsel %vm418, %v392, 0.0
      %v431 = vadd.f32 %v429, %v430
      %v432 = vsel %vm418, %v393, 0.0
      %v433 = vadd.f32 %v431, %v432
      %v434 = vsel %vm418, %v394, 0.0
      %v435 = vadd.f32 %v433, %v434
      %v436 = vsel %vm418, %v395, 0.0
      %v437 = vadd.f32 %v435, %v436
      %v438 = vsel %vm418, %v396, 0.0
      %v439 = vadd.f32 %v437, %v438
      %v440 = vsel %vm418, %v397, 0.0
      %v441 = vadd.f32 %v439, %v440
      %v442 = vsel %vm418, %v398, 0.0
      %v443 = vadd.f32 %v441, %v442
      %v444 = vsel %vm418, %v399, 0.0
      %v445 = vadd.f32 %v443, %v444
      %v446 = vsel %vm418, %v400, 0.0
      %v447 = vadd.f32 %v445, %v446
      %v448 = vsel %vm418, %v401, 0.0
      %v449 = vadd.f32 %v447, %v448
      %v450 = vsel %vm418, %v402, 0.0
      %v451 = vadd.f32 %v449, %v450
      %v452 = vsel %vm418, %v403, 0.0
      %v453 = vadd.f32 %v451, %v452
      %v454 = vsel %vm418, %v404, 0.0
      %v455 = vadd.f32 %v453, %v454
      %v456 = vsel %vm418, %v405, 0.0
      %v457 = vadd.f32 %v455, %v456
      %v458 = vsel %vm418, %v406, 0.0
      %v459 = vadd.f32 %v457, %v458
      %v460 = vsel %vm418, %v407, 0.0
      %v461 = vadd.f32 %v459, %v460
      %v462 = vsel %vm418, %v408, 0.0
      %v463 = vadd.f32 %v461, %v462
      %v464 = vsel %vm418, %v409, 0.0
      %v465 = vadd.f32 %v463, %v464
      %v466 = vsel %vm418, %v410, 0.0
      %v467 = vadd.f32 %v465, %v466
      %v468 = vsel %vm418, %v411, 0.0
      %v469 = vadd.f32 %v467, %v468
      %v470 = vsel %vm418, %v412, 0.0
      %v471 = vadd.f32 %v469, %v470
      %v472 = vsel %vm418, %v413, 0.0
      %v473 = vadd.f32 %v471, %v472
      %v474 = vsel %vm418, %v414, 0.0
      %v475 = vadd.f32 %v473, %v474
      %v476 = vsel %vm418, %v415, 0.0
      %v477 = vadd.f32 %v475, %v476
      %v478 = vsel %vm418, %v416, 0.0
      %v479 = vadd.f32 %v477, %v478
      %v480 = vsel %vm418, %v417, 0.0
      %v481 = vadd.f32 %v479, %v480
      %v482 = vrot.slane %v481, 4
      %v483 = vadd.f32 %v481, %v482
      %v484 = vrot.slane %v483, 2
      %v485 = vadd.f32 %v483, %v484
      %v486 = vrot.slane %v485, 1
      %v487 = vadd.f32 %v485, %v486
      %v488 = vld [vmem:[%s3] sm:$0xff]
      %v489 = vld [vmem:[%s3 + $0x8] sm:$0xff]
      %v490 = vld [vmem:[%s3 + $0x10] sm:$0xff]
      %v491 = vld [vmem:[%s3 + $0x18] sm:$0xff]
      %v493 = vsel %vm418, %v487, 0
      %495 = vmatprep.subr.mxu0 0.0
      %496 = vmatpush1.msra.mxu0 %v488
      %497 = vmatprep.subr.mxu0 0.0
      %498 = vmatpush1.msra.mxu0 %v489
      %499 = vmatprep.subr.mxu0 0.0
      %500 = vmatpush1.msra.mxu0 %v490
      %501 = vmatprep.subr.mxu0 0.0
      %502 = vmatpush1.msra.mxu0 %v491
      %503 = vmatprep.subr.mxu0 0.0
      %504 = vmatpush1.msra.mxu0 0.0
      %505 = vmatprep.subr.mxu0 0.0
      %506 = vmatpush1.msra.mxu0 0.0
      %507 = vmatprep.subr.mxu0 0.0
      %508 = vmatpush1.msra.mxu0 0.0
      %509 = vmatprep.subr.mxu0 0.0
      %510 = vmatpush1.msra.mxu0 0.0
      %511 = vmatprep.subr.mxu0 0.0
      %512 = vmatpush1.msra.mxu0 0.0
      %513 = vmatprep.subr.mxu0 0.0
      %514 = vmatpush1.msra.mxu0 0.0
      %515 = vmatprep.subr.mxu0 0.0
      %516 = vmatpush1.msra.mxu0 0.0
      %517 = vmatprep.subr.mxu0 0.0
      %518 = vmatpush1.msra.mxu0 0.0
      %519 = vmatprep.subr.mxu0 0.0
      %520 = vmatpush1.msra.mxu0 0.0
      %521 = vmatprep.subr.mxu0 0.0
      %522 = vmatpush1.msra.mxu0 0.0
      %523 = vmatprep.subr.mxu0 0.0
      %524 = vmatpush1.msra.mxu0 0.0
      %525 = vmatprep.subr.mxu0 0.0
      %526 = vmatpush1.msra.mxu0 0.0
      %527 = vmatprep.subr.mxu0 0.0
      %528 = vmatpush1.msra.mxu0 0.0
      %529 = vmatprep.subr.mxu0 0.0
      %530 = vmatpush1.msra.mxu0 0.0
      %531 = vmatprep.subr.mxu0 0.0
      %532 = vmatpush1.msra.mxu0 0.0
      %533 = vmatprep.subr.mxu0 0.0
      %534 = vmatpush1.msra.mxu0 0.0
      %535 = vmatprep.subr.mxu0 0.0
      %536 = vmatpush1.msra.mxu0 0.0
      %537 = vmatprep.subr.mxu0 0.0
      %538 = vmatpush1.msra.mxu0 0.0
      %539 = vmatprep.subr.mxu0 0.0
      %540 = vmatpush1.msra.mxu0 0.0
      %541 = vmatprep.subr.mxu0 0.0
      %542 = vmatpush1.msra.mxu0 0.0
      %543 = vmatprep.subr.mxu0 0.0
      %544 = vmatpush1.msra.mxu0 0.0
      %545 = vmatprep.subr.mxu0 0.0
      %546 = vmatpush1.msra.mxu0 0.0
      %547 = vmatprep.subr.mxu0 0.0
      %548 = vmatpush1.msra.mxu0 0.0
      %549 = vmatprep.subr.mxu0 0.0
      %550 = vmatpush1.msra.mxu0 0.0
      %551 = vmatprep.subr.mxu0 0.0
      %552 = vmatpush1.msra.mxu0 0.0
      %553 = vmatprep.subr.mxu0 0.0
      %554 = vmatpush1.msra.mxu0 0.0
      %555 = vmatprep.subr.mxu0 0.0
      %556 = vmatpush1.msra.mxu0 0.0
      %557 = vmatprep.subr.mxu0 0.0
      %558 = vmatpush1.msra.mxu0 0.0
      %559 = vmatprep.mubr.f32.mxu0 0.0
      %560 = vmatmul.mubr.f32.gmra.mrb[0].mxu0 %v493
      %v561 = vpop.f32.mrb[0].mxu0
      %v562 = vadd.f32 0.0, %v561
      %v563 = vpop.f32.mrb[0].mxu0
      %564 = vdwg.mxu0
      %v565 = vrcp.pop 1024.0
      %v566 = vmul.f32 %v562, %v565
      %v567 = vld [vmem:[%s4] sm:$0xff]
      %vm568 = vcmask 64512
      %v570 = vsel %vm568, %v566, 0
      %572 = vmatprep.subr.mxu0 0.0
      %573 = vmatpush1.msra.mxu0 %v567
      %574 = vmatprep.subr.mxu0 0.0
      %575 = vmatpush1.msra.mxu0 0.0
      %576 = vmatprep.subr.mxu0 0.0
      %577 = vmatpush1.msra.mxu0 0.0
      %578 = vmatprep.subr.mxu0 0.0
      %579 = vmatpush1.msra.mxu0 0.0
      %580 = vmatprep.subr.mxu0 0.0
      %581 = vmatpush1.msra.mxu0 0.0
      %582 = vmatprep.subr.mxu0 0.0
      %583 = vmatpush1.msra.mxu0 0.0
      %584 = vmatprep.subr.mxu0 0.0
      %585 = vmatpush1.msra.mxu0 0.0
      %586 = vmatprep.subr.mxu0 0.0
      %587 = vmatpush1.msra.mxu0 0.0
      %588 = vmatprep.subr.mxu0 0.0
      %589 = vmatpush1.msra.mxu0 0.0
      %590 = vmatprep.subr.mxu0 0.0
      %591 = vmatpush1.msra.mxu0 0.0
      %592 = vmatprep.subr.mxu0 0.0
      %593 = vmatpush1.msra.mxu0 0.0
      %594 = vmatprep.subr.mxu0 0.0
      %595 = vmatpush1.msra.mxu0 0.0
      %596 = vmatprep.subr.mxu0 0.0
      %597 = vmatpush1.msra.mxu0 0.0
      %598 = vmatprep.subr.mxu0 0.0
      %599 = vmatpush1.msra.mxu0 0.0
      %600 = vmatprep.subr.mxu0 0.0
      %601 = vmatpush1.msra.mxu0 0.0
      %602 = vmatprep.subr.mxu0 0.0
      %603 = vmatpush1.msra.mxu0 0.0
      %604 = vmatprep.subr.mxu0 0.0
      %605 = vmatpush1.msra.mxu0 0.0
      %606 = vmatprep.subr.mxu0 0.0
      %607 = vmatpush1.msra.mxu0 0.0
      %608 = vmatprep.subr.mxu0 0.0
      %609 = vmatpush1.msra.mxu0 0.0
      %610 = vmatprep.subr.mxu0 0.0
      %611 = vmatpush1.msra.mxu0 0.0
      %612 = vmatprep.subr.mxu0 0.0
      %613 = vmatpush1.msra.mxu0 0.0
      %614 = vmatprep.subr.mxu0 0.0
      %615 = vmatpush1.msra.mxu0 0.0
      %616 = vmatprep.subr.mxu0 0.0
      %617 = vmatpush1.msra.mxu0 0.0
      %618 = vmatprep.subr.mxu0 0.0
      %619 = vmatpush1.msra.mxu0 0.0
      %620 = vmatprep.subr.mxu0 0.0
      %621 = vmatpush1.msra.mxu0 0.0
      %622 = vmatprep.subr.mxu0 0.0
      %623 = vmatpush1.msra.mxu0 0.0
      %624 = vmatprep.subr.mxu0 0.0
      %625 = vmatpush1.msra.mxu0 0.0
      %626 = vmatprep.subr.mxu0 0.0
      %627 = vmatpush1.msra.mxu0 0.0
      %628 = vmatprep.subr.mxu0 0.0
      %629 = vmatpush1.msra.mxu0 0.0
      %630 = vmatprep.subr.mxu0 0.0
      %631 = vmatpush1.msra.mxu0 0.0
      %632 = vmatprep.subr.mxu0 0.0
      %633 = vmatpush1.msra.mxu0 0.0
      %634 = vmatprep.subr.mxu0 0.0
      %635 = vmatpush1.msra.mxu0 0.0
      %636 = vmatprep.mubr.f32.mxu0 0.0
      %637 = vmatmul.mubr.f32.gmra.mrb[0].mxu0 %v570
      %v638 = vpop.f32.mrb[0].mxu0
      %v639 = vadd.f32 0.0, %v638
      %v640 = vpop.f32.mrb[0].mxu0
      %641 = vdwg.mxu0
      %v642 = vlaneseq
      %v643 = vshrl.u32 %v642, 7
      %v644 = vsub.s32 0, %v643
      %v645 = vrot.slane %v639, %v644
      %v646 = vsub.f32 %v386, %v645
      %v647 = vsub.f32 %v387, %v645
      %v648 = vsub.f32 %v388, %v645
      %v649 = vsub.f32 %v389, %v645
      %v650 = vsub.f32 %v390, %v645
      %v651 = vsub.f32 %v391, %v645
      %v652 = vsub.f32 %v392, %v645
      %v653 = vsub.f32 %v393, %v645
      %v654 = vsub.f32 %v394, %v645
      %v655 = vsub.f32 %v395, %v645
      %v656 = vsub.f32 %v396, %v645
      %v657 = vsub.f32 %v397, %v645
      %v658 = vsub.f32 %v398, %v645
      %v659 = vsub.f32 %v399, %v645
      %v660 = vsub.f32 %v400, %v645
      %v661 = vsub.f32 %v401, %v645
      %v662 = vsub.f32 %v402, %v645
      %v663 = vsub.f32 %v403, %v645
      %v664 = vsub.f32 %v404, %v645
      %v665 = vsub.f32 %v405, %v645
      %v666 = vsub.f32 %v406, %v645
      %v667 = vsub.f32 %v407, %v645
      %v668 = vsub.f32 %v408, %v645
      %v669 = vsub.f32 %v409, %v645
      %v670 = vsub.f32 %v410, %v645
      %v671 = vsub.f32 %v411, %v645
      %v672 = vsub.f32 %v412, %v645
      %v673 = vsub.f32 %v413, %v645
      %v674 = vsub.f32 %v414, %v645
      %v675 = vsub.f32 %v415, %v645
      %v676 = vsub.f32 %v416, %v645
      %v677 = vsub.f32 %v417, %v645
      %v678 = vmul.f32 %v646, %v646
      %v679 = vmul.f32 %v647, %v647
      %v680 = vmul.f32 %v648, %v648
      %v681 = vmul.f32 %v649, %v649
      %v682 = vmul.f32 %v650, %v650
      %v683 = vmul.f32 %v651, %v651
      %v684 = vmul.f32 %v652, %v652
      %v685 = vmul.f32 %v653, %v653
      %v686 = vmul.f32 %v654, %v654
      %v687 = vmul.f32 %v655, %v655
      %v688 = vmul.f32 %v656, %v656
      %v689 = vmul.f32 %v657, %v657
      %v690 = vmul.f32 %v658, %v658
      %v691 = vmul.f32 %v659, %v659
      %v692 = vmul.f32 %v660, %v660
      %v693 = vmul.f32 %v661, %v661
      %v694 = vmul.f32 %v662, %v662
      %v695 = vmul.f32 %v663, %v663
      %v696 = vmul.f32 %v664, %v664
      %v697 = vmul.f32 %v665, %v665
      %v698 = vmul.f32 %v666, %v666
      %v699 = vmul.f32 %v667, %v667
      %v700 = vmul.f32 %v668, %v668
      %v701 = vmul.f32 %v669, %v669
      %v702 = vmul.f32 %v670, %v670
      %v703 = vmul.f32 %v671, %v671
      %v704 = vmul.f32 %v672, %v672
      %v705 = vmul.f32 %v673, %v673
      %v706 = vmul.f32 %v674, %v674
      %v707 = vmul.f32 %v675, %v675
      %v708 = vmul.f32 %v676, %v676
      %v709 = vmul.f32 %v677, %v677
      %v710 = vsel %vm418, %v678, 0.0
      %v711 = vsel %vm418, %v679, 0.0
      %v712 = vadd.f32 %v710, %v711
      %v713 = vsel %vm418, %v680, 0.0
      %v714 = vadd.f32 %v712, %v713
      %v715 = vsel %vm418, %v681, 0.0
      %v716 = vadd.f32 %v714, %v715
      %v717 = vsel %vm418, %v682, 0.0
      %v718 = vadd.f32 %v716, %v717
      %v719 = vsel %vm418, %v683, 0.0
      %v720 = vadd.f32 %v718, %v719
      %v721 = vsel %vm418, %v684, 0.0
      %v722 = vadd.f32 %v720, %v721
      %v723 = vsel %vm418, %v685, 0.0
      %v724 = vadd.f32 %v722, %v723
      %v725 = vsel %vm418, %v686, 0.0
      %v726 = vadd.f32 %v724, %v725
      %v727 = vsel %vm418, %v687, 0.0
      %v728 = vadd.f32 %v726, %v727
      %v729 = vsel %vm418, %v688, 0.0
      %v730 = vadd.f32 %v728, %v729
      %v731 = vsel %vm418, %v689, 0.0
      %v732 = vadd.f32 %v730, %v731
      %v733 = vsel %vm418, %v690, 0.0
      %v734 = vadd.f32 %v732, %v733
      %v735 = vsel %vm418, %v691, 0.0
      %v736 = vadd.f32 %v734, %v735
      %v737 = vsel %vm418, %v692, 0.0
      %v738 = vadd.f32 %v736, %v737
      %v739 = vsel %vm418, %v693, 0.0
      %v740 = vadd.f32 %v738, %v739
      %v741 = vsel %vm418, %v694, 0.0
      %v742 = vadd.f32 %v740, %v741
      %v743 = vsel %vm418, %v695, 0.0
      %v744 = vadd.f32 %v742, %v743
      %v745 = vsel %vm418, %v696, 0.0
      %v746 = vadd.f32 %v744, %v745
      %v747 = vsel %vm418, %v697, 0.0
      %v748 = vadd.f32 %v746, %v747
      %v749 = vsel %vm418, %v698, 0.0
      %v750 = vadd.f32 %v748, %v749
      %v751 = vsel %vm418, %v699, 0.0
      %v752 = vadd.f32 %v750, %v751
      %v753 = vsel %vm418, %v700, 0.0
      %v754 = vadd.f32 %v752, %v753
      %v755 = vsel %vm418, %v701, 0.0
      %v756 = vadd.f32 %v754, %v755
      %v757 = vsel %vm418, %v702, 0.0
      %v758 = vadd.f32 %v756, %v757
      %v759 = vsel %vm418, %v703, 0.0
      %v760 = vadd.f32 %v758, %v759
      %v761 = vsel %vm418, %v704, 0.0
      %v762 = vadd.f32 %v760, %v761
      %v763 = vsel %vm418, %v705, 0.0
      %v764 = vadd.f32 %v762, %v763
      %v765 = vsel %vm418, %v706, 0.0
      %v766 = vadd.f32 %v764, %v765
      %v767 = vsel %vm418, %v707, 0.0
      %v768 = vadd.f32 %v766, %v767
      %v769 = vsel %vm418, %v708, 0.0
      %v770 = vadd.f32 %v768, %v769
      %v771 = vsel %vm418, %v709, 0.0
      %v772 = vadd.f32 %v770, %v771
      %v773 = vrot.slane %v772, 4
      %v774 = vadd.f32 %v772, %v773
      %v775 = vrot.slane %v774, 2
      %v776 = vadd.f32 %v774, %v775
      %v777 = vrot.slane %v776, 1
      %v778 = vadd.f32 %v776, %v777
      %v780 = vsel %vm418, %v778, 0
      %782 = vmatprep.subr.mxu0 0.0
      %783 = vmatpush1.msra.mxu0 %v488
      %784 = vmatprep.subr.mxu0 0.0
      %785 = vmatpush1.msra.mxu0 %v489
      %786 = vmatprep.subr.mxu0 0.0
      %787 = vmatpush1.msra.mxu0 %v490
      %788 = vmatprep.subr.mxu0 0.0
      %789 = vmatpush1.msra.mxu0 %v491
      %790 = vmatprep.subr.mxu0 0.0
      %791 = vmatpush1.msra.mxu0 0.0
      %792 = vmatprep.subr.mxu0 0.0
      %793 = vmatpush1.msra.mxu0 0.0
      %794 = vmatprep.subr.mxu0 0.0
      %795 = vmatpush1.msra.mxu0 0.0
      %796 = vmatprep.subr.mxu0 0.0
      %797 = vmatpush1.msra.mxu0 0.0
      %798 = vmatprep.subr.mxu0 0.0
      %799 = vmatpush1.msra.mxu0 0.0
      %800 = vmatprep.subr.mxu0 0.0
      %801 = vmatpush1.msra.mxu0 0.0
      %802 = vmatprep.subr.mxu0 0.0
      %803 = vmatpush1.msra.mxu0 0.0
      %804 = vmatprep.subr.mxu0 0.0
      %805 = vmatpush1.msra.mxu0 0.0
      %806 = vmatprep.subr.mxu0 0.0
      %807 = vmatpush1.msra.mxu0 0.0
      %808 = vmatprep.subr.mxu0 0.0
      %809 = vmatpush1.msra.mxu0 0.0
      %810 = vmatprep.subr.mxu0 0.0
      %811 = vmatpush1.msra.mxu0 0.0
      %812 = vmatprep.subr.mxu0 0.0
      %813 = vmatpush1.msra.mxu0 0.0
      %814 = vmatprep.subr.mxu0 0.0
      %815 = vmatpush1.msra.mxu0 0.0
      %816 = vmatprep.subr.mxu0 0.0
      %817 = vmatpush1.msra.mxu0 0.0
      %818 = vmatprep.subr.mxu0 0.0
      %819 = vmatpush1.msra.mxu0 0.0
      %820 = vmatprep.subr.mxu0 0.0
      %821 = vmatpush1.msra.mxu0 0.0
      %822 = vmatprep.subr.mxu0 0.0
      %823 = vmatpush1.msra.mxu0 0.0
      %824 = vmatprep.subr.mxu0 0.0
      %825 = vmatpush1.msra.mxu0 0.0
      %826 = vmatprep.subr.mxu0 0.0
      %827 = vmatpush1.msra.mxu0 0.0
      %828 = vmatprep.subr.mxu0 0.0
      %829 = vmatpush1.msra.mxu0 0.0
      %830 = vmatprep.subr.mxu0 0.0
      %831 = vmatpush1.msra.mxu0 0.0
      %832 = vmatprep.subr.mxu0 0.0
      %833 = vmatpush1.msra.mxu0 0.0
      %834 = vmatprep.subr.mxu0 0.0
      %835 = vmatpush1.msra.mxu0 0.0
      %836 = vmatprep.subr.mxu0 0.0
      %837 = vmatpush1.msra.mxu0 0.0
      %838 = vmatprep.subr.mxu0 0.0
      %839 = vmatpush1.msra.mxu0 0.0
      %840 = vmatprep.subr.mxu0 0.0
      %841 = vmatpush1.msra.mxu0 0.0
      %842 = vmatprep.subr.mxu0 0.0
      %843 = vmatpush1.msra.mxu0 0.0
      %844 = vmatprep.subr.mxu0 0.0
      %845 = vmatpush1.msra.mxu0 0.0
      %846 = vmatprep.mubr.f32.mxu0 0.0
      %847 = vmatmul.mubr.f32.gmra.mrb[0].mxu0 %v780
      %v848 = vpop.f32.mrb[0].mxu0
      %v849 = vadd.f32 0.0, %v848
      %v850 = vpop.f32.mrb[0].mxu0
      %851 = vdwg.mxu0
      %v852 = vmul.f32 %v849, %v565
      %v854 = vsel %vm568, %v852, 0
      %856 = vmatprep.subr.mxu0 0.0
      %857 = vmatpush1.msra.mxu0 %v567
      %858 = vmatprep.subr.mxu0 0.0
      %859 = vmatpush1.msra.mxu0 0.0
      %860 = vmatprep.subr.mxu0 0.0
      %861 = vmatpush1.msra.mxu0 0.0
      %862 = vmatprep.subr.mxu0 0.0
      %863 = vmatpush1.msra.mxu0 0.0
      %864 = vmatprep.subr.mxu0 0.0
      %865 = vmatpush1.msra.mxu0 0.0
      %866 = vmatprep.subr.mxu0 0.0
      %867 = vmatpush1.msra.mxu0 0.0
      %868 = vmatprep.subr.mxu0 0.0
      %869 = vmatpush1.msra.mxu0 0.0
      %870 = vmatprep.subr.mxu0 0.0
      %871 = vmatpush1.msra.mxu0 0.0
      %872 = vmatprep.subr.mxu0 0.0
      %873 = vmatpush1.msra.mxu0 0.0
      %874 = vmatprep.subr.mxu0 0.0
      %875 = vmatpush1.msra.mxu0 0.0
      %876 = vmatprep.subr.mxu0 0.0
      %877 = vmatpush1.msra.mxu0 0.0
      %878 = vmatprep.subr.mxu0 0.0
      %879 = vmatpush1.msra.mxu0 0.0
      %880 = vmatprep.subr.mxu0 0.0
      %881 = vmatpush1.msra.mxu0 0.0
      %882 = vmatprep.subr.mxu0 0.0
      %883 = vmatpush1.msra.mxu0 0.0
      %884 = vmatprep.subr.mxu0 0.0
      %885 = vmatpush1.msra.mxu0 0.0
      %886 = vmatprep.subr.mxu0 0.0
      %887 = vmatpush1.msra.mxu0 0.0
      %888 = vmatprep.subr.mxu0 0.0
      %889 = vmatpush1.msra.mxu0 0.0
      %890 = vmatprep.subr.mxu0 0.0
      %891 = vmatpush1.msra.mxu0 0.0
      %892 = vmatprep.subr.mxu0 0.0
      %893 = vmatpush1.msra.mxu0 0.0
      %894 = vmatprep.subr.mxu0 0.0
      %895 = vmatpush1.msra.mxu0 0.0
      %896 = vmatprep.subr.mxu0 0.0
      %897 = vmatpush1.msra.mxu0 0.0
      %898 = vmatprep.subr.mxu0 0.0
      %899 = vmatpush1.msra.mxu0 0.0
      %900 = vmatprep.subr.mxu0 0.0
      %901 = vmatpush1.msra.mxu0 0.0
      %902 = vmatprep.subr.mxu0 0.0
      %903 = vmatpush1.msra.mxu0 0.0
      %904 = vmatprep.subr.mxu0 0.0
      %905 = vmatpush1.msra.mxu0 0.0
      %906 = vmatprep.subr.mxu0 0.0
      %907 = vmatpush1.msra.mxu0 0.0
      %908 = vmatprep.subr.mxu0 0.0
      %909 = vmatpush1.msra.mxu0 0.0
      %910 = vmatprep.subr.mxu0 0.0
      %911 = vmatpush1.msra.mxu0 0.0
      %912 = vmatprep.subr.mxu0 0.0
      %913 = vmatpush1.msra.mxu0 0.0
      %914 = vmatprep.subr.mxu0 0.0
      %915 = vmatpush1.msra.mxu0 0.0
      %916 = vmatprep.subr.mxu0 0.0
      %917 = vmatpush1.msra.mxu0 0.0
      %918 = vmatprep.subr.mxu0 0.0
      %919 = vmatpush1.msra.mxu0 0.0
      %920 = vmatprep.mubr.f32.mxu0 0.0
      %921 = vmatmul.mubr.f32.gmra.mrb[0].mxu0 %v854
      %v922 = vpop.f32.mrb[0].mxu0
      %v923 = vadd.f32 1e-05, %v922
      %v924 = vpop.f32.mrb[0].mxu0
      %925 = vdwg.mxu0
      %v926 = vrsqrt.pop %v923
      %v927 = vlaneseq
      %v928 = vshrl.u32 %v927, 7
      %v929 = vsub.s32 0, %v928
      %v930 = vrot.slane %v926, %v929
      %v931 = vmul.f32 %v646, %v930
      %v932 = vmul.f32 %v647, %v930
      %v933 = vmul.f32 %v648, %v930
      %v934 = vmul.f32 %v649, %v930
      %v935 = vmul.f32 %v650, %v930
      %v936 = vmul.f32 %v651, %v930
      %v937 = vmul.f32 %v652, %v930
      %v938 = vmul.f32 %v653, %v930
      %v939 = vmul.f32 %v654, %v930
      %v940 = vmul.f32 %v655, %v930
      %v941 = vmul.f32 %v656, %v930
      %v942 = vmul.f32 %v657, %v930
      %v943 = vmul.f32 %v658, %v930
      %v944 = vmul.f32 %v659, %v930
      %v945 = vmul.f32 %v660, %v930
      %v946 = vmul.f32 %v661, %v930
      %v947 = vmul.f32 %v662, %v930
      %v948 = vmul.f32 %v663, %v930
      %v949 = vmul.f32 %v664, %v930
      %v950 = vmul.f32 %v665, %v930
      %v951 = vmul.f32 %v666, %v930
      %v952 = vmul.f32 %v667, %v930
      %v953 = vmul.f32 %v668, %v930
      %v954 = vmul.f32 %v669, %v930
      %v955 = vmul.f32 %v670, %v930
      %v956 = vmul.f32 %v671, %v930
      %v957 = vmul.f32 %v672, %v930
      %v958 = vmul.f32 %v673, %v930
      %v959 = vmul.f32 %v674, %v930
      %v960 = vmul.f32 %v675, %v930
      %v961 = vmul.f32 %v676, %v930
      %v962 = vmul.f32 %v677, %v930
      %v963 = vld [vmem:[%s1] sm:$0x1]
      %v965 = vlaneseq
      %v966 = vshrl.u32 %v965, 7
      %v967 = vsub.s32 0, %v966
      %v968 = vrot.slane %v963, %v967
      %v970 = vmul.f32 %v931, %v968
      %v971 = vmul.f32 %v932, %v968
      %v972 = vmul.f32 %v933, %v968
      %v973 = vmul.f32 %v934, %v968
      %v974 = vmul.f32 %v935, %v968
      %v975 = vmul.f32 %v936, %v968
      %v976 = vmul.f32 %v937, %v968
      %v977 = vmul.f32 %v938, %v968
      %v978 = vmul.f32 %v939, %v968
      %v979 = vmul.f32 %v940, %v968
      %v980 = vmul.f32 %v941, %v968
      %v981 = vmul.f32 %v942, %v968
      %v982 = vmul.f32 %v943, %v968
      %v983 = vmul.f32 %v944, %v968
      %v984 = vmul.f32 %v945, %v968
      %v985 = vmul.f32 %v946, %v968
      %v986 = vmul.f32 %v947, %v968
      %v987 = vmul.f32 %v948, %v968
      %v988 = vmul.f32 %v949, %v968
      %v989 = vmul.f32 %v950, %v968
      %v990 = vmul.f32 %v951, %v968
      %v991 = vmul.f32 %v952, %v968
      %v992 = vmul.f32 %v953, %v968
      %v993 = vmul.f32 %v954, %v968
      %v994 = vmul.f32 %v955, %v968
      %v995 = vmul.f32 %v956, %v968
      %v996 = vmul.f32 %v957, %v968
      %v997 = vmul.f32 %v958, %v968
      %v998 = vmul.f32 %v959, %v968
      %v999 = vmul.f32 %v960, %v968
      %v1000 = vmul.f32 %v961, %v968
      %v1001 = vmul.f32 %v962, %v968
      %v1002 = vld [vmem:[%s2] sm:$0x1]
      %v1004 = vlaneseq
      %v1005 = vshrl.u32 %v1004, 7
      %v1006 = vsub.s32 0, %v1005
      %v1007 = vrot.slane %v1002, %v1006
      %v1009 = vadd.f32 %v970, %v1007
      %v1010 = vadd.f32 %v971, %v1007
      %v1011 = vadd.f32 %v972, %v1007
      %v1012 = vadd.f32 %v973, %v1007
      %v1013 = vadd.f32 %v974, %v1007
      %v1014 = vadd.f32 %v975, %v1007
      %v1015 = vadd.f32 %v976, %v1007
      %v1016 = vadd.f32 %v977, %v1007
      %v1017 = vadd.f32 %v978, %v1007
      %v1018 = vadd.f32 %v979, %v1007
      %v1019 = vadd.f32 %v980, %v1007
      %v1020 = vadd.f32 %v981, %v1007
      %v1021 = vadd.f32 %v982, %v1007
      %v1022 = vadd.f32 %v983, %v1007
      %v1023 = vadd.f32 %v984, %v1007
      %v1024 = vadd.f32 %v985, %v1007
      %v1025 = vadd.f32 %v986, %v1007
      %v1026 = vadd.f32 %v987, %v1007
      %v1027 = vadd.f32 %v988, %v1007
      %v1028 = vadd.f32 %v989, %v1007
      %v1029 = vadd.f32 %v990, %v1007
      %v1030 = vadd.f32 %v991, %v1007
      %v1031 = vadd.f32 %v992, %v1007
      %v1032 = vadd.f32 %v993, %v1007
      %v1033 = vadd.f32 %v994, %v1007
      %v1034 = vadd.f32 %v995, %v1007
      %v1035 = vadd.f32 %v996, %v1007
      %v1036 = vadd.f32 %v997, %v1007
      %v1037 = vadd.f32 %v998, %v1007
      %v1038 = vadd.f32 %v999, %v1007
      %v1039 = vadd.f32 %v1000, %v1007
      %v1040 = vadd.f32 %v1001, %v1007
      %v1041 = vpack.c.bf16 %v1010, %v1009
      %v1042 = vpack.c.bf16 %v1012, %v1011
      %v1043 = vpack.c.bf16 %v1014, %v1013
      %v1044 = vpack.c.bf16 %v1016, %v1015
      %v1045 = vpack.c.bf16 %v1018, %v1017
      %v1046 = vpack.c.bf16 %v1020, %v1019
      %v1047 = vpack.c.bf16 %v1022, %v1021
      %v1048 = vpack.c.bf16 %v1024, %v1023
      %v1049 = vpack.c.bf16 %v1026, %v1025
      %v1050 = vpack.c.bf16 %v1028, %v1027
      %v1051 = vpack.c.bf16 %v1030, %v1029
      %v1052 = vpack.c.bf16 %v1032, %v1031
      %v1053 = vpack.c.bf16 %v1034, %v1033
      %v1054 = vpack.c.bf16 %v1036, %v1035
      %v1055 = vpack.c.bf16 %v1038, %v1037
      %v1056 = vpack.c.bf16 %v1040, %v1039
      %v1057 = vld [vmem:[%s5] sm:$0xf]
      %v1058 = vld [vmem:[%s5 + $0x4] sm:$0xf]
      %v1059 = vld [vmem:[%s5 + $0x8] sm:$0xf]
      %v1060 = vld [vmem:[%s5 + $0xc] sm:$0xf]
      %v1065 = vunpack.c.l.b16 %v1057
      %v1066 = vunpack.c.l.b16 %v1058
      %v1067 = vunpack.c.l.b16 %v1059
      %v1068 = vunpack.c.l.b16 %v1060
      %v1069 = vpack.c.b16 %v1066, %v1065
      %v1070 = vpack.c.b16 %v1068, %v1067
      %v1074 = vsel %vm418, %v1041, 0
      %v1077 = vsel %vm418, %v1042, 0
      %v1080 = vsel %vm418, %v1043, 0
      %v1083 = vsel %vm418, %v1044, 0
      %v1086 = vsel %vm418, %v1045, 0
      %v1089 = vsel %vm418, %v1046, 0
      %v1092 = vsel %vm418, %v1047, 0
      %v1095 = vsel %vm418, %v1048, 0
      %v1098 = vsel %vm418, %v1049, 0
      %v1101 = vsel %vm418, %v1050, 0
      %v1104 = vsel %vm418, %v1051, 0
      %v1107 = vsel %vm418, %v1052, 0
      %v1110 = vsel %vm418, %v1053, 0
      %v1113 = vsel %vm418, %v1054, 0
      %v1116 = vsel %vm418, %v1055, 0
      %v1119 = vsel %vm418, %v1056, 0
      %1121 = vmatprep.subr.bf16.mxu0 0
      %1122 = vmatpush1.bf16.msra.mxu0 %v1069
      %1123 = vmatprep.subr.bf16.mxu0 0
      %1124 = vmatpush1.bf16.msra.mxu0 %v1070
      %1125 = vmatprep.subr.bf16.mxu0 0
      %1126 = vmatpush1.bf16.msra.mxu0 0
      %1127 = vmatprep.subr.bf16.mxu0 0
      %1128 = vmatpush1.bf16.msra.mxu0 0
      %1129 = vmatprep.subr.bf16.mxu0 0
      %1130 = vmatpush1.bf16.msra.mxu0 0
      %1131 = vmatprep.subr.bf16.mxu0 0
      %1132 = vmatpush1.bf16.msra.mxu0 0
      %1133 = vmatprep.subr.bf16.mxu0 0
      %1134 = vmatpush1.bf16.msra.mxu0 0
      %1135 = vmatprep.subr.bf16.mxu0 0
      %1136 = vmatpush1.bf16.msra.mxu0 0
      %1137 = vmatprep.subr.bf16.mxu0 0
      %1138 = vmatpush1.bf16.msra.mxu0 0
      %1139 = vmatprep.subr.bf16.mxu0 0
      %1140 = vmatpush1.bf16.msra.mxu0 0
      %1141 = vmatprep.subr.bf16.mxu0 0
      %1142 = vmatpush1.bf16.msra.mxu0 0
      %1143 = vmatprep.subr.bf16.mxu0 0
      %1144 = vmatpush1.bf16.msra.mxu0 0
      %1145 = vmatprep.subr.bf16.mxu0 0
      %1146 = vmatpush1.bf16.msra.mxu0 0
      %1147 = vmatprep.subr.bf16.mxu0 0
      %1148 = vmatpush1.bf16.msra.mxu0 0
      %1149 = vmatprep.subr.bf16.mxu0 0
      %1150 = vmatpush1.bf16.msra.mxu0 0
      %1151 = vmatprep.subr.bf16.mxu0 0
      %1152 = vmatpush1.bf16.msra.mxu0 0
      %1153 = vmatprep.mubr.bf16.mxu0 0
      %1154 = vmatmul.mubr.bf16.gmra.mrb[0].mxu0 %v1074
      %v1155 = vpop.f32.mrb[0].mxu0
      %v1156 = vadd.f32 0.0, %v1155
      %v1157 = vpop.f32.mrb[0].mxu0
      %v1158 = vpop.f32.mrb[0].mxu0
      %v1159 = vadd.f32 0.0, %v1158
      %v1160 = vpop.f32.mrb[0].mxu0
      %1161 = vmatprep.mubr.bf16.mxu0 0
      %1162 = vmatmul.mubr.bf16.gmra.mrb[0].mxu0 %v1077
      %v1163 = vpop.f32.mrb[0].mxu0
      %v1164 = vadd.f32 0.0, %v1163
      %v1165 = vpop.f32.mrb[0].mxu0
      %v1166 = vpop.f32.mrb[0].mxu0
      %v1167 = vadd.f32 0.0, %v1166
      %v1168 = vpop.f32.mrb[0].mxu0
      %1169 = vmatprep.mubr.bf16.mxu0 0
      %1170 = vmatmul.mubr.bf16.gmra.mrb[0].mxu0 %v1080
      %v1171 = vpop.f32.mrb[0].mxu0
      %v1172 = vadd.f32 0.0, %v1171
      %v1173 = vpop.f32.mrb[0].mxu0
      %v1174 = vpop.f32.mrb[0].mxu0
      %v1175 = vadd.f32 0.0, %v1174
      %v1176 = vpop.f32.mrb[0].mxu0
      %1177 = vmatprep.mubr.bf16.mxu0 0
      %1178 = vmatmul.mubr.bf16.gmra.mrb[0].mxu0 %v1083
      %v1179 = vpop.f32.mrb[0].mxu0
      %v1180 = vadd.f32 0.0, %v1179
      %v1181 = vpop.f32.mrb[0].mxu0
      %v1182 = vpop.f32.mrb[0].mxu0
      %v1183 = vadd.f32 0.0, %v1182
      %v1184 = vpop.f32.mrb[0].mxu0
      %1185 = vmatprep.mubr.bf16.mxu0 0
      %1186 = vmatmul.mubr.bf16.gmra.mrb[0].mxu0 %v1086
      %v1187 = vpop.f32.mrb[0].mxu0
      %v1188 = vadd.f32 0.0, %v1187
      %v1189 = vpop.f32.mrb[0].mxu0
      %v1190 = vpop.f32.mrb[0].mxu0
      %v1191 = vadd.f32 0.0, %v1190
      %v1192 = vpop.f32.mrb[0].mxu0
      %1193 = vmatprep.mubr.bf16.mxu0 0
      %1194 = vmatmul.mubr.bf16.gmra.mrb[0].mxu0 %v1089
      %v1195 = vpop.f32.mrb[0].mxu0
      %v1196 = vadd.f32 0.0, %v1195
      %v1197 = vpop.f32.mrb[0].mxu0
      %v1198 = vpop.f32.mrb[0].mxu0
      %v1199 = vadd.f32 0.0, %v1198
      %v1200 = vpop.f32.mrb[0].mxu0
      %1201 = vmatprep.mubr.bf16.mxu0 0
      %1202 = vmatmul.mubr.bf16.gmra.mrb[0].mxu0 %v1092
      %v1203 = vpop.f32.mrb[0].mxu0
      %v1204 = vadd.f32 0.0, %v1203
      %v1205 = vpop.f32.mrb[0].mxu0
      %v1206 = vpop.f32.mrb[0].mxu0
      %v1207 = vadd.f32 0.0, %v1206
      %v1208 = vpop.f32.mrb[0].mxu0
      %1209 = vmatprep.mubr.bf16.mxu0 0
      %1210 = vmatmul.mubr.bf16.gmra.mrb[0].mxu0 %v1095
      %v1211 = vpop.f32.mrb[0].mxu0
      %v1212 = vadd.f32 0.0, %v1211
      %v1213 = vpop.f32.mrb[0].mxu0
      %v1214 = vpop.f32.mrb[0].mxu0
      %v1215 = vadd.f32 0.0, %v1214
      %v1216 = vpop.f32.mrb[0].mxu0
      %1217 = vmatprep.mubr.bf16.mxu0 0
      %1218 = vmatmul.mubr.bf16.gmra.mrb[0].mxu0 %v1098
      %v1219 = vpop.f32.mrb[0].mxu0
      %v1220 = vadd.f32 0.0, %v1219
      %v1221 = vpop.f32.mrb[0].mxu0
      %v1222 = vpop.f32.mrb[0].mxu0
      %v1223 = vadd.f32 0.0, %v1222
      %v1224 = vpop.f32.mrb[0].mxu0
      %1225 = vmatprep.mubr.bf16.mxu0 0
      %1226 = vmatmul.mubr.bf16.gmra.mrb[0].mxu0 %v1101
      %v1227 = vpop.f32.mrb[0].mxu0
      %v1228 = vadd.f32 0.0, %v1227
      %v1229 = vpop.f32.mrb[0].mxu0
      %v1230 = vpop.f32.mrb[0].mxu0
      %v1231 = vadd.f32 0.0, %v1230
      %v1232 = vpop.f32.mrb[0].mxu0
      %1233 = vmatprep.mubr.bf16.mxu0 0
      %1234 = vmatmul.mubr.bf16.gmra.mrb[0].mxu0 %v1104
      %v1235 = vpop.f32.mrb[0].mxu0
      %v1236 = vadd.f32 0.0, %v1235
      %v1237 = vpop.f32.mrb[0].mxu0
      %v1238 = vpop.f32.mrb[0].mxu0
      %v1239 = vadd.f32 0.0, %v1238
      %v1240 = vpop.f32.mrb[0].mxu0
      %1241 = vmatprep.mubr.bf16.mxu0 0
      %1242 = vmatmul.mubr.bf16.gmra.mrb[0].mxu0 %v1107
      %v1243 = vpop.f32.mrb[0].mxu0
      %v1244 = vadd.f32 0.0, %v1243
      %v1245 = vpop.f32.mrb[0].mxu0
      %v1246 = vpop.f32.mrb[0].mxu0
      %v1247 = vadd.f32 0.0, %v1246
      %v1248 = vpop.f32.mrb[0].mxu0
      %1249 = vmatprep.mubr.bf16.mxu0 0
      %1250 = vmatmul.mubr.bf16.gmra.mrb[0].mxu0 %v1110
      %v1251 = vpop.f32.mrb[0].mxu0
      %v1252 = vadd.f32 0.0, %v1251
      %v1253 = vpop.f32.mrb[0].mxu0
      %v1254 = vpop.f32.mrb[0].mxu0
      %v1255 = vadd.f32 0.0, %v1254
      %v1256 = vpop.f32.mrb[0].mxu0
      %1257 = vmatprep.mubr.bf16.mxu0 0
      %1258 = vmatmul.mubr.bf16.gmra.mrb[0].mxu0 %v1113
      %v1259 = vpop.f32.mrb[0].mxu0
      %v1260 = vadd.f32 0.0, %v1259
      %v1261 = vpop.f32.mrb[0].mxu0
      %v1262 = vpop.f32.mrb[0].mxu0
      %v1263 = vadd.f32 0.0, %v1262
      %v1264 = vpop.f32.mrb[0].mxu0
      %1265 = vmatprep.mubr.bf16.mxu0 0
      %1266 = vmatmul.mubr.bf16.gmra.mrb[0].mxu0 %v1116
      %v1267 = vpop.f32.mrb[0].mxu0
      %v1268 = vadd.f32 0.0, %v1267
      %v1269 = vpop.f32.mrb[0].mxu0
      %v1270 = vpop.f32.mrb[0].mxu0
      %v1271 = vadd.f32 0.0, %v1270
      %v1272 = vpop.f32.mrb[0].mxu0
      %1273 = vmatprep.mubr.bf16.mxu0 0
      %1274 = vmatmul.mubr.bf16.gmra.mrb[0].mxu0 %v1119
      %v1275 = vpop.f32.mrb[0].mxu0
      %v1276 = vadd.f32 0.0, %v1275
      %v1277 = vpop.f32.mrb[0].mxu0
      %v1278 = vpop.f32.mrb[0].mxu0
      %v1279 = vadd.f32 0.0, %v1278
      %v1280 = vpop.f32.mrb[0].mxu0
      %1281 = vdwg.mxu0
      %v1282 = vpack.c.bf16 %v1159, %v1156
      %v1283 = vpack.c.bf16 %v1167, %v1164
      %v1284 = vpack.c.bf16 %v1175, %v1172
      %v1285 = vpack.c.bf16 %v1183, %v1180
      %v1286 = vpack.c.bf16 %v1191, %v1188
      %v1287 = vpack.c.bf16 %v1199, %v1196
      %v1288 = vpack.c.bf16 %v1207, %v1204
      %v1289 = vpack.c.bf16 %v1215, %v1212
      %v1290 = vpack.c.bf16 %v1223, %v1220
      %v1291 = vpack.c.bf16 %v1231, %v1228
      %v1292 = vpack.c.bf16 %v1239, %v1236
      %v1293 = vpack.c.bf16 %v1247, %v1244
      %v1294 = vpack.c.bf16 %v1255, %v1252
      %v1295 = vpack.c.bf16 %v1263, %v1260
      %v1296 = vpack.c.bf16 %v1271, %v1268
      %v1297 = vpack.c.bf16 %v1279, %v1276
      %v1314 = vunpack.c.l.b16 %v1282
      %v1315 = vunpack.c.h.b16 %v1282
      %v1316 = vunpack.c.l.b16 %v1283
      %v1317 = vunpack.c.h.b16 %v1283
      %v1318 = vunpack.c.l.b16 %v1284
      %v1319 = vunpack.c.h.b16 %v1284
      %v1320 = vunpack.c.l.b16 %v1285
      %v1321 = vunpack.c.h.b16 %v1285
      %v1322 = vunpack.c.l.b16 %v1286
      %v1323 = vunpack.c.h.b16 %v1286
      %v1324 = vunpack.c.l.b16 %v1287
      %v1325 = vunpack.c.h.b16 %v1287
      %v1326 = vunpack.c.l.b16 %v1288
      %v1327 = vunpack.c.h.b16 %v1288
      %v1328 = vunpack.c.l.b16 %v1289
      %v1329 = vunpack.c.h.b16 %v1289
      %v1330 = vunpack.c.l.b16 %v1290
      %v1331 = vunpack.c.h.b16 %v1290
      %v1332 = vunpack.c.l.b16 %v1291
      %v1333 = vunpack.c.h.b16 %v1291
      %v1334 = vunpack.c.l.b16 %v1292
      %v1335 = vunpack.c.h.b16 %v1292
      %v1336 = vunpack.c.l.b16 %v1293
      %v1337 = vunpack.c.h.b16 %v1293
      %v1338 = vunpack.c.l.b16 %v1294
      %v1339 = vunpack.c.h.b16 %v1294
      %v1340 = vunpack.c.l.b16 %v1295
      %v1341 = vunpack.c.h.b16 %v1295
      %v1342 = vunpack.c.l.b16 %v1296
      %v1343 = vunpack.c.h.b16 %v1296
      %v1344 = vunpack.c.l.b16 %v1297
      %v1345 = vunpack.c.h.b16 %v1297
      %v1346 = vpack.c.b16 %v1314, %v1314
      %v1347 = vpack.c.b16 %v1315, %v1315
      %v1348 = vpack.c.b16 %v1316, %v1316
      %v1349 = vpack.c.b16 %v1317, %v1317
      %v1350 = vpack.c.b16 %v1318, %v1318
      %v1351 = vpack.c.b16 %v1319, %v1319
      %v1352 = vpack.c.b16 %v1320, %v1320
      %v1353 = vpack.c.b16 %v1321, %v1321
      %v1354 = vpack.c.b16 %v1322, %v1322
      %v1355 = vpack.c.b16 %v1323, %v1323
      %v1356 = vpack.c.b16 %v1324, %v1324
      %v1357 = vpack.c.b16 %v1325, %v1325
      %v1358 = vpack.c.b16 %v1326, %v1326
      %v1359 = vpack.c.b16 %v1327, %v1327
      %v1360 = vpack.c.b16 %v1328, %v1328
      %v1361 = vpack.c.b16 %v1329, %v1329
      %v1362 = vpack.c.b16 %v1330, %v1330
      %v1363 = vpack.c.b16 %v1331, %v1331
      %v1364 = vpack.c.b16 %v1332, %v1332
      %v1365 = vpack.c.b16 %v1333, %v1333
      %v1366 = vpack.c.b16 %v1334, %v1334
      %v1367 = vpack.c.b16 %v1335, %v1335
      %v1368 = vpack.c.b16 %v1336, %v1336
      %v1369 = vpack.c.b16 %v1337, %v1337
      %v1370 = vpack.c.b16 %v1338, %v1338
      %v1371 = vpack.c.b16 %v1339, %v1339
      %v1372 = vpack.c.b16 %v1340, %v1340
      %v1373 = vpack.c.b16 %v1341, %v1341
      %v1374 = vpack.c.b16 %v1342, %v1342
      %v1375 = vpack.c.b16 %v1343, %v1343
      %v1376 = vpack.c.b16 %v1344, %v1344
      %v1377 = vpack.c.b16 %v1345, %v1345
      %vm1410 = vcmask 60416
      %1411 = vst.msk [vmem:[%s374] sm:$0xf] %vm1410, %v1346
      %1412 = vst.msk [vmem:[%s374 + $0x4] sm:$0xf] %vm1410, %v1347
      %1413 = vst.msk [vmem:[%s374 + $0x8] sm:$0xf] %vm1410, %v1348
      %1414 = vst.msk [vmem:[%s374 + $0xc] sm:$0xf] %vm1410, %v1349
      %1415 = vst.msk [vmem:[%s374 + $0x10] sm:$0xf] %vm1410, %v1350
      %1416 = vst.msk [vmem:[%s374 + $0x14] sm:$0xf] %vm1410, %v1351
      %1417 = vst.msk [vmem:[%s374 + $0x18] sm:$0xf] %vm1410, %v1352
      %1418 = vst.msk [vmem:[%s374 + $0x1c] sm:$0xf] %vm1410, %v1353
      %1419 = vst.msk [vmem:[%s374 + $0x20] sm:$0xf] %vm1410, %v1354
      %1420 = vst.msk [vmem:[%s374 + $0x24] sm:$0xf] %vm1410, %v1355
      %1421 = vst.msk [vmem:[%s374 + $0x28] sm:$0xf] %vm1410, %v1356
      %1422 = vst.msk [vmem:[%s374 + $0x2c] sm:$0xf] %vm1410, %v1357
      %1423 = vst.msk [vmem:[%s374 + $0x30] sm:$0xf] %vm1410, %v1358
      %1424 = vst.msk [vmem:[%s374 + $0x34] sm:$0xf] %vm1410, %v1359
      %1425 = vst.msk [vmem:[%s374 + $0x38] sm:$0xf] %vm1410, %v1360
      %1426 = vst.msk [vmem:[%s374 + $0x3c] sm:$0xf] %vm1410, %v1361
      %1427 = vst.msk [vmem:[%s374 + $0x40] sm:$0xf] %vm1410, %v1362
      %1428 = vst.msk [vmem:[%s374 + $0x44] sm:$0xf] %vm1410, %v1363
      %1429 = vst.msk [vmem:[%s374 + $0x48] sm:$0xf] %vm1410, %v1364
      %1430 = vst.msk [vmem:[%s374 + $0x4c] sm:$0xf] %vm1410, %v1365
      %1431 = vst.msk [vmem:[%s374 + $0x50] sm:$0xf] %vm1410, %v1366
      %1432 = vst.msk [vmem:[%s374 + $0x54] sm:$0xf] %vm1410, %v1367
      %1433 = vst.msk [vmem:[%s374 + $0x58] sm:$0xf] %vm1410, %v1368
      %1434 = vst.msk [vmem:[%s374 + $0x5c] sm:$0xf] %vm1410, %v1369
      %1435 = vst.msk [vmem:[%s374 + $0x60] sm:$0xf] %vm1410, %v1370
      %1436 = vst.msk [vmem:[%s374 + $0x64] sm:$0xf] %vm1410, %v1371
      %1437 = vst.msk [vmem:[%s374 + $0x68] sm:$0xf] %vm1410, %v1372
      %1438 = vst.msk [vmem:[%s374 + $0x6c] sm:$0xf] %vm1410, %v1373
      %1439 = vst.msk [vmem:[%s374 + $0x70] sm:$0xf] %vm1410, %v1374
      %1440 = vst.msk [vmem:[%s374 + $0x74] sm:$0xf] %vm1410, %v1375
      %1441 = vst.msk [vmem:[%s374 + $0x78] sm:$0xf] %vm1410, %v1376
      %1442 = vst.msk [vmem:[%s374 + $0x7c] sm:$0xf] %vm1410, %v1377
      %v1443 = vld [vmem:[%s6] sm:$0xf]
      %v1444 = vld [vmem:[%s6 + $0x4] sm:$0xf]
      %v1445 = vld [vmem:[%s6 + $0x8] sm:$0xf]
      %v1446 = vld [vmem:[%s6 + $0xc] sm:$0xf]
      %v1451 = vunpack.c.l.b16 %v1443
      %v1452 = vunpack.c.l.b16 %v1444
      %v1453 = vunpack.c.l.b16 %v1445
      %v1454 = vunpack.c.l.b16 %v1446
      %v1455 = vpack.c.b16 %v1452, %v1451
      %v1456 = vpack.c.b16 %v1454, %v1453
      %1459 = vmatprep.subr.bf16.mxu0 0
      %1460 = vmatpush1.bf16.msra.mxu0 %v1455
      %1461 = vmatprep.subr.bf16.mxu0 0
      %1462 = vmatpush1.bf16.msra.mxu0 %v1456
      %1463 = vmatprep.subr.bf16.mxu0 0
      %1464 = vmatpush1.bf16.msra.mxu0 0
      %1465 = vmatprep.subr.bf16.mxu0 0
      %1466 = vmatpush1.bf16.msra.mxu0 0
      %1467 = vmatprep.subr.bf16.mxu0 0
      %1468 = vmatpush1.bf16.msra.mxu0 0
      %1469 = vmatprep.subr.bf16.mxu0 0
      %1470 = vmatpush1.bf16.msra.mxu0 0
      %1471 = vmatprep.subr.bf16.mxu0 0
      %1472 = vmatpush1.bf16.msra.mxu0 0
      %1473 = vmatprep.subr.bf16.mxu0 0
      %1474 = vmatpush1.bf16.msra.mxu0 0
      %1475 = vmatprep.subr.bf16.mxu0 0
      %1476 = vmatpush1.bf16.msra.mxu0 0
      %1477 = vmatprep.subr.bf16.mxu0 0
      %1478 = vmatpush1.bf16.msra.mxu0 0
      %1479 = vmatprep.subr.bf16.mxu0 0
      %1480 = vmatpush1.bf16.msra.mxu0 0
      %1481 = vmatprep.subr.bf16.mxu0 0
      %1482 = vmatpush1.bf16.msra.mxu0 0
      %1483 = vmatprep.subr.bf16.mxu0 0
      %1484 = vmatpush1.bf16.msra.mxu0 0
      %1485 = vmatprep.subr.bf16.mxu0 0
      %1486 = vmatpush1.bf16.msra.mxu0 0
      %1487 = vmatprep.subr.bf16.mxu0 0
      %1488 = vmatpush1.bf16.msra.mxu0 0
      %1489 = vmatprep.subr.bf16.mxu0 0
      %1490 = vmatpush1.bf16.msra.mxu0 0
      %1491 = vmatprep.mubr.bf16.mxu0 0
      %1492 = vmatmul.mubr.bf16.gmra.mrb[0].mxu0 %v1074
      %v1493 = vpop.f32.mrb[0].mxu0
      %v1494 = vadd.f32 0.0, %v1493
      %v1495 = vpop.f32.mrb[0].mxu0
      %v1496 = vpop.f32.mrb[0].mxu0
      %v1497 = vadd.f32 0.0, %v1496
      %v1498 = vpop.f32.mrb[0].mxu0
      %1499 = vmatprep.mubr.bf16.mxu0 0
      %1500 = vmatmul.mubr.bf16.gmra.mrb[0].mxu0 %v1077
      %v1501 = vpop.f32.mrb[0].mxu0
      %v1502 = vadd.f32 0.0, %v1501
      %v1503 = vpop.f32.mrb[0].mxu0
      %v1504 = vpop.f32.mrb[0].mxu0
      %v1505 = vadd.f32 0.0, %v1504
      %v1506 = vpop.f32.mrb[0].mxu0
      %1507 = vmatprep.mubr.bf16.mxu0 0
      %1508 = vmatmul.mubr.bf16.gmra.mrb[0].mxu0 %v1080
      %v1509 = vpop.f32.mrb[0].mxu0
      %v1510 = vadd.f32 0.0, %v1509
      %v1511 = vpop.f32.mrb[0].mxu0
      %v1512 = vpop.f32.mrb[0].mxu0
      %v1513 = vadd.f32 0.0, %v1512
      %v1514 = vpop.f32.mrb[0].mxu0
      %1515 = vmatprep.mubr.bf16.mxu0 0
      %1516 = vmatmul.mubr.bf16.gmra.mrb[0].mxu0 %v1083
      %v1517 = vpop.f32.mrb[0].mxu0
      %v1518 = vadd.f32 0.0, %v1517
      %v1519 = vpop.f32.mrb[0].mxu0
      %v1520 = vpop.f32.mrb[0].mxu0
      %v1521 = vadd.f32 0.0, %v1520
      %v1522 = vpop.f32.mrb[0].mxu0
      %1523 = vmatprep.mubr.bf16.mxu0 0
      %1524 = vmatmul.mubr.bf16.gmra.mrb[0].mxu0 %v1086
      %v1525 = vpop.f32.mrb[0].mxu0
      %v1526 = vadd.f32 0.0, %v1525
      %v1527 = vpop.f32.mrb[0].mxu0
      %v1528 = vpop.f32.mrb[0].mxu0
      %v1529 = vadd.f32 0.0, %v1528
      %v1530 = vpop.f32.mrb[0].mxu0
      %1531 = vmatprep.mubr.bf16.mxu0 0
      %1532 = vmatmul.mubr.bf16.gmra.mrb[0].mxu0 %v1089
      %v1533 = vpop.f32.mrb[0].mxu0
      %v1534 = vadd.f32 0.0, %v1533
      %v1535 = vpop.f32.mrb[0].mxu0
      %v1536 = vpop.f32.mrb[0].mxu0
      %v1537 = vadd.f32 0.0, %v1536
      %v1538 = vpop.f32.mrb[0].mxu0
      %1539 = vmatprep.mubr.bf16.mxu0 0
      %1540 = vmatmul.mubr.bf16.gmra.mrb[0].mxu0 %v1092
      %v1541 = vpop.f32.mrb[0].mxu0
      %v1542 = vadd.f32 0.0, %v1541
      %v1543 = vpop.f32.mrb[0].mxu0
      %v1544 = vpop.f32.mrb[0].mxu0
      %v1545 = vadd.f32 0.0, %v1544
      %v1546 = vpop.f32.mrb[0].mxu0
      %1547 = vmatprep.mubr.bf16.mxu0 0
      %1548 = vmatmul.mubr.bf16.gmra.mrb[0].mxu0 %v1095
      %v1549 = vpop.f32.mrb[0].mxu0
      %v1550 = vadd.f32 0.0, %v1549
      %v1551 = vpop.f32.mrb[0].mxu0
      %v1552 = vpop.f32.mrb[0].mxu0
      %v1553 = vadd.f32 0.0, %v1552
      %v1554 = vpop.f32.mrb[0].mxu0
      %1555 = vmatprep.mubr.bf16.mxu0 0
      %1556 = vmatmul.mubr.bf16.gmra.mrb[0].mxu0 %v1098
      %v1557 = vpop.f32.mrb[0].mxu0
      %v1558 = vadd.f32 0.0, %v1557
      %v1559 = vpop.f32.mrb[0].mxu0
      %v1560 = vpop.f32.mrb[0].mxu0
      %v1561 = vadd.f32 0.0, %v1560
      %v1562 = vpop.f32.mrb[0].mxu0
      %1563 = vmatprep.mubr.bf16.mxu0 0
      %1564 = vmatmul.mubr.bf16.gmra.mrb[0].mxu0 %v1101
      %v1565 = vpop.f32.mrb[0].mxu0
      %v1566 = vadd.f32 0.0, %v1565
      %v1567 = vpop.f32.mrb[0].mxu0
      %v1568 = vpop.f32.mrb[0].mxu0
      %v1569 = vadd.f32 0.0, %v1568
      %v1570 = vpop.f32.mrb[0].mxu0
      %1571 = vmatprep.mubr.bf16.mxu0 0
      %1572 = vmatmul.mubr.bf16.gmra.mrb[0].mxu0 %v1104
      %v1573 = vpop.f32.mrb[0].mxu0
      %v1574 = vadd.f32 0.0, %v1573
      %v1575 = vpop.f32.mrb[0].mxu0
      %v1576 = vpop.f32.mrb[0].mxu0
      %v1577 = vadd.f32 0.0, %v1576
      %v1578 = vpop.f32.mrb[0].mxu0
      %1579 = vmatprep.mubr.bf16.mxu0 0
      %1580 = vmatmul.mubr.bf16.gmra.mrb[0].mxu0 %v1107
      %v1581 = vpop.f32.mrb[0].mxu0
      %v1582 = vadd.f32 0.0, %v1581
      %v1583 = vpop.f32.mrb[0].mxu0
      %v1584 = vpop.f32.mrb[0].mxu0
      %v1585 = vadd.f32 0.0, %v1584
      %v1586 = vpop.f32.mrb[0].mxu0
      %1587 = vmatprep.mubr.bf16.mxu0 0
      %1588 = vmatmul.mubr.bf16.gmra.mrb[0].mxu0 %v1110
      %v1589 = vpop.f32.mrb[0].mxu0
      %v1590 = vadd.f32 0.0, %v1589
      %v1591 = vpop.f32.mrb[0].mxu0
      %v1592 = vpop.f32.mrb[0].mxu0
      %v1593 = vadd.f32 0.0, %v1592
      %v1594 = vpop.f32.mrb[0].mxu0
      %1595 = vmatprep.mubr.bf16.mxu0 0
      %1596 = vmatmul.mubr.bf16.gmra.mrb[0].mxu0 %v1113
      %v1597 = vpop.f32.mrb[0].mxu0
      %v1598 = vadd.f32 0.0, %v1597
      %v1599 = vpop.f32.mrb[0].mxu0
      %v1600 = vpop.f32.mrb[0].mxu0
      %v1601 = vadd.f32 0.0, %v1600
      %v1602 = vpop.f32.mrb[0].mxu0
      %1603 = vmatprep.mubr.bf16.mxu0 0
      %1604 = vmatmul.mubr.bf16.gmra.mrb[0].mxu0 %v1116
      %v1605 = vpop.f32.mrb[0].mxu0
      %v1606 = vadd.f32 0.0, %v1605
      %v1607 = vpop.f32.mrb[0].mxu0
      %v1608 = vpop.f32.mrb[0].mxu0
      %v1609 = vadd.f32 0.0, %v1608
      %v1610 = vpop.f32.mrb[0].mxu0
      %1611 = vmatprep.mubr.bf16.mxu0 0
      %1612 = vmatmul.mubr.bf16.gmra.mrb[0].mxu0 %v1119
      %v1613 = vpop.f32.mrb[0].mxu0
      %v1614 = vadd.f32 0.0, %v1613
      %v1615 = vpop.f32.mrb[0].mxu0
      %v1616 = vpop.f32.mrb[0].mxu0
      %v1617 = vadd.f32 0.0, %v1616
      %v1618 = vpop.f32.mrb[0].mxu0
      %1619 = vdwg.mxu0
      %v1620 = vpack.c.bf16 %v1497, %v1494
      %v1621 = vpack.c.bf16 %v1505, %v1502
      %v1622 = vpack.c.bf16 %v1513, %v1510
      %v1623 = vpack.c.bf16 %v1521, %v1518
      %v1624 = vpack.c.bf16 %v1529, %v1526
      %v1625 = vpack.c.bf16 %v1537, %v1534
      %v1626 = vpack.c.bf16 %v1545, %v1542
      %v1627 = vpack.c.bf16 %v1553, %v1550
      %v1628 = vpack.c.bf16 %v1561, %v1558
      %v1629 = vpack.c.bf16 %v1569, %v1566
      %v1630 = vpack.c.bf16 %v1577, %v1574
      %v1631 = vpack.c.bf16 %v1585, %v1582
      %v1632 = vpack.c.bf16 %v1593, %v1590
      %v1633 = vpack.c.bf16 %v1601, %v1598
      %v1634 = vpack.c.bf16 %v1609, %v1606
      %v1635 = vpack.c.bf16 %v1617, %v1614
      %v1652 = vunpack.c.l.b16 %v1620
      %v1653 = vunpack.c.h.b16 %v1620
      %v1654 = vunpack.c.l.b16 %v1621
      %v1655 = vunpack.c.h.b16 %v1621
      %v1656 = vunpack.c.l.b16 %v1622
      %v1657 = vunpack.c.h.b16 %v1622
      %v1658 = vunpack.c.l.b16 %v1623
      %v1659 = vunpack.c.h.b16 %v1623
      %v1660 = vunpack.c.l.b16 %v1624
      %v1661 = vunpack.c.h.b16 %v1624
      %v1662 = vunpack.c.l.b16 %v1625
      %v1663 = vunpack.c.h.b16 %v1625
      %v1664 = vunpack.c.l.b16 %v1626
      %v1665 = vunpack.c.h.b16 %v1626
      %v1666 = vunpack.c.l.b16 %v1627
      %v1667 = vunpack.c.h.b16 %v1627
      %v1668 = vunpack.c.l.b16 %v1628
      %v1669 = vunpack.c.h.b16 %v1628
      %v1670 = vunpack.c.l.b16 %v1629
      %v1671 = vunpack.c.h.b16 %v1629
      %v1672 = vunpack.c.l.b16 %v1630
      %v1673 = vunpack.c.h.b16 %v1630
      %v1674 = vunpack.c.l.b16 %v1631
      %v1675 = vunpack.c.h.b16 %v1631
      %v1676 = vunpack.c.l.b16 %v1632
      %v1677 = vunpack.c.h.b16 %v1632
      %v1678 = vunpack.c.l.b16 %v1633
      %v1679 = vunpack.c.h.b16 %v1633
      %v1680 = vunpack.c.l.b16 %v1634
      %v1681 = vunpack.c.h.b16 %v1634
      %v1682 = vunpack.c.l.b16 %v1635
      %v1683 = vunpack.c.h.b16 %v1635
      %v1684 = vpack.c.b16 %v1652, %v1652
      %v1685 = vpack.c.b16 %v1653, %v1653
      %v1686 = vpack.c.b16 %v1654, %v1654
      %v1687 = vpack.c.b16 %v1655, %v1655
      %v1688 = vpack.c.b16 %v1656, %v1656
      %v1689 = vpack.c.b16 %v1657, %v1657
      %v1690 = vpack.c.b16 %v1658, %v1658
      %v1691 = vpack.c.b16 %v1659, %v1659
      %v1692 = vpack.c.b16 %v1660, %v1660
      %v1693 = vpack.c.b16 %v1661, %v1661
      %v1694 = vpack.c.b16 %v1662, %v1662
      %v1695 = vpack.c.b16 %v1663, %v1663
      %v1696 = vpack.c.b16 %v1664, %v1664
      %v1697 = vpack.c.b16 %v1665, %v1665
      %v1698 = vpack.c.b16 %v1666, %v1666
      %v1699 = vpack.c.b16 %v1667, %v1667
      %v1700 = vpack.c.b16 %v1668, %v1668
      %v1701 = vpack.c.b16 %v1669, %v1669
      %v1702 = vpack.c.b16 %v1670, %v1670
      %v1703 = vpack.c.b16 %v1671, %v1671
      %v1704 = vpack.c.b16 %v1672, %v1672
      %v1705 = vpack.c.b16 %v1673, %v1673
      %v1706 = vpack.c.b16 %v1674, %v1674
      %v1707 = vpack.c.b16 %v1675, %v1675
      %v1708 = vpack.c.b16 %v1676, %v1676
      %v1709 = vpack.c.b16 %v1677, %v1677
      %v1710 = vpack.c.b16 %v1678, %v1678
      %v1711 = vpack.c.b16 %v1679, %v1679
      %v1712 = vpack.c.b16 %v1680, %v1680
      %v1713 = vpack.c.b16 %v1681, %v1681
      %v1714 = vpack.c.b16 %v1682, %v1682
      %v1715 = vpack.c.b16 %v1683, %v1683
      %1748 = vst.msk [vmem:[%s379] sm:$0xf] %vm1410, %v1684
      %1749 = vst.msk [vmem:[%s379 + $0x4] sm:$0xf] %vm1410, %v1685
      %1750 = vst.msk [vmem:[%s379 + $0x8] sm:$0xf] %vm1410, %v1686
      %1751 = vst.msk [vmem:[%s379 + $0xc] sm:$0xf] %vm1410, %v1687
      %1752 = vst.msk [vmem:[%s379 + $0x10] sm:$0xf] %vm1410, %v1688
      %1753 = vst.msk [vmem:[%s379 + $0x14] sm:$0xf] %vm1410, %v1689
      %1754 = vst.msk [vmem:[%s379 + $0x18] sm:$0xf] %vm1410, %v1690
      %1755 = vst.msk [vmem:[%s379 + $0x1c] sm:$0xf] %vm1410, %v1691
      %1756 = vst.msk [vmem:[%s379 + $0x20] sm:$0xf] %vm1410, %v1692
      %1757 = vst.msk [vmem:[%s379 + $0x24] sm:$0xf] %vm1410, %v1693
      %1758 = vst.msk [vmem:[%s379 + $0x28] sm:$0xf] %vm1410, %v1694
      %1759 = vst.msk [vmem:[%s379 + $0x2c] sm:$0xf] %vm1410, %v1695
      %1760 = vst.msk [vmem:[%s379 + $0x30] sm:$0xf] %vm1410, %v1696
      %1761 = vst.msk [vmem:[%s379 + $0x34] sm:$0xf] %vm1410, %v1697
      %1762 = vst.msk [vmem:[%s379 + $0x38] sm:$0xf] %vm1410, %v1698
      %1763 = vst.msk [vmem:[%s379 + $0x3c] sm:$0xf] %vm1410, %v1699
      %1764 = vst.msk [vmem:[%s379 + $0x40] sm:$0xf] %vm1410, %v1700
      %1765 = vst.msk [vmem:[%s379 + $0x44] sm:$0xf] %vm1410, %v1701
      %1766 = vst.msk [vmem:[%s379 + $0x48] sm:$0xf] %vm1410, %v1702
      %1767 = vst.msk [vmem:[%s379 + $0x4c] sm:$0xf] %vm1410, %v1703
      %1768 = vst.msk [vmem:[%s379 + $0x50] sm:$0xf] %vm1410, %v1704
      %1769 = vst.msk [vmem:[%s379 + $0x54] sm:$0xf] %vm1410, %v1705
      %1770 = vst.msk [vmem:[%s379 + $0x58] sm:$0xf] %vm1410, %v1706
      %1771 = vst.msk [vmem:[%s379 + $0x5c] sm:$0xf] %vm1410, %v1707
      %1772 = vst.msk [vmem:[%s379 + $0x60] sm:$0xf] %vm1410, %v1708
      %1773 = vst.msk [vmem:[%s379 + $0x64] sm:$0xf] %vm1410, %v1709
      %1774 = vst.msk [vmem:[%s379 + $0x68] sm:$0xf] %vm1410, %v1710
      %1775 = vst.msk [vmem:[%s379 + $0x6c] sm:$0xf] %vm1410, %v1711
      %1776 = vst.msk [vmem:[%s379 + $0x70] sm:$0xf] %vm1410, %v1712
      %1777 = vst.msk [vmem:[%s379 + $0x74] sm:$0xf] %vm1410, %v1713
      %1778 = vst.msk [vmem:[%s379 + $0x78] sm:$0xf] %vm1410, %v1714
      %1779 = vst.msk [vmem:[%s379 + $0x7c] sm:$0xf] %vm1410, %v1715
      %v1780 = vld [vmem:[%s7] sm:$0xf]
      %v1781 = vld [vmem:[%s7 + $0x4] sm:$0xf]
      %v1782 = vld [vmem:[%s7 + $0x8] sm:$0xf]
      %v1783 = vld [vmem:[%s7 + $0xc] sm:$0xf]
      %v1788 = vunpack.c.l.b16 %v1780
      %v1789 = vunpack.c.l.b16 %v1781
      %v1790 = vunpack.c.l.b16 %v1782
      %v1791 = vunpack.c.l.b16 %v1783
      %v1792 = vpack.c.b16 %v1789, %v1788
      %v1793 = vpack.c.b16 %v1791, %v1790
      %1796 = vmatprep.subr.bf16.mxu0 0
      %1797 = vmatpush1.bf16.msra.mxu0 %v1792
      %1798 = vmatprep.subr.bf16.mxu0 0
      %1799 = vmatpush1.bf16.msra.mxu0 %v1793
      %1800 = vmatprep.subr.bf16.mxu0 0
      %1801 = vmatpush1.bf16.msra.mxu0 0
      %1802 = vmatprep.subr.bf16.mxu0 0
      %1803 = vmatpush1.bf16.msra.mxu0 0
      %1804 = vmatprep.subr.bf16.mxu0 0
      %1805 = vmatpush1.bf16.msra.mxu0 0
      %1806 = vmatprep.subr.bf16.mxu0 0
      %1807 = vmatpush1.bf16.msra.mxu0 0
      %1808 = vmatprep.subr.bf16.mxu0 0
      %1809 = vmatpush1.bf16.msra.mxu0 0
      %1810 = vmatprep.subr.bf16.mxu0 0
      %1811 = vmatpush1.bf16.msra.mxu0 0
      %1812 = vmatprep.subr.bf16.mxu0 0
      %1813 = vmatpush1.bf16.msra.mxu0 0
      %1814 = vmatprep.subr.bf16.mxu0 0
      %1815 = vmatpush1.bf16.msra.mxu0 0
      %1816 = vmatprep.subr.bf16.mxu0 0
      %1817 = vmatpush1.bf16.msra.mxu0 0
      %1818 = vmatprep.subr.bf16.mxu0 0
      %1819 = vmatpush1.bf16.msra.mxu0 0
      %1820 = vmatprep.subr.bf16.mxu0 0
      %1821 = vmatpush1.bf16.msra.mxu0 0
      %1822 = vmatprep.subr.bf16.mxu0 0
      %1823 = vmatpush1.bf16.msra.mxu0 0
      %1824 = vmatprep.subr.bf16.mxu0 0
      %1825 = vmatpush1.bf16.msra.mxu0 0
      %1826 = vmatprep.subr.bf16.mxu0 0
      %1827 = vmatpush1.bf16.msra.mxu0 0
      %1828 = vmatprep.mubr.bf16.mxu0 0
      %1829 = vmatmul.mubr.bf16.gmra.mrb[0].mxu0 %v1074
      %v1830 = vpop.f32.mrb[0].mxu0
      %v1831 = vadd.f32 0.0, %v1830
      %v1832 = vpop.f32.mrb[0].mxu0
      %v1833 = vpop.f32.mrb[0].mxu0
      %v1834 = vadd.f32 0.0, %v1833
      %v1835 = vpop.f32.mrb[0].mxu0
      %1836 = vmatprep.mubr.bf16.mxu0 0
      %1837 = vmatmul.mubr.bf16.gmra.mrb[0].mxu0 %v1077
      %v1838 = vpop.f32.mrb[0].mxu0
      %v1839 = vadd.f32 0.0, %v1838
      %v1840 = vpop.f32.mrb[0].mxu0
      %v1841 = vpop.f32.mrb[0].mxu0
      %v1842 = vadd.f32 0.0, %v1841
      %v1843 = vpop.f32.mrb[0].mxu0
      %1844 = vmatprep.mubr.bf16.mxu0 0
      %1845 = vmatmul.mubr.bf16.gmra.mrb[0].mxu0 %v1080
      %v1846 = vpop.f32.mrb[0].mxu0
      %v1847 = vadd.f32 0.0, %v1846
      %v1848 = vpop.f32.mrb[0].mxu0
      %v1849 = vpop.f32.mrb[0].mxu0
      %v1850 = vadd.f32 0.0, %v1849
      %v1851 = vpop.f32.mrb[0].mxu0
      %1852 = vmatprep.mubr.bf16.mxu0 0
      %1853 = vmatmul.mubr.bf16.gmra.mrb[0].mxu0 %v1083
      %v1854 = vpop.f32.mrb[0].mxu0
      %v1855 = vadd.f32 0.0, %v1854
      %v1856 = vpop.f32.mrb[0].mxu0
      %v1857 = vpop.f32.mrb[0].mxu0
      %v1858 = vadd.f32 0.0, %v1857
      %v1859 = vpop.f32.mrb[0].mxu0
      %1860 = vmatprep.mubr.bf16.mxu0 0
      %1861 = vmatmul.mubr.bf16.gmra.mrb[0].mxu0 %v1086
      %v1862 = vpop.f32.mrb[0].mxu0
      %v1863 = vadd.f32 0.0, %v1862
      %v1864 = vpop.f32.mrb[0].mxu0
      %v1865 = vpop.f32.mrb[0].mxu0
      %v1866 = vadd.f32 0.0, %v1865
      %v1867 = vpop.f32.mrb[0].mxu0
      %1868 = vmatprep.mubr.bf16.mxu0 0
      %1869 = vmatmul.mubr.bf16.gmra.mrb[0].mxu0 %v1089
      %v1870 = vpop.f32.mrb[0].mxu0
      %v1871 = vadd.f32 0.0, %v1870
      %v1872 = vpop.f32.mrb[0].mxu0
      %v1873 = vpop.f32.mrb[0].mxu0
      %v1874 = vadd.f32 0.0, %v1873
      %v1875 = vpop.f32.mrb[0].mxu0
      %1876 = vmatprep.mubr.bf16.mxu0 0
      %1877 = vmatmul.mubr.bf16.gmra.mrb[0].mxu0 %v1092
      %v1878 = vpop.f32.mrb[0].mxu0
      %v1879 = vadd.f32 0.0, %v1878
      %v1880 = vpop.f32.mrb[0].mxu0
      %v1881 = vpop.f32.mrb[0].mxu0
      %v1882 = vadd.f32 0.0, %v1881
      %v1883 = vpop.f32.mrb[0].mxu0
      %1884 = vmatprep.mubr.bf16.mxu0 0
      %1885 = vmatmul.mubr.bf16.gmra.mrb[0].mxu0 %v1095
      %v1886 = vpop.f32.mrb[0].mxu0
      %v1887 = vadd.f32 0.0, %v1886
      %v1888 = vpop.f32.mrb[0].mxu0
      %v1889 = vpop.f32.mrb[0].mxu0
      %v1890 = vadd.f32 0.0, %v1889
      %v1891 = vpop.f32.mrb[0].mxu0
      %1892 = vmatprep.mubr.bf16.mxu0 0
      %1893 = vmatmul.mubr.bf16.gmra.mrb[0].mxu0 %v1098
      %v1894 = vpop.f32.mrb[0].mxu0
      %v1895 = vadd.f32 0.0, %v1894
      %v1896 = vpop.f32.mrb[0].mxu0
      %v1897 = vpop.f32.mrb[0].mxu0
      %v1898 = vadd.f32 0.0, %v1897
      %v1899 = vpop.f32.mrb[0].mxu0
      %1900 = vmatprep.mubr.bf16.mxu0 0
      %1901 = vmatmul.mubr.bf16.gmra.mrb[0].mxu0 %v1101
      %v1902 = vpop.f32.mrb[0].mxu0
      %v1903 = vadd.f32 0.0, %v1902
      %v1904 = vpop.f32.mrb[0].mxu0
      %v1905 = vpop.f32.mrb[0].mxu0
      %v1906 = vadd.f32 0.0, %v1905
      %v1907 = vpop.f32.mrb[0].mxu0
      %1908 = vmatprep.mubr.bf16.mxu0 0
      %1909 = vmatmul.mubr.bf16.gmra.mrb[0].mxu0 %v1104
      %v1910 = vpop.f32.mrb[0].mxu0
      %v1911 = vadd.f32 0.0, %v1910
      %v1912 = vpop.f32.mrb[0].mxu0
      %v1913 = vpop.f32.mrb[0].mxu0
      %v1914 = vadd.f32 0.0, %v1913
      %v1915 = vpop.f32.mrb[0].mxu0
      %1916 = vmatprep.mubr.bf16.mxu0 0
      %1917 = vmatmul.mubr.bf16.gmra.mrb[0].mxu0 %v1107
      %v1918 = vpop.f32.mrb[0].mxu0
      %v1919 = vadd.f32 0.0, %v1918
      %v1920 = vpop.f32.mrb[0].mxu0
      %v1921 = vpop.f32.mrb[0].mxu0
      %v1922 = vadd.f32 0.0, %v1921
      %v1923 = vpop.f32.mrb[0].mxu0
      %1924 = vmatprep.mubr.bf16.mxu0 0
      %1925 = vmatmul.mubr.bf16.gmra.mrb[0].mxu0 %v1110
      %v1926 = vpop.f32.mrb[0].mxu0
      %v1927 = vadd.f32 0.0, %v1926
      %v1928 = vpop.f32.mrb[0].mxu0
      %v1929 = vpop.f32.mrb[0].mxu0
      %v1930 = vadd.f32 0.0, %v1929
      %v1931 = vpop.f32.mrb[0].mxu0
      %1932 = vmatprep.mubr.bf16.mxu0 0
      %1933 = vmatmul.mubr.bf16.gmra.mrb[0].mxu0 %v1113
      %v1934 = vpop.f32.mrb[0].mxu0
      %v1935 = vadd.f32 0.0, %v1934
      %v1936 = vpop.f32.mrb[0].mxu0
      %v1937 = vpop.f32.mrb[0].mxu0
      %v1938 = vadd.f32 0.0, %v1937
      %v1939 = vpop.f32.mrb[0].mxu0
      %1940 = vmatprep.mubr.bf16.mxu0 0
      %1941 = vmatmul.mubr.bf16.gmra.mrb[0].mxu0 %v1116
      %v1942 = vpop.f32.mrb[0].mxu0
      %v1943 = vadd.f32 0.0, %v1942
      %v1944 = vpop.f32.mrb[0].mxu0
      %v1945 = vpop.f32.mrb[0].mxu0
      %v1946 = vadd.f32 0.0, %v1945
      %v1947 = vpop.f32.mrb[0].mxu0
      %1948 = vmatprep.mubr.bf16.mxu0 0
      %1949 = vmatmul.mubr.bf16.gmra.mrb[0].mxu0 %v1119
      %v1950 = vpop.f32.mrb[0].mxu0
      %v1951 = vadd.f32 0.0, %v1950
      %v1952 = vpop.f32.mrb[0].mxu0
      %v1953 = vpop.f32.mrb[0].mxu0
      %v1954 = vadd.f32 0.0, %v1953
      %v1955 = vpop.f32.mrb[0].mxu0
      %1956 = vdwg.mxu0
      %v1957 = vpack.c.bf16 %v1834, %v1831
      %v1958 = vpack.c.bf16 %v1842, %v1839
      %v1959 = vpack.c.bf16 %v1850, %v1847
      %v1960 = vpack.c.bf16 %v1858, %v1855
      %v1961 = vpack.c.bf16 %v1866, %v1863
      %v1962 = vpack.c.bf16 %v1874, %v1871
      %v1963 = vpack.c.bf16 %v1882, %v1879
      %v1964 = vpack.c.bf16 %v1890, %v1887
      %v1965 = vpack.c.bf16 %v1898, %v1895
      %v1966 = vpack.c.bf16 %v1906, %v1903
      %v1967 = vpack.c.bf16 %v1914, %v1911
      %v1968 = vpack.c.bf16 %v1922, %v1919
      %v1969 = vpack.c.bf16 %v1930, %v1927
      %v1970 = vpack.c.bf16 %v1938, %v1935
      %v1971 = vpack.c.bf16 %v1946, %v1943
      %v1972 = vpack.c.bf16 %v1954, %v1951
      %v1989 = vunpack.c.l.b16 %v1957
      %v1990 = vunpack.c.h.b16 %v1957
      %v1991 = vunpack.c.l.b16 %v1958
      %v1992 = vunpack.c.h.b16 %v1958
      %v1993 = vunpack.c.l.b16 %v1959
      %v1994 = vunpack.c.h.b16 %v1959
      %v1995 = vunpack.c.l.b16 %v1960
      %v1996 = vunpack.c.h.b16 %v1960
      %v1997 = vunpack.c.l.b16 %v1961
      %v1998 = vunpack.c.h.b16 %v1961
      %v1999 = vunpack.c.l.b16 %v1962
      %v2000 = vunpack.c.h.b16 %v1962
      %v2001 = vunpack.c.l.b16 %v1963
      %v2002 = vunpack.c.h.b16 %v1963
      %v2003 = vunpack.c.l.b16 %v1964
      %v2004 = vunpack.c.h.b16 %v1964
      %v2005 = vunpack.c.l.b16 %v1965
      %v2006 = vunpack.c.h.b16 %v1965
      %v2007 = vunpack.c.l.b16 %v1966
      %v2008 = vunpack.c.h.b16 %v1966
      %v2009 = vunpack.c.l.b16 %v1967
      %v2010 = vunpack.c.h.b16 %v1967
      %v2011 = vunpack.c.l.b16 %v1968
      %v2012 = vunpack.c.h.b16 %v1968
      %v2013 = vunpack.c.l.b16 %v1969
      %v2014 = vunpack.c.h.b16 %v1969
      %v2015 = vunpack.c.l.b16 %v1970
      %v2016 = vunpack.c.h.b16 %v1970
      %v2017 = vunpack.c.l.b16 %v1971
      %v2018 = vunpack.c.h.b16 %v1971
      %v2019 = vunpack.c.l.b16 %v1972
      %v2020 = vunpack.c.h.b16 %v1972
      %v2021 = vpack.c.b16 %v1989, %v1989
      %v2022 = vpack.c.b16 %v1990, %v1990
      %v2023 = vpack.c.b16 %v1991, %v1991
      %v2024 = vpack.c.b16 %v1992, %v1992
      %v2025 = vpack.c.b16 %v1993, %v1993
      %v2026 = vpack.c.b16 %v1994, %v1994
      %v2027 = vpack.c.b16 %v1995, %v1995
      %v2028 = vpack.c.b16 %v1996, %v1996
      %v2029 = vpack.c.b16 %v1997, %v1997
      %v2030 = vpack.c.b16 %v1998, %v1998
      %v2031 = vpack.c.b16 %v1999, %v1999
      %v2032 = vpack.c.b16 %v2000, %v2000
      %v2033 = vpack.c.b16 %v2001, %v2001
      %v2034 = vpack.c.b16 %v2002, %v2002
      %v2035 = vpack.c.b16 %v2003, %v2003
      %v2036 = vpack.c.b16 %v2004, %v2004
      %v2037 = vpack.c.b16 %v2005, %v2005
      %v2038 = vpack.c.b16 %v2006, %v2006
      %v2039 = vpack.c.b16 %v2007, %v2007
      %v2040 = vpack.c.b16 %v2008, %v2008
      %v2041 = vpack.c.b16 %v2009, %v2009
      %v2042 = vpack.c.b16 %v2010, %v2010
      %v2043 = vpack.c.b16 %v2011, %v2011
      %v2044 = vpack.c.b16 %v2012, %v2012
      %v2045 = vpack.c.b16 %v2013, %v2013
      %v2046 = vpack.c.b16 %v2014, %v2014
      %v2047 = vpack.c.b16 %v2015, %v2015
      %v2048 = vpack.c.b16 %v2016, %v2016
      %v2049 = vpack.c.b16 %v2017, %v2017
      %v2050 = vpack.c.b16 %v2018, %v2018
      %v2051 = vpack.c.b16 %v2019, %v2019
      %v2052 = vpack.c.b16 %v2020, %v2020
      %2085 = vst.msk [vmem:[%s384] sm:$0xf] %vm1410, %v2021
      %2086 = vst.msk [vmem:[%s384 + $0x4] sm:$0xf] %vm1410, %v2022
      %2087 = vst.msk [vmem:[%s384 + $0x8] sm:$0xf] %vm1410, %v2023
      %2088 = vst.msk [vmem:[%s384 + $0xc] sm:$0xf] %vm1410, %v2024
      %2089 = vst.msk [vmem:[%s384 + $0x10] sm:$0xf] %vm1410, %v2025
      %2090 = vst.msk [vmem:[%s384 + $0x14] sm:$0xf] %vm1410, %v2026
      %2091 = vst.msk [vmem:[%s384 + $0x18] sm:$0xf] %vm1410, %v2027
      %2092 = vst.msk [vmem:[%s384 + $0x1c] sm:$0xf] %vm1410, %v2028
      %2093 = vst.msk [vmem:[%s384 + $0x20] sm:$0xf] %vm1410, %v2029
      %2094 = vst.msk [vmem:[%s384 + $0x24] sm:$0xf] %vm1410, %v2030
      %2095 = vst.msk [vmem:[%s384 + $0x28] sm:$0xf] %vm1410, %v2031
      %2096 = vst.msk [vmem:[%s384 + $0x2c] sm:$0xf] %vm1410, %v2032
      %2097 = vst.msk [vmem:[%s384 + $0x30] sm:$0xf] %vm1410, %v2033
      %2098 = vst.msk [vmem:[%s384 + $0x34] sm:$0xf] %vm1410, %v2034
      %2099 = vst.msk [vmem:[%s384 + $0x38] sm:$0xf] %vm1410, %v2035
      %2100 = vst.msk [vmem:[%s384 + $0x3c] sm:$0xf] %vm1410, %v2036
      %2101 = vst.msk [vmem:[%s384 + $0x40] sm:$0xf] %vm1410, %v2037
      %2102 = vst.msk [vmem:[%s384 + $0x44] sm:$0xf] %vm1410, %v2038
      %2103 = vst.msk [vmem:[%s384 + $0x48] sm:$0xf] %vm1410, %v2039
      %2104 = vst.msk [vmem:[%s384 + $0x4c] sm:$0xf] %vm1410, %v2040
      %2105 = vst.msk [vmem:[%s384 + $0x50] sm:$0xf] %vm1410, %v2041
      %2106 = vst.msk [vmem:[%s384 + $0x54] sm:$0xf] %vm1410, %v2042
      %2107 = vst.msk [vmem:[%s384 + $0x58] sm:$0xf] %vm1410, %v2043
      %2108 = vst.msk [vmem:[%s384 + $0x5c] sm:$0xf] %vm1410, %v2044
      %2109 = vst.msk [vmem:[%s384 + $0x60] sm:$0xf] %vm1410, %v2045
      %2110 = vst.msk [vmem:[%s384 + $0x64] sm:$0xf] %vm1410, %v2046
      %2111 = vst.msk [vmem:[%s384 + $0x68] sm:$0xf] %vm1410, %v2047
      %2112 = vst.msk [vmem:[%s384 + $0x6c] sm:$0xf] %vm1410, %v2048
      %2113 = vst.msk [vmem:[%s384 + $0x70] sm:$0xf] %vm1410, %v2049
      %2114 = vst.msk [vmem:[%s384 + $0x74] sm:$0xf] %vm1410, %v2050
      %2115 = vst.msk [vmem:[%s384 + $0x78] sm:$0xf] %vm1410, %v2051
      %2116 = vst.msk [vmem:[%s384 + $0x7c] sm:$0xf] %vm1410, %v2052
      %s2117 = scalar_lea.vmem %s5, 16
      %v2118 = vld [vmem:[%s2117] sm:$0xf]
      %v2119 = vld [vmem:[%s2117 + $0x4] sm:$0xf]
      %v2120 = vld [vmem:[%s2117 + $0x8] sm:$0xf]
      %v2121 = vld [vmem:[%s2117 + $0xc] sm:$0xf]
      %v2126 = vunpack.c.l.b16 %v2118
      %v2127 = vunpack.c.l.b16 %v2119
      %v2128 = vunpack.c.l.b16 %v2120
      %v2129 = vunpack.c.l.b16 %v2121
      %v2130 = vpack.c.b16 %v2127, %v2126
      %v2131 = vpack.c.b16 %v2129, %v2128
      %2134 = vmatprep.subr.bf16.mxu0 0
      %2135 = vmatpush1.bf16.msra.mxu0 %v2130
      %2136 = vmatprep.subr.bf16.mxu0 0
      %2137 = vmatpush1.bf16.msra.mxu0 %v2131
      %2138 = vmatprep.subr.bf16.mxu0 0
      %2139 = vmatpush1.bf16.msra.mxu0 0
      %2140 = vmatprep.subr.bf16.mxu0 0
      %2141 = vmatpush1.bf16.msra.mxu0 0
      %2142 = vmatprep.subr.bf16.mxu0 0
      %2143 = vmatpush1.bf16.msra.mxu0 0
      %2144 = vmatprep.subr.bf16.mxu0 0
      %2145 = vmatpush1.bf16.msra.mxu0 0
      %2146 = vmatprep.subr.bf16.mxu0 0
      %2147 = vmatpush1.bf16.msra.mxu0 0
      %2148 = vmatprep.subr.bf16.mxu0 0
      %2149 = vmatpush1.bf16.msra.mxu0 0
      %2150 = vmatprep.subr.bf16.mxu0 0
      %2151 = vmatpush1.bf16.msra.mxu0 0
      %2152 = vmatprep.subr.bf16.mxu0 0
      %2153 = vmatpush1.bf16.msra.mxu0 0
      %2154 = vmatprep.subr.bf16.mxu0 0
      %2155 = vmatpush1.bf16.msra.mxu0 0
      %2156 = vmatprep.subr.bf16.mxu0 0
      %2157 = vmatpush1.bf16.msra.mxu0 0
      %2158 = vmatprep.subr.bf16.mxu0 0
      %2159 = vmatpush1.bf16.msra.mxu0 0
      %2160 = vmatprep.subr.bf16.mxu0 0
      %2161 = vmatpush1.bf16.msra.mxu0 0
      %2162 = vmatprep.subr.bf16.mxu0 0
      %2163 = vmatpush1.bf16.msra.mxu0 0
      %2164 = vmatprep.subr.bf16.mxu0 0
      %2165 = vmatpush1.bf16.msra.mxu0 0
      %2166 = vmatprep.mubr.bf16.mxu0 0
      %2167 = vmatmul.mubr.bf16.gmra.mrb[0].mxu0 %v1074
      %v2168 = vpop.f32.mrb[0].mxu0
      %v2169 = vadd.f32 0.0, %v2168
      %v2170 = vpop.f32.mrb[0].mxu0
      %v2171 = vpop.f32.mrb[0].mxu0
      %v2172 = vadd.f32 0.0, %v2171
      %v2173 = vpop.f32.mrb[0].mxu0
      %2174 = vmatprep.mubr.bf16.mxu0 0
      %2175 = vmatmul.mubr.bf16.gmra.mrb[0].mxu0 %v1077
      %v2176 = vpop.f32.mrb[0].mxu0
      %v2177 = vadd.f32 0.0, %v2176
      %v2178 = vpop.f32.mrb[0].mxu0
      %v2179 = vpop.f32.mrb[0].mxu0
      %v2180 = vadd.f32 0.0, %v2179
      %v2181 = vpop.f32.mrb[0].mxu0
      %2182 = vmatprep.mubr.bf16.mxu0 0
      %2183 = vmatmul.mubr.bf16.gmra.mrb[0].mxu0 %v1080
      %v2184 = vpop.f32.mrb[0].mxu0
      %v2185 = vadd.f32 0.0, %v2184
      %v2186 = vpop.f32.mrb[0].mxu0
      %v2187 = vpop.f32.mrb[0].mxu0
      %v2188 = vadd.f32 0.0, %v2187
      %v2189 = vpop.f32.mrb[0].mxu0
      %2190 = vmatprep.mubr.bf16.mxu0 0
      %2191 = vmatmul.mubr.bf16.gmra.mrb[0].mxu0 %v1083
      %v2192 = vpop.f32.mrb[0].mxu0
      %v2193 = vadd.f32 0.0, %v2192
      %v2194 = vpop.f32.mrb[0].mxu0
      %v2195 = vpop.f32.mrb[0].mxu0
      %v2196 = vadd.f32 0.0, %v2195
      %v2197 = vpop.f32.mrb[0].mxu0
      %2198 = vmatprep.mubr.bf16.mxu0 0
      %2199 = vmatmul.mubr.bf16.gmra.mrb[0].mxu0 %v1086
      %v2200 = vpop.f32.mrb[0].mxu0
      %v2201 = vadd.f32 0.0, %v2200
      %v2202 = vpop.f32.mrb[0].mxu0
      %v2203 = vpop.f32.mrb[0].mxu0
      %v2204 = vadd.f32 0.0, %v2203
      %v2205 = vpop.f32.mrb[0].mxu0
      %2206 = vmatprep.mubr.bf16.mxu0 0
      %2207 = vmatmul.mubr.bf16.gmra.mrb[0].mxu0 %v1089
      %v2208 = vpop.f32.mrb[0].mxu0
      %v2209 = vadd.f32 0.0, %v2208
      %v2210 = vpop.f32.mrb[0].mxu0
      %v2211 = vpop.f32.mrb[0].mxu0
      %v2212 = vadd.f32 0.0, %v2211
      %v2213 = vpop.f32.mrb[0].mxu0
      %2214 = vmatprep.mubr.bf16.mxu0 0
      %2215 = vmatmul.mubr.bf16.gmra.mrb[0].mxu0 %v1092
      %v2216 = vpop.f32.mrb[0].mxu0
      %v2217 = vadd.f32 0.0, %v2216
      %v2218 = vpop.f32.mrb[0].mxu0
      %v2219 = vpop.f32.mrb[0].mxu0
      %v2220 = vadd.f32 0.0, %v2219
      %v2221 = vpop.f32.mrb[0].mxu0
      %2222 = vmatprep.mubr.bf16.mxu0 0
      %2223 = vmatmul.mubr.bf16.gmra.mrb[0].mxu0 %v1095
      %v2224 = vpop.f32.mrb[0].mxu0
      %v2225 = vadd.f32 0.0, %v2224
      %v2226 = vpop.f32.mrb[0].mxu0
      %v2227 = vpop.f32.mrb[0].mxu0
      %v2228 = vadd.f32 0.0, %v2227
      %v2229 = vpop.f32.mrb[0].mxu0
      %2230 = vmatprep.mubr.bf16.mxu0 0
      %2231 = vmatmul.mubr.bf16.gmra.mrb[0].mxu0 %v1098
      %v2232 = vpop.f32.mrb[0].mxu0
      %v2233 = vadd.f32 0.0, %v2232
      %v2234 = vpop.f32.mrb[0].mxu0
      %v2235 = vpop.f32.mrb[0].mxu0
      %v2236 = vadd.f32 0.0, %v2235
      %v2237 = vpop.f32.mrb[0].mxu0
      %2238 = vmatprep.mubr.bf16.mxu0 0
      %2239 = vmatmul.mubr.bf16.gmra.mrb[0].mxu0 %v1101
      %v2240 = vpop.f32.mrb[0].mxu0
      %v2241 = vadd.f32 0.0, %v2240
      %v2242 = vpop.f32.mrb[0].mxu0
      %v2243 = vpop.f32.mrb[0].mxu0
      %v2244 = vadd.f32 0.0, %v2243
      %v2245 = vpop.f32.mrb[0].mxu0
      %2246 = vmatprep.mubr.bf16.mxu0 0
      %2247 = vmatmul.mubr.bf16.gmra.mrb[0].mxu0 %v1104
      %v2248 = vpop.f32.mrb[0].mxu0
      %v2249 = vadd.f32 0.0, %v2248
      %v2250 = vpop.f32.mrb[0].mxu0
      %v2251 = vpop.f32.mrb[0].mxu0
      %v2252 = vadd.f32 0.0, %v2251
      %v2253 = vpop.f32.mrb[0].mxu0
      %2254 = vmatprep.mubr.bf16.mxu0 0
      %2255 = vmatmul.mubr.bf16.gmra.mrb[0].mxu0 %v1107
      %v2256 = vpop.f32.mrb[0].mxu0
      %v2257 = vadd.f32 0.0, %v2256
      %v2258 = vpop.f32.mrb[0].mxu0
      %v2259 = vpop.f32.mrb[0].mxu0
      %v2260 = vadd.f32 0.0, %v2259
      %v2261 = vpop.f32.mrb[0].mxu0
      %2262 = vmatprep.mubr.bf16.mxu0 0
      %2263 = vmatmul.mubr.bf16.gmra.mrb[0].mxu0 %v1110
      %v2264 = vpop.f32.mrb[0].mxu0
      %v2265 = vadd.f32 0.0, %v2264
      %v2266 = vpop.f32.mrb[0].mxu0
      %v2267 = vpop.f32.mrb[0].mxu0
      %v2268 = vadd.f32 0.0, %v2267
      %v2269 = vpop.f32.mrb[0].mxu0
      %2270 = vmatprep.mubr.bf16.mxu0 0
      %2271 = vmatmul.mubr.bf16.gmra.mrb[0].mxu0 %v1113
      %v2272 = vpop.f32.mrb[0].mxu0
      %v2273 = vadd.f32 0.0, %v2272
      %v2274 = vpop.f32.mrb[0].mxu0
      %v2275 = vpop.f32.mrb[0].mxu0
      %v2276 = vadd.f32 0.0, %v2275
      %v2277 = vpop.f32.mrb[0].mxu0
      %2278 = vmatprep.mubr.bf16.mxu0 0
      %2279 = vmatmul.mubr.bf16.gmra.mrb[0].mxu0 %v1116
      %v2280 = vpop.f32.mrb[0].mxu0
      %v2281 = vadd.f32 0.0, %v2280
      %v2282 = vpop.f32.mrb[0].mxu0
      %v2283 = vpop.f32.mrb[0].mxu0
      %v2284 = vadd.f32 0.0, %v2283
      %v2285 = vpop.f32.mrb[0].mxu0
      %2286 = vmatprep.mubr.bf16.mxu0 0
      %2287 = vmatmul.mubr.bf16.gmra.mrb[0].mxu0 %v1119
      %v2288 = vpop.f32.mrb[0].mxu0
      %v2289 = vadd.f32 0.0, %v2288
      %v2290 = vpop.f32.mrb[0].mxu0
      %v2291 = vpop.f32.mrb[0].mxu0
      %v2292 = vadd.f32 0.0, %v2291
      %v2293 = vpop.f32.mrb[0].mxu0
      %2294 = vdwg.mxu0
      %v2295 = vpack.c.bf16 %v2172, %v2169
      %v2296 = vpack.c.bf16 %v2180, %v2177
      %v2297 = vpack.c.bf16 %v2188, %v2185
      %v2298 = vpack.c.bf16 %v2196, %v2193
      %v2299 = vpack.c.bf16 %v2204, %v2201
      %v2300 = vpack.c.bf16 %v2212, %v2209
      %v2301 = vpack.c.bf16 %v2220, %v2217
      %v2302 = vpack.c.bf16 %v2228, %v2225
      %v2303 = vpack.c.bf16 %v2236, %v2233
      %v2304 = vpack.c.bf16 %v2244, %v2241
      %v2305 = vpack.c.bf16 %v2252, %v2249
      %v2306 = vpack.c.bf16 %v2260, %v2257
      %v2307 = vpack.c.bf16 %v2268, %v2265
      %v2308 = vpack.c.bf16 %v2276, %v2273
      %v2309 = vpack.c.bf16 %v2284, %v2281
      %v2310 = vpack.c.bf16 %v2292, %v2289
      %v2327 = vunpack.c.l.b16 %v2295
      %v2328 = vunpack.c.h.b16 %v2295
      %v2329 = vunpack.c.l.b16 %v2296
      %v2330 = vunpack.c.h.b16 %v2296
      %v2331 = vunpack.c.l.b16 %v2297
      %v2332 = vunpack.c.h.b16 %v2297
      %v2333 = vunpack.c.l.b16 %v2298
      %v2334 = vunpack.c.h.b16 %v2298
      %v2335 = vunpack.c.l.b16 %v2299
      %v2336 = vunpack.c.h.b16 %v2299
      %v2337 = vunpack.c.l.b16 %v2300
      %v2338 = vunpack.c.h.b16 %v2300
      %v2339 = vunpack.c.l.b16 %v2301
      %v2340 = vunpack.c.h.b16 %v2301
      %v2341 = vunpack.c.l.b16 %v2302
      %v2342 = vunpack.c.h.b16 %v2302
      %v2343 = vunpack.c.l.b16 %v2303
      %v2344 = vunpack.c.h.b16 %v2303
      %v2345 = vunpack.c.l.b16 %v2304
      %v2346 = vunpack.c.h.b16 %v2304
      %v2347 = vunpack.c.l.b16 %v2305
      %v2348 = vunpack.c.h.b16 %v2305
      %v2349 = vunpack.c.l.b16 %v2306
      %v2350 = vunpack.c.h.b16 %v2306
      %v2351 = vunpack.c.l.b16 %v2307
      %v2352 = vunpack.c.h.b16 %v2307
      %v2353 = vunpack.c.l.b16 %v2308
      %v2354 = vunpack.c.h.b16 %v2308
      %v2355 = vunpack.c.l.b16 %v2309
      %v2356 = vunpack.c.h.b16 %v2309
      %v2357 = vunpack.c.l.b16 %v2310
      %v2358 = vunpack.c.h.b16 %v2310
      %v2359 = vpack.c.b16 %v2327, %v2327
      %v2360 = vpack.c.b16 %v2328, %v2328
      %v2361 = vpack.c.b16 %v2329, %v2329
      %v2362 = vpack.c.b16 %v2330, %v2330
      %v2363 = vpack.c.b16 %v2331, %v2331
      %v2364 = vpack.c.b16 %v2332, %v2332
      %v2365 = vpack.c.b16 %v2333, %v2333
      %v2366 = vpack.c.b16 %v2334, %v2334
      %v2367 = vpack.c.b16 %v2335, %v2335
      %v2368 = vpack.c.b16 %v2336, %v2336
      %v2369 = vpack.c.b16 %v2337, %v2337
      %v2370 = vpack.c.b16 %v2338, %v2338
      %v2371 = vpack.c.b16 %v2339, %v2339
      %v2372 = vpack.c.b16 %v2340, %v2340
      %v2373 = vpack.c.b16 %v2341, %v2341
      %v2374 = vpack.c.b16 %v2342, %v2342
      %v2375 = vpack.c.b16 %v2343, %v2343
      %v2376 = vpack.c.b16 %v2344, %v2344
      %v2377 = vpack.c.b16 %v2345, %v2345
      %v2378 = vpack.c.b16 %v2346, %v2346
      %v2379 = vpack.c.b16 %v2347, %v2347
      %v2380 = vpack.c.b16 %v2348, %v2348
      %v2381 = vpack.c.b16 %v2349, %v2349
      %v2382 = vpack.c.b16 %v2350, %v2350
      %v2383 = vpack.c.b16 %v2351, %v2351
      %v2384 = vpack.c.b16 %v2352, %v2352
      %v2385 = vpack.c.b16 %v2353, %v2353
      %v2386 = vpack.c.b16 %v2354, %v2354
      %v2387 = vpack.c.b16 %v2355, %v2355
      %v2388 = vpack.c.b16 %v2356, %v2356
      %v2389 = vpack.c.b16 %v2357, %v2357
      %v2390 = vpack.c.b16 %v2358, %v2358
      %s2423 = scalar_lea.vmem %s374, 128
      %2424 = vst.msk [vmem:[%s2423] sm:$0xf] %vm1410, %v2359
      %2425 = vst.msk [vmem:[%s2423 + $0x4] sm:$0xf] %vm1410, %v2360
      %2426 = vst.msk [vmem:[%s2423 + $0x8] sm:$0xf] %vm1410, %v2361
      %2427 = vst.msk [vmem:[%s2423 + $0xc] sm:$0xf] %vm1410, %v2362
      %2428 = vst.msk [vmem:[%s2423 + $0x10] sm:$0xf] %vm1410, %v2363
      %2429 = vst.msk [vmem:[%s2423 + $0x14] sm:$0xf] %vm1410, %v2364
      %2430 = vst.msk [vmem:[%s2423 + $0x18] sm:$0xf] %vm1410, %v2365
      %2431 = vst.msk [vmem:[%s2423 + $0x1c] sm:$0xf] %vm1410, %v2366
      %2432 = vst.msk [vmem:[%s2423 + $0x20] sm:$0xf] %vm1410, %v2367
      %2433 = vst.msk [vmem:[%s2423 + $0x24] sm:$0xf] %vm1410, %v2368
      %2434 = vst.msk [vmem:[%s2423 + $0x28] sm:$0xf] %vm1410, %v2369
      %2435 = vst.msk [vmem:[%s2423 + $0x2c] sm:$0xf] %vm1410, %v2370
      %2436 = vst.msk [vmem:[%s2423 + $0x30] sm:$0xf] %vm1410, %v2371
      %2437 = vst.msk [vmem:[%s2423 + $0x34] sm:$0xf] %vm1410, %v2372
      %2438 = vst.msk [vmem:[%s2423 + $0x38] sm:$0xf] %vm1410, %v2373
      %2439 = vst.msk [vmem:[%s2423 + $0x3c] sm:$0xf] %vm1410, %v2374
      %2440 = vst.msk [vmem:[%s2423 + $0x40] sm:$0xf] %vm1410, %v2375
      %2441 = vst.msk [vmem:[%s2423 + $0x44] sm:$0xf] %vm1410, %v2376
      %2442 = vst.msk [vmem:[%s2423 + $0x48] sm:$0xf] %vm1410, %v2377
      %2443 = vst.msk [vmem:[%s2423 + $0x4c] sm:$0xf] %vm1410, %v2378
      %2444 = vst.msk [vmem:[%s2423 + $0x50] sm:$0xf] %vm1410, %v2379
      %2445 = vst.msk [vmem:[%s2423 + $0x54] sm:$0xf] %vm1410, %v2380
      %2446 = vst.msk [vmem:[%s2423 + $0x58] sm:$0xf] %vm1410, %v2381
      %2447 = vst.msk [vmem:[%s2423 + $0x5c] sm:$0xf] %vm1410, %v2382
      %2448 = vst.msk [vmem:[%s2423 + $0x60] sm:$0xf] %vm1410, %v2383
      %2449 = vst.msk [vmem:[%s2423 + $0x64] sm:$0xf] %vm1410, %v2384
      %2450 = vst.msk [vmem:[%s2423 + $0x68] sm:$0xf] %vm1410, %v2385
      %2451 = vst.msk [vmem:[%s2423 + $0x6c] sm:$0xf] %vm1410, %v2386
      %2452 = vst.msk [vmem:[%s2423 + $0x70] sm:$0xf] %vm1410, %v2387
      %2453 = vst.msk [vmem:[%s2423 + $0x74] sm:$0xf] %vm1410, %v2388
      %2454 = vst.msk [vmem:[%s2423 + $0x78] sm:$0xf] %vm1410, %v2389
      %2455 = vst.msk [vmem:[%s2423 + $0x7c] sm:$0xf] %vm1410, %v2390
      %s2456 = scalar_lea.vmem %s6, 16
      %v2457 = vld [vmem:[%s2456] sm:$0xf]
      %v2458 = vld [vmem:[%s2456 + $0x4] sm:$0xf]
      %v2459 = vld [vmem:[%s2456 + $0x8] sm:$0xf]
      %v2460 = vld [vmem:[%s2456 + $0xc] sm:$0xf]
      %v2465 = vunpack.c.l.b16 %v2457
      %v2466 = vunpack.c.l.b16 %v2458
      %v2467 = vunpack.c.l.b16 %v2459
      %v2468 = vunpack.c.l.b16 %v2460
      %v2469 = vpack.c.b16 %v2466, %v2465
      %v2470 = vpack.c.b16 %v2468, %v2467
      %2473 = vmatprep.subr.bf16.mxu0 0
      %2474 = vmatpush1.bf16.msra.mxu0 %v2469
      %2475 = vmatprep.subr.bf16.mxu0 0
      %2476 = vmatpush1.bf16.msra.mxu0 %v2470
      %2477 = vmatprep.subr.bf16.mxu0 0
      %2478 = vmatpush1.bf16.msra.mxu0 0
      %2479 = vmatprep.subr.bf16.mxu0 0
      %2480 = vmatpush1.bf16.msra.mxu0 0
      %2481 = vmatprep.subr.bf16.mxu0 0
      %2482 = vmatpush1.bf16.msra.mxu0 0
      %2483 = vmatprep.subr.bf16.mxu0 0
      %2484 = vmatpush1.bf16.msra.mxu0 0
      %2485 = vmatprep.subr.bf16.mxu0 0
      %2486 = vmatpush1.bf16.msra.mxu0 0
      %2487 = vmatprep.subr.bf16.mxu0 0
      %2488 = vmatpush1.bf16.msra.mxu0 0
      %2489 = vmatprep.subr.bf16.mxu0 0
      %2490 = vmatpush1.bf16.msra.mxu0 0
      %2491 = vmatprep.subr.bf16.mxu0 0
      %2492 = vmatpush1.bf16.msra.mxu0 0
      %2493 = vmatprep.subr.bf16.mxu0 0
      %2494 = vmatpush1.bf16.msra.mxu0 0
      %2495 = vmatprep.subr.bf16.mxu0 0
      %2496 = vmatpush1.bf16.msra.mxu0 0
      %2497 = vmatprep.subr.bf16.mxu0 0
      %2498 = vmatpush1.bf16.msra.mxu0 0
      %2499 = vmatprep.subr.bf16.mxu0 0
      %2500 = vmatpush1.bf16.msra.mxu0 0
      %2501 = vmatprep.subr.bf16.mxu0 0
      %2502 = vmatpush1.bf16.msra.mxu0 0
      %2503 = vmatprep.subr.bf16.mxu0 0
      %2504 = vmatpush1.bf16.msra.mxu0 0
      %2505 = vmatprep.mubr.bf16.mxu0 0
      %2506 = vmatmul.mubr.bf16.gmra.mrb[0].mxu0 %v1074
      %v2507 = vpop.f32.mrb[0].mxu0
      %v2508 = vadd.f32 0.0, %v2507
      %v2509 = vpop.f32.mrb[0].mxu0
      %v2510 = vpop.f32.mrb[0].mxu0
      %v2511 = vadd.f32 0.0, %v2510
      %v2512 = vpop.f32.mrb[0].mxu0
      %2513 = vmatprep.mubr.bf16.mxu0 0
      %2514 = vmatmul.mubr.bf16.gmra.mrb[0].mxu0 %v1077
      %v2515 = vpop.f32.mrb[0].mxu0
      %v2516 = vadd.f32 0.0, %v2515
      %v2517 = vpop.f32.mrb[0].mxu0
      %v2518 = vpop.f32.mrb[0].mxu0
      %v2519 = vadd.f32 0.0, %v2518
      %v2520 = vpop.f32.mrb[0].mxu0
      %2521 = vmatprep.mubr.bf16.mxu0 0
      %2522 = vmatmul.mubr.bf16.gmra.mrb[0].mxu0 %v1080
      %v2523 = vpop.f32.mrb[0].mxu0
      %v2524 = vadd.f32 0.0, %v2523
      %v2525 = vpop.f32.mrb[0].mxu0
      %v2526 = vpop.f32.mrb[0].mxu0
      %v2527 = vadd.f32 0.0, %v2526
      %v2528 = vpop.f32.mrb[0].mxu0
      %2529 = vmatprep.mubr.bf16.mxu0 0
      %2530 = vmatmul.mubr.bf16.gmra.mrb[0].mxu0 %v1083
      %v2531 = vpop.f32.mrb[0].mxu0
      %v2532 = vadd.f32 0.0, %v2531
      %v2533 = vpop.f32.mrb[0].mxu0
      %v2534 = vpop.f32.mrb[0].mxu0
      %v2535 = vadd.f32 0.0, %v2534
      %v2536 = vpop.f32.mrb[0].mxu0
      %2537 = vmatprep.mubr.bf16.mxu0 0
      %2538 = vmatmul.mubr.bf16.gmra.mrb[0].mxu0 %v1086
      %v2539 = vpop.f32.mrb[0].mxu0
      %v2540 = vadd.f32 0.0, %v2539
      %v2541 = vpop.f32.mrb[0].mxu0
      %v2542 = vpop.f32.mrb[0].mxu0
      %v2543 = vadd.f32 0.0, %v2542
      %v2544 = vpop.f32.mrb[0].mxu0
      %2545 = vmatprep.mubr.bf16.mxu0 0
      %2546 = vmatmul.mubr.bf16.gmra.mrb[0].mxu0 %v1089
      %v2547 = vpop.f32.mrb[0].mxu0
      %v2548 = vadd.f32 0.0, %v2547
      %v2549 = vpop.f32.mrb[0].mxu0
      %v2550 = vpop.f32.mrb[0].mxu0
      %v2551 = vadd.f32 0.0, %v2550
      %v2552 = vpop.f32.mrb[0].mxu0
      %2553 = vmatprep.mubr.bf16.mxu0 0
      %2554 = vmatmul.mubr.bf16.gmra.mrb[0].mxu0 %v1092
      %v2555 = vpop.f32.mrb[0].mxu0
      %v2556 = vadd.f32 0.0, %v2555
      %v2557 = vpop.f32.mrb[0].mxu0
      %v2558 = vpop.f32.mrb[0].mxu0
      %v2559 = vadd.f32 0.0, %v2558
      %v2560 = vpop.f32.mrb[0].mxu0
      %2561 = vmatprep.mubr.bf16.mxu0 0
      %2562 = vmatmul.mubr.bf16.gmra.mrb[0].mxu0 %v1095
      %v2563 = vpop.f32.mrb[0].mxu0
      %v2564 = vadd.f32 0.0, %v2563
      %v2565 = vpop.f32.mrb[0].mxu0
      %v2566 = vpop.f32.mrb[0].mxu0
      %v2567 = vadd.f32 0.0, %v2566
      %v2568 = vpop.f32.mrb[0].mxu0
      %2569 = vmatprep.mubr.bf16.mxu0 0
      %2570 = vmatmul.mubr.bf16.gmra.mrb[0].mxu0 %v1098
      %v2571 = vpop.f32.mrb[0].mxu0
      %v2572 = vadd.f32 0.0, %v2571
      %v2573 = vpop.f32.mrb[0].mxu0
      %v2574 = vpop.f32.mrb[0].mxu0
      %v2575 = vadd.f32 0.0, %v2574
      %v2576 = vpop.f32.mrb[0].mxu0
      %2577 = vmatprep.mubr.bf16.mxu0 0
      %2578 = vmatmul.mubr.bf16.gmra.mrb[0].mxu0 %v1101
      %v2579 = vpop.f32.mrb[0].mxu0
      %v2580 = vadd.f32 0.0, %v2579
      %v2581 = vpop.f32.mrb[0].mxu0
      %v2582 = vpop.f32.mrb[0].mxu0
      %v2583 = vadd.f32 0.0, %v2582
      %v2584 = vpop.f32.mrb[0].mxu0
      %2585 = vmatprep.mubr.bf16.mxu0 0
      %2586 = vmatmul.mubr.bf16.gmra.mrb[0].mxu0 %v1104
      %v2587 = vpop.f32.mrb[0].mxu0
      %v2588 = vadd.f32 0.0, %v2587
      %v2589 = vpop.f32.mrb[0].mxu0
      %v2590 = vpop.f32.mrb[0].mxu0
      %v2591 = vadd.f32 0.0, %v2590
      %v2592 = vpop.f32.mrb[0].mxu0
      %2593 = vmatprep.mubr.bf16.mxu0 0
      %2594 = vmatmul.mubr.bf16.gmra.mrb[0].mxu0 %v1107
      %v2595 = vpop.f32.mrb[0].mxu0
      %v2596 = vadd.f32 0.0, %v2595
      %v2597 = vpop.f32.mrb[0].mxu0
      %v2598 = vpop.f32.mrb[0].mxu0
      %v2599 = vadd.f32 0.0, %v2598
      %v2600 = vpop.f32.mrb[0].mxu0
      %2601 = vmatprep.mubr.bf16.mxu0 0
      %2602 = vmatmul.mubr.bf16.gmra.mrb[0].mxu0 %v1110
      %v2603 = vpop.f32.mrb[0].mxu0
      %v2604 = vadd.f32 0.0, %v2603
      %v2605 = vpop.f32.mrb[0].mxu0
      %v2606 = vpop.f32.mrb[0].mxu0
      %v2607 = vadd.f32 0.0, %v2606
      %v2608 = vpop.f32.mrb[0].mxu0
      %2609 = vmatprep.mubr.bf16.mxu0 0
      %2610 = vmatmul.mubr.bf16.gmra.mrb[0].mxu0 %v1113
      %v2611 = vpop.f32.mrb[0].mxu0
      %v2612 = vadd.f32 0.0, %v2611
      %v2613 = vpop.f32.mrb[0].mxu0
      %v2614 = vpop.f32.mrb[0].mxu0
      %v2615 = vadd.f32 0.0, %v2614
      %v2616 = vpop.f32.mrb[0].mxu0
      %2617 = vmatprep.mubr.bf16.mxu0 0
      %2618 = vmatmul.mubr.bf16.gmra.mrb[0].mxu0 %v1116
      %v2619 = vpop.f32.mrb[0].mxu0
      %v2620 = vadd.f32 0.0, %v2619
      %v2621 = vpop.f32.mrb[0].mxu0
      %v2622 = vpop.f32.mrb[0].mxu0
      %v2623 = vadd.f32 0.0, %v2622
      %v2624 = vpop.f32.mrb[0].mxu0
      %2625 = vmatprep.mubr.bf16.mxu0 0
      %2626 = vmatmul.mubr.bf16.gmra.mrb[0].mxu0 %v1119
      %v2627 = vpop.f32.mrb[0].mxu0
      %v2628 = vadd.f32 0.0, %v2627
      %v2629 = vpop.f32.mrb[0].mxu0
      %v2630 = vpop.f32.mrb[0].mxu0
      %v2631 = vadd.f32 0.0, %v2630
      %v2632 = vpop.f32.mrb[0].mxu0
      %2633 = vdwg.mxu0
      %v2634 = vpack.c.bf16 %v2511, %v2508
      %v2635 = vpack.c.bf16 %v2519, %v2516
      %v2636 = vpack.c.bf16 %v2527, %v2524
      %v2637 = vpack.c.bf16 %v2535, %v2532
      %v2638 = vpack.c.bf16 %v2543, %v2540
      %v2639 = vpack.c.bf16 %v2551, %v2548
      %v2640 = vpack.c.bf16 %v2559, %v2556
      %v2641 = vpack.c.bf16 %v2567, %v2564
      %v2642 = vpack.c.bf16 %v2575, %v2572
      %v2643 = vpack.c.bf16 %v2583, %v2580
      %v2644 = vpack.c.bf16 %v2591, %v2588
      %v2645 = vpack.c.bf16 %v2599, %v2596
      %v2646 = vpack.c.bf16 %v2607, %v2604
      %v2647 = vpack.c.bf16 %v2615, %v2612
      %v2648 = vpack.c.bf16 %v2623, %v2620
      %v2649 = vpack.c.bf16 %v2631, %v2628
      %v2666 = vunpack.c.l.b16 %v2634
      %v2667 = vunpack.c.h.b16 %v2634
      %v2668 = vunpack.c.l.b16 %v2635
      %v2669 = vunpack.c.h.b16 %v2635
      %v2670 = vunpack.c.l.b16 %v2636
      %v2671 = vunpack.c.h.b16 %v2636
      %v2672 = vunpack.c.l.b16 %v2637
      %v2673 = vunpack.c.h.b16 %v2637
      %v2674 = vunpack.c.l.b16 %v2638
      %v2675 = vunpack.c.h.b16 %v2638
      %v2676 = vunpack.c.l.b16 %v2639
      %v2677 = vunpack.c.h.b16 %v2639
      %v2678 = vunpack.c.l.b16 %v2640
      %v2679 = vunpack.c.h.b16 %v2640
      %v2680 = vunpack.c.l.b16 %v2641
      %v2681 = vunpack.c.h.b16 %v2641
      %v2682 = vunpack.c.l.b16 %v2642
      %v2683 = vunpack.c.h.b16 %v2642
      %v2684 = vunpack.c.l.b16 %v2643
      %v2685 = vunpack.c.h.b16 %v2643
      %v2686 = vunpack.c.l.b16 %v2644
      %v2687 = vunpack.c.h.b16 %v2644
      %v2688 = vunpack.c.l.b16 %v2645
      %v2689 = vunpack.c.h.b16 %v2645
      %v2690 = vunpack.c.l.b16 %v2646
      %v2691 = vunpack.c.h.b16 %v2646
      %v2692 = vunpack.c.l.b16 %v2647
      %v2693 = vunpack.c.h.b16 %v2647
      %v2694 = vunpack.c.l.b16 %v2648
      %v2695 = vunpack.c.h.b16 %v2648
      %v2696 = vunpack.c.l.b16 %v2649
      %v2697 = vunpack.c.h.b16 %v2649
      %v2698 = vpack.c.b16 %v2666, %v2666
      %v2699 = vpack.c.b16 %v2667, %v2667
      %v2700 = vpack.c.b16 %v2668, %v2668
      %v2701 = vpack.c.b16 %v2669, %v2669
      %v2702 = vpack.c.b16 %v2670, %v2670
      %v2703 = vpack.c.b16 %v2671, %v2671
      %v2704 = vpack.c.b16 %v2672, %v2672
      %v2705 = vpack.c.b16 %v2673, %v2673
      %v2706 = vpack.c.b16 %v2674, %v2674
      %v2707 = vpack.c.b16 %v2675, %v2675
      %v2708 = vpack.c.b16 %v2676, %v2676
      %v2709 = vpack.c.b16 %v2677, %v2677
      %v2710 = vpack.c.b16 %v2678, %v2678
      %v2711 = vpack.c.b16 %v2679, %v2679
      %v2712 = vpack.c.b16 %v2680, %v2680
      %v2713 = vpack.c.b16 %v2681, %v2681
      %v2714 = vpack.c.b16 %v2682, %v2682
      %v2715 = vpack.c.b16 %v2683, %v2683
      %v2716 = vpack.c.b16 %v2684, %v2684
      %v2717 = vpack.c.b16 %v2685, %v2685
      %v2718 = vpack.c.b16 %v2686, %v2686
      %v2719 = vpack.c.b16 %v2687, %v2687
      %v2720 = vpack.c.b16 %v2688, %v2688
      %v2721 = vpack.c.b16 %v2689, %v2689
      %v2722 = vpack.c.b16 %v2690, %v2690
      %v2723 = vpack.c.b16 %v2691, %v2691
      %v2724 = vpack.c.b16 %v2692, %v2692
      %v2725 = vpack.c.b16 %v2693, %v2693
      %v2726 = vpack.c.b16 %v2694, %v2694
      %v2727 = vpack.c.b16 %v2695, %v2695
      %v2728 = vpack.c.b16 %v2696, %v2696
      %v2729 = vpack.c.b16 %v2697, %v2697
      %s2762 = scalar_lea.vmem %s379, 128
      %2763 = vst.msk [vmem:[%s2762] sm:$0xf] %vm1410, %v2698
      %2764 = vst.msk [vmem:[%s2762 + $0x4] sm:$0xf] %vm1410, %v2699
      %2765 = vst.msk [vmem:[%s2762 + $0x8] sm:$0xf] %vm1410, %v2700
      %2766 = vst.msk [vmem:[%s2762 + $0xc] sm:$0xf] %vm1410, %v2701
      %2767 = vst.msk [vmem:[%s2762 + $0x10] sm:$0xf] %vm1410, %v2702
      %2768 = vst.msk [vmem:[%s2762 + $0x14] sm:$0xf] %vm1410, %v2703
      %2769 = vst.msk [vmem:[%s2762 + $0x18] sm:$0xf] %vm1410, %v2704
      %2770 = vst.msk [vmem:[%s2762 + $0x1c] sm:$0xf] %vm1410, %v2705
      %2771 = vst.msk [vmem:[%s2762 + $0x20] sm:$0xf] %vm1410, %v2706
      %2772 = vst.msk [vmem:[%s2762 + $0x24] sm:$0xf] %vm1410, %v2707
      %2773 = vst.msk [vmem:[%s2762 + $0x28] sm:$0xf] %vm1410, %v2708
      %2774 = vst.msk [vmem:[%s2762 + $0x2c] sm:$0xf] %vm1410, %v2709
      %2775 = vst.msk [vmem:[%s2762 + $0x30] sm:$0xf] %vm1410, %v2710
      %2776 = vst.msk [vmem:[%s2762 + $0x34] sm:$0xf] %vm1410, %v2711
      %2777 = vst.msk [vmem:[%s2762 + $0x38] sm:$0xf] %vm1410, %v2712
      %2778 = vst.msk [vmem:[%s2762 + $0x3c] sm:$0xf] %vm1410, %v2713
      %2779 = vst.msk [vmem:[%s2762 + $0x40] sm:$0xf] %vm1410, %v2714
      %2780 = vst.msk [vmem:[%s2762 + $0x44] sm:$0xf] %vm1410, %v2715
      %2781 = vst.msk [vmem:[%s2762 + $0x48] sm:$0xf] %vm1410, %v2716
      %2782 = vst.msk [vmem:[%s2762 + $0x4c] sm:$0xf] %vm1410, %v2717
      %2783 = vst.msk [vmem:[%s2762 + $0x50] sm:$0xf] %vm1410, %v2718
      %2784 = vst.msk [vmem:[%s2762 + $0x54] sm:$0xf] %vm1410, %v2719
      %2785 = vst.msk [vmem:[%s2762 + $0x58] sm:$0xf] %vm1410, %v2720
      %2786 = vst.msk [vmem:[%s2762 + $0x5c] sm:$0xf] %vm1410, %v2721
      %2787 = vst.msk [vmem:[%s2762 + $0x60] sm:$0xf] %vm1410, %v2722
      %2788 = vst.msk [vmem:[%s2762 + $0x64] sm:$0xf] %vm1410, %v2723
      %2789 = vst.msk [vmem:[%s2762 + $0x68] sm:$0xf] %vm1410, %v2724
      %2790 = vst.msk [vmem:[%s2762 + $0x6c] sm:$0xf] %vm1410, %v2725
      %2791 = vst.msk [vmem:[%s2762 + $0x70] sm:$0xf] %vm1410, %v2726
      %2792 = vst.msk [vmem:[%s2762 + $0x74] sm:$0xf] %vm1410, %v2727
      %2793 = vst.msk [vmem:[%s2762 + $0x78] sm:$0xf] %vm1410, %v2728
      %2794 = vst.msk [vmem:[%s2762 + $0x7c] sm:$0xf] %vm1410, %v2729
      %s2795 = scalar_lea.vmem %s7, 16
      %v2796 = vld [vmem:[%s2795] sm:$0xf]
      %v2797 = vld [vmem:[%s2795 + $0x4] sm:$0xf]
      %v2798 = vld [vmem:[%s2795 + $0x8] sm:$0xf]
      %v2799 = vld [vmem:[%s2795 + $0xc] sm:$0xf]
      %v2804 = vunpack.c.l.b16 %v2796
      %v2805 = vunpack.c.l.b16 %v2797
      %v2806 = vunpack.c.l.b16 %v2798
      %v2807 = vunpack.c.l.b16 %v2799
      %v2808 = vpack.c.b16 %v2805, %v2804
      %v2809 = vpack.c.b16 %v2807, %v2806
      %2812 = vmatprep.subr.bf16.mxu0 0
      %2813 = vmatpush1.bf16.msra.mxu0 %v2808
      %2814 = vmatprep.subr.bf16.mxu0 0
      %2815 = vmatpush1.bf16.msra.mxu0 %v2809
      %2816 = vmatprep.subr.bf16.mxu0 0
      %2817 = vmatpush1.bf16.msra.mxu0 0
      %2818 = vmatprep.subr.bf16.mxu0 0
      %2819 = vmatpush1.bf16.msra.mxu0 0
      %2820 = vmatprep.subr.bf16.mxu0 0
      %2821 = vmatpush1.bf16.msra.mxu0 0
      %2822 = vmatprep.subr.bf16.mxu0 0
      %2823 = vmatpush1.bf16.msra.mxu0 0
      %2824 = vmatprep.subr.bf16.mxu0 0
      %2825 = vmatpush1.bf16.msra.mxu0 0
      %2826 = vmatprep.subr.bf16.mxu0 0
      %2827 = vmatpush1.bf16.msra.mxu0 0
      %2828 = vmatprep.subr.bf16.mxu0 0
      %2829 = vmatpush1.bf16.msra.mxu0 0
      %2830 = vmatprep.subr.bf16.mxu0 0
      %2831 = vmatpush1.bf16.msra.mxu0 0
      %2832 = vmatprep.subr.bf16.mxu0 0
      %2833 = vmatpush1.bf16.msra.mxu0 0
      %2834 = vmatprep.subr.bf16.mxu0 0
      %2835 = vmatpush1.bf16.msra.mxu0 0
      %2836 = vmatprep.subr.bf16.mxu0 0
      %2837 = vmatpush1.bf16.msra.mxu0 0
      %2838 = vmatprep.subr.bf16.mxu0 0
      %2839 = vmatpush1.bf16.msra.mxu0 0
      %2840 = vmatprep.subr.bf16.mxu0 0
      %2841 = vmatpush1.bf16.msra.mxu0 0
      %2842 = vmatprep.subr.bf16.mxu0 0
      %2843 = vmatpush1.bf16.msra.mxu0 0
      %2844 = vmatprep.mubr.bf16.mxu0 0
      %2845 = vmatmul.mubr.bf16.gmra.mrb[0].mxu0 %v1074
      %v2846 = vpop.f32.mrb[0].mxu0
      %v2847 = vadd.f32 0.0, %v2846
      %v2848 = vpop.f32.mrb[0].mxu0
      %v2849 = vpop.f32.mrb[0].mxu0
      %v2850 = vadd.f32 0.0, %v2849
      %v2851 = vpop.f32.mrb[0].mxu0
      %2852 = vmatprep.mubr.bf16.mxu0 0
      %2853 = vmatmul.mubr.bf16.gmra.mrb[0].mxu0 %v1077
      %v2854 = vpop.f32.mrb[0].mxu0
      %v2855 = vadd.f32 0.0, %v2854
      %v2856 = vpop.f32.mrb[0].mxu0
      %v2857 = vpop.f32.mrb[0].mxu0
      %v2858 = vadd.f32 0.0, %v2857
      %v2859 = vpop.f32.mrb[0].mxu0
      %2860 = vmatprep.mubr.bf16.mxu0 0
      %2861 = vmatmul.mubr.bf16.gmra.mrb[0].mxu0 %v1080
      %v2862 = vpop.f32.mrb[0].mxu0
      %v2863 = vadd.f32 0.0, %v2862
      %v2864 = vpop.f32.mrb[0].mxu0
      %v2865 = vpop.f32.mrb[0].mxu0
      %v2866 = vadd.f32 0.0, %v2865
      %v2867 = vpop.f32.mrb[0].mxu0
      %2868 = vmatprep.mubr.bf16.mxu0 0
      %2869 = vmatmul.mubr.bf16.gmra.mrb[0].mxu0 %v1083
      %v2870 = vpop.f32.mrb[0].mxu0
      %v2871 = vadd.f32 0.0, %v2870
      %v2872 = vpop.f32.mrb[0].mxu0
      %v2873 = vpop.f32.mrb[0].mxu0
      %v2874 = vadd.f32 0.0, %v2873
      %v2875 = vpop.f32.mrb[0].mxu0
      %2876 = vmatprep.mubr.bf16.mxu0 0
      %2877 = vmatmul.mubr.bf16.gmra.mrb[0].mxu0 %v1086
      %v2878 = vpop.f32.mrb[0].mxu0
      %v2879 = vadd.f32 0.0, %v2878
      %v2880 = vpop.f32.mrb[0].mxu0
      %v2881 = vpop.f32.mrb[0].mxu0
      %v2882 = vadd.f32 0.0, %v2881
      %v2883 = vpop.f32.mrb[0].mxu0
      %2884 = vmatprep.mubr.bf16.mxu0 0
      %2885 = vmatmul.mubr.bf16.gmra.mrb[0].mxu0 %v1089
      %v2886 = vpop.f32.mrb[0].mxu0
      %v2887 = vadd.f32 0.0, %v2886
      %v2888 = vpop.f32.mrb[0].mxu0
      %v2889 = vpop.f32.mrb[0].mxu0
      %v2890 = vadd.f32 0.0, %v2889
      %v2891 = vpop.f32.mrb[0].mxu0
      %2892 = vmatprep.mubr.bf16.mxu0 0
      %2893 = vmatmul.mubr.bf16.gmra.mrb[0].mxu0 %v1092
      %v2894 = vpop.f32.mrb[0].mxu0
      %v2895 = vadd.f32 0.0, %v2894
      %v2896 = vpop.f32.mrb[0].mxu0
      %v2897 = vpop.f32.mrb[0].mxu0
      %v2898 = vadd.f32 0.0, %v2897
      %v2899 = vpop.f32.mrb[0].mxu0
      %2900 = vmatprep.mubr.bf16.mxu0 0
      %2901 = vmatmul.mubr.bf16.gmra.mrb[0].mxu0 %v1095
      %v2902 = vpop.f32.mrb[0].mxu0
      %v2903 = vadd.f32 0.0, %v2902
      %v2904 = vpop.f32.mrb[0].mxu0
      %v2905 = vpop.f32.mrb[0].mxu0
      %v2906 = vadd.f32 0.0, %v2905
      %v2907 = vpop.f32.mrb[0].mxu0
      %2908 = vmatprep.mubr.bf16.mxu0 0
      %2909 = vmatmul.mubr.bf16.gmra.mrb[0].mxu0 %v1098
      %v2910 = vpop.f32.mrb[0].mxu0
      %v2911 = vadd.f32 0.0, %v2910
      %v2912 = vpop.f32.mrb[0].mxu0
      %v2913 = vpop.f32.mrb[0].mxu0
      %v2914 = vadd.f32 0.0, %v2913
      %v2915 = vpop.f32.mrb[0].mxu0
      %2916 = vmatprep.mubr.bf16.mxu0 0
      %2917 = vmatmul.mubr.bf16.gmra.mrb[0].mxu0 %v1101
      %v2918 = vpop.f32.mrb[0].mxu0
      %v2919 = vadd.f32 0.0, %v2918
      %v2920 = vpop.f32.mrb[0].mxu0
      %v2921 = vpop.f32.mrb[0].mxu0
      %v2922 = vadd.f32 0.0, %v2921
      %v2923 = vpop.f32.mrb[0].mxu0
      %2924 = vmatprep.mubr.bf16.mxu0 0
      %2925 = vmatmul.mubr.bf16.gmra.mrb[0].mxu0 %v1104
      %v2926 = vpop.f32.mrb[0].mxu0
      %v2927 = vadd.f32 0.0, %v2926
      %v2928 = vpop.f32.mrb[0].mxu0
      %v2929 = vpop.f32.mrb[0].mxu0
      %v2930 = vadd.f32 0.0, %v2929
      %v2931 = vpop.f32.mrb[0].mxu0
      %2932 = vmatprep.mubr.bf16.mxu0 0
      %2933 = vmatmul.mubr.bf16.gmra.mrb[0].mxu0 %v1107
      %v2934 = vpop.f32.mrb[0].mxu0
      %v2935 = vadd.f32 0.0, %v2934
      %v2936 = vpop.f32.mrb[0].mxu0
      %v2937 = vpop.f32.mrb[0].mxu0
      %v2938 = vadd.f32 0.0, %v2937
      %v2939 = vpop.f32.mrb[0].mxu0
      %2940 = vmatprep.mubr.bf16.mxu0 0
      %2941 = vmatmul.mubr.bf16.gmra.mrb[0].mxu0 %v1110
      %v2942 = vpop.f32.mrb[0].mxu0
      %v2943 = vadd.f32 0.0, %v2942
      %v2944 = vpop.f32.mrb[0].mxu0
      %v2945 = vpop.f32.mrb[0].mxu0
      %v2946 = vadd.f32 0.0, %v2945
      %v2947 = vpop.f32.mrb[0].mxu0
      %2948 = vmatprep.mubr.bf16.mxu0 0
      %2949 = vmatmul.mubr.bf16.gmra.mrb[0].mxu0 %v1113
      %v2950 = vpop.f32.mrb[0].mxu0
      %v2951 = vadd.f32 0.0, %v2950
      %v2952 = vpop.f32.mrb[0].mxu0
      %v2953 = vpop.f32.mrb[0].mxu0
      %v2954 = vadd.f32 0.0, %v2953
      %v2955 = vpop.f32.mrb[0].mxu0
      %2956 = vmatprep.mubr.bf16.mxu0 0
      %2957 = vmatmul.mubr.bf16.gmra.mrb[0].mxu0 %v1116
      %v2958 = vpop.f32.mrb[0].mxu0
      %v2959 = vadd.f32 0.0, %v2958
      %v2960 = vpop.f32.mrb[0].mxu0
      %v2961 = vpop.f32.mrb[0].mxu0
      %v2962 = vadd.f32 0.0, %v2961
      %v2963 = vpop.f32.mrb[0].mxu0
      %2964 = vmatprep.mubr.bf16.mxu0 0
      %2965 = vmatmul.mubr.bf16.gmra.mrb[0].mxu0 %v1119
      %v2966 = vpop.f32.mrb[0].mxu0
      %v2967 = vadd.f32 0.0, %v2966
      %v2968 = vpop.f32.mrb[0].mxu0
      %v2969 = vpop.f32.mrb[0].mxu0
      %v2970 = vadd.f32 0.0, %v2969
      %v2971 = vpop.f32.mrb[0].mxu0
      %2972 = vdwg.mxu0
      %v2973 = vpack.c.bf16 %v2850, %v2847
      %v2974 = vpack.c.bf16 %v2858, %v2855
      %v2975 = vpack.c.bf16 %v2866, %v2863
      %v2976 = vpack.c.bf16 %v2874, %v2871
      %v2977 = vpack.c.bf16 %v2882, %v2879
      %v2978 = vpack.c.bf16 %v2890, %v2887
      %v2979 = vpack.c.bf16 %v2898, %v2895
      %v2980 = vpack.c.bf16 %v2906, %v2903
      %v2981 = vpack.c.bf16 %v2914, %v2911
      %v2982 = vpack.c.bf16 %v2922, %v2919
      %v2983 = vpack.c.bf16 %v2930, %v2927
      %v2984 = vpack.c.bf16 %v2938, %v2935
      %v2985 = vpack.c.bf16 %v2946, %v2943
      %v2986 = vpack.c.bf16 %v2954, %v2951
      %v2987 = vpack.c.bf16 %v2962, %v2959
      %v2988 = vpack.c.bf16 %v2970, %v2967
      %v3005 = vunpack.c.l.b16 %v2973
      %v3006 = vunpack.c.h.b16 %v2973
      %v3007 = vunpack.c.l.b16 %v2974
      %v3008 = vunpack.c.h.b16 %v2974
      %v3009 = vunpack.c.l.b16 %v2975
      %v3010 = vunpack.c.h.b16 %v2975
      %v3011 = vunpack.c.l.b16 %v2976
      %v3012 = vunpack.c.h.b16 %v2976
      %v3013 = vunpack.c.l.b16 %v2977
      %v3014 = vunpack.c.h.b16 %v2977
      %v3015 = vunpack.c.l.b16 %v2978
      %v3016 = vunpack.c.h.b16 %v2978
      %v3017 = vunpack.c.l.b16 %v2979
      %v3018 = vunpack.c.h.b16 %v2979
      %v3019 = vunpack.c.l.b16 %v2980
      %v3020 = vunpack.c.h.b16 %v2980
      %v3021 = vunpack.c.l.b16 %v2981
      %v3022 = vunpack.c.h.b16 %v2981
      %v3023 = vunpack.c.l.b16 %v2982
      %v3024 = vunpack.c.h.b16 %v2982
      %v3025 = vunpack.c.l.b16 %v2983
      %v3026 = vunpack.c.h.b16 %v2983
      %v3027 = vunpack.c.l.b16 %v2984
      %v3028 = vunpack.c.h.b16 %v2984
      %v3029 = vunpack.c.l.b16 %v2985
      %v3030 = vunpack.c.h.b16 %v2985
      %v3031 = vunpack.c.l.b16 %v2986
      %v3032 = vunpack.c.h.b16 %v2986
      %v3033 = vunpack.c.l.b16 %v2987
      %v3034 = vunpack.c.h.b16 %v2987
      %v3035 = vunpack.c.l.b16 %v2988
      %v3036 = vunpack.c.h.b16 %v2988
      %v3037 = vpack.c.b16 %v3005, %v3005
      %v3038 = vpack.c.b16 %v3006, %v3006
      %v3039 = vpack.c.b16 %v3007, %v3007
      %v3040 = vpack.c.b16 %v3008, %v3008
      %v3041 = vpack.c.b16 %v3009, %v3009
      %v3042 = vpack.c.b16 %v3010, %v3010
      %v3043 = vpack.c.b16 %v3011, %v3011
      %v3044 = vpack.c.b16 %v3012, %v3012
      %v3045 = vpack.c.b16 %v3013, %v3013
      %v3046 = vpack.c.b16 %v3014, %v3014
      %v3047 = vpack.c.b16 %v3015, %v3015
      %v3048 = vpack.c.b16 %v3016, %v3016
      %v3049 = vpack.c.b16 %v3017, %v3017
      %v3050 = vpack.c.b16 %v3018, %v3018
      %v3051 = vpack.c.b16 %v3019, %v3019
      %v3052 = vpack.c.b16 %v3020, %v3020
      %v3053 = vpack.c.b16 %v3021, %v3021
      %v3054 = vpack.c.b16 %v3022, %v3022
      %v3055 = vpack.c.b16 %v3023, %v3023
      %v3056 = vpack.c.b16 %v3024, %v3024
      %v3057 = vpack.c.b16 %v3025, %v3025
      %v3058 = vpack.c.b16 %v3026, %v3026
      %v3059 = vpack.c.b16 %v3027, %v3027
      %v3060 = vpack.c.b16 %v3028, %v3028
      %v3061 = vpack.c.b16 %v3029, %v3029
      %v3062 = vpack.c.b16 %v3030, %v3030
      %v3063 = vpack.c.b16 %v3031, %v3031
      %v3064 = vpack.c.b16 %v3032, %v3032
      %v3065 = vpack.c.b16 %v3033, %v3033
      %v3066 = vpack.c.b16 %v3034, %v3034
      %v3067 = vpack.c.b16 %v3035, %v3035
      %v3068 = vpack.c.b16 %v3036, %v3036
      %s3101 = scalar_lea.vmem %s384, 128
      %3102 = vst.msk [vmem:[%s3101] sm:$0xf] %vm1410, %v3037
      %3103 = vst.msk [vmem:[%s3101 + $0x4] sm:$0xf] %vm1410, %v3038
      %3104 = vst.msk [vmem:[%s3101 + $0x8] sm:$0xf] %vm1410, %v3039
      %3105 = vst.msk [vmem:[%s3101 + $0xc] sm:$0xf] %vm1410, %v3040
      %3106 = vst.msk [vmem:[%s3101 + $0x10] sm:$0xf] %vm1410, %v3041
      %3107 = vst.msk [vmem:[%s3101 + $0x14] sm:$0xf] %vm1410, %v3042
      %3108 = vst.msk [vmem:[%s3101 + $0x18] sm:$0xf] %vm1410, %v3043
      %3109 = vst.msk [vmem:[%s3101 + $0x1c] sm:$0xf] %vm1410, %v3044
      %3110 = vst.msk [vmem:[%s3101 + $0x20] sm:$0xf] %vm1410, %v3045
      %3111 = vst.msk [vmem:[%s3101 + $0x24] sm:$0xf] %vm1410, %v3046
      %3112 = vst.msk [vmem:[%s3101 + $0x28] sm:$0xf] %vm1410, %v3047
      %3113 = vst.msk [vmem:[%s3101 + $0x2c] sm:$0xf] %vm1410, %v3048
      %3114 = vst.msk [vmem:[%s3101 + $0x30] sm:$0xf] %vm1410, %v3049
      %3115 = vst.msk [vmem:[%s3101 + $0x34] sm:$0xf] %vm1410, %v3050
      %3116 = vst.msk [vmem:[%s3101 + $0x38] sm:$0xf] %vm1410, %v3051
      %3117 = vst.msk [vmem:[%s3101 + $0x3c] sm:$0xf] %vm1410, %v3052
      %3118 = vst.msk [vmem:[%s3101 + $0x40] sm:$0xf] %vm1410, %v3053
      %3119 = vst.msk [vmem:[%s3101 + $0x44] sm:$0xf] %vm1410, %v3054
      %3120 = vst.msk [vmem:[%s3101 + $0x48] sm:$0xf] %vm1410, %v3055
      %3121 = vst.msk [vmem:[%s3101 + $0x4c] sm:$0xf] %vm1410, %v3056
      %3122 = vst.msk [vmem:[%s3101 + $0x50] sm:$0xf] %vm1410, %v3057
      %3123 = vst.msk [vmem:[%s3101 + $0x54] sm:$0xf] %vm1410, %v3058
      %3124 = vst.msk [vmem:[%s3101 + $0x58] sm:$0xf] %vm1410, %v3059
      %3125 = vst.msk [vmem:[%s3101 + $0x5c] sm:$0xf] %vm1410, %v3060
      %3126 = vst.msk [vmem:[%s3101 + $0x60] sm:$0xf] %vm1410, %v3061
      %3127 = vst.msk [vmem:[%s3101 + $0x64] sm:$0xf] %vm1410, %v3062
      %3128 = vst.msk [vmem:[%s3101 + $0x68] sm:$0xf] %vm1410, %v3063
      %3129 = vst.msk [vmem:[%s3101 + $0x6c] sm:$0xf] %vm1410, %v3064
      %3130 = vst.msk [vmem:[%s3101 + $0x70] sm:$0xf] %vm1410, %v3065
      %3131 = vst.msk [vmem:[%s3101 + $0x74] sm:$0xf] %vm1410, %v3066
      %3132 = vst.msk [vmem:[%s3101 + $0x78] sm:$0xf] %vm1410, %v3067
      %3133 = vst.msk [vmem:[%s3101 + $0x7c] sm:$0xf] %vm1410, %v3068
      %s3134 = scalar_lea.vmem %s5, 32
      %v3135 = vld [vmem:[%s3134] sm:$0xf]
      %v3136 = vld [vmem:[%s3134 + $0x4] sm:$0xf]
      %v3137 = vld [vmem:[%s3134 + $0x8] sm:$0xf]
      %v3138 = vld [vmem:[%s3134 + $0xc] sm:$0xf]
      %v3143 = vunpack.c.l.b16 %v3135
      %v3144 = vunpack.c.l.b16 %v3136
      %v3145 = vunpack.c.l.b16 %v3137
      %v3146 = vunpack.c.l.b16 %v3138
      %v3147 = vpack.c.b16 %v3144, %v3143
      %v3148 = vpack.c.b16 %v3146, %v3145
      %3151 = vmatprep.subr.bf16.mxu0 0
      %3152 = vmatpush1.bf16.msra.mxu0 %v3147
      %3153 = vmatprep.subr.bf16.mxu0 0
      %3154 = vmatpush1.bf16.msra.mxu0 %v3148
      %3155 = vmatprep.subr.bf16.mxu0 0
      %3156 = vmatpush1.bf16.msra.mxu0 0
      %3157 = vmatprep.subr.bf16.mxu0 0
      %3158 = vmatpush1.bf16.msra.mxu0 0
      %3159 = vmatprep.subr.bf16.mxu0 0
      %3160 = vmatpush1.bf16.msra.mxu0 0
      %3161 = vmatprep.subr.bf16.mxu0 0
      %3162 = vmatpush1.bf16.msra.mxu0 0
      %3163 = vmatprep.subr.bf16.mxu0 0
      %3164 = vmatpush1.bf16.msra.mxu0 0
      %3165 = vmatprep.subr.bf16.mxu0 0
      %3166 = vmatpush1.bf16.msra.mxu0 0
      %3167 = vmatprep.subr.bf16.mxu0 0
      %3168 = vmatpush1.bf16.msra.mxu0 0
      %3169 = vmatprep.subr.bf16.mxu0 0
      %3170 = vmatpush1.bf16.msra.mxu0 0
      %3171 = vmatprep.subr.bf16.mxu0 0
      %3172 = vmatpush1.bf16.msra.mxu0 0
      %3173 = vmatprep.subr.bf16.mxu0 0
      %3174 = vmatpush1.bf16.msra.mxu0 0
      %3175 = vmatprep.subr.bf16.mxu0 0
      %3176 = vmatpush1.bf16.msra.mxu0 0
      %3177 = vmatprep.subr.bf16.mxu0 0
      %3178 = vmatpush1.bf16.msra.mxu0 0
      %3179 = vmatprep.subr.bf16.mxu0 0
      %3180 = vmatpush1.bf16.msra.mxu0 0
      %3181 = vmatprep.subr.bf16.mxu0 0
      %3182 = vmatpush1.bf16.msra.mxu0 0
      %3183 = vmatprep.mubr.bf16.mxu0 0
      %3184 = vmatmul.mubr.bf16.gmra.mrb[0].mxu0 %v1074
      %v3185 = vpop.f32.mrb[0].mxu0
      %v3186 = vadd.f32 0.0, %v3185
      %v3187 = vpop.f32.mrb[0].mxu0
      %v3188 = vpop.f32.mrb[0].mxu0
      %v3189 = vadd.f32 0.0, %v3188
      %v3190 = vpop.f32.mrb[0].mxu0
      %3191 = vmatprep.mubr.bf16.mxu0 0
      %3192 = vmatmul.mubr.bf16.gmra.mrb[0].mxu0 %v1077
      %v3193 = vpop.f32.mrb[0].mxu0
      %v3194 = vadd.f32 0.0, %v3193
      %v3195 = vpop.f32.mrb[0].mxu0
      %v3196 = vpop.f32.mrb[0].mxu0
      %v3197 = vadd.f32 0.0, %v3196
      %v3198 = vpop.f32.mrb[0].mxu0
      %3199 = vmatprep.mubr.bf16.mxu0 0
      %3200 = vmatmul.mubr.bf16.gmra.mrb[0].mxu0 %v1080
      %v3201 = vpop.f32.mrb[0].mxu0
      %v3202 = vadd.f32 0.0, %v3201
      %v3203 = vpop.f32.mrb[0].mxu0
      %v3204 = vpop.f32.mrb[0].mxu0
      %v3205 = vadd.f32 0.0, %v3204
      %v3206 = vpop.f32.mrb[0].mxu0
      %3207 = vmatprep.mubr.bf16.mxu0 0
      %3208 = vmatmul.mubr.bf16.gmra.mrb[0].mxu0 %v1083
      %v3209 = vpop.f32.mrb[0].mxu0
      %v3210 = vadd.f32 0.0, %v3209
      %v3211 = vpop.f32.mrb[0].mxu0
      %v3212 = vpop.f32.mrb[0].mxu0
      %v3213 = vadd.f32 0.0, %v3212
      %v3214 = vpop.f32.mrb[0].mxu0
      %3215 = vmatprep.mubr.bf16.mxu0 0
      %3216 = vmatmul.mubr.bf16.gmra.mrb[0].mxu0 %v1086
      %v3217 = vpop.f32.mrb[0].mxu0
      %v3218 = vadd.f32 0.0, %v3217
      %v3219 = vpop.f32.mrb[0].mxu0
      %v3220 = vpop.f32.mrb[0].mxu0
      %v3221 = vadd.f32 0.0, %v3220
      %v3222 = vpop.f32.mrb[0].mxu0
      %3223 = vmatprep.mubr.bf16.mxu0 0
      %3224 = vmatmul.mubr.bf16.gmra.mrb[0].mxu0 %v1089
      %v3225 = vpop.f32.mrb[0].mxu0
      %v3226 = vadd.f32 0.0, %v3225
      %v3227 = vpop.f32.mrb[0].mxu0
      %v3228 = vpop.f32.mrb[0].mxu0
      %v3229 = vadd.f32 0.0, %v3228
      %v3230 = vpop.f32.mrb[0].mxu0
      %3231 = vmatprep.mubr.bf16.mxu0 0
      %3232 = vmatmul.mubr.bf16.gmra.mrb[0].mxu0 %v1092
      %v3233 = vpop.f32.mrb[0].mxu0
      %v3234 = vadd.f32 0.0, %v3233
      %v3235 = vpop.f32.mrb[0].mxu0
      %v3236 = vpop.f32.mrb[0].mxu0
      %v3237 = vadd.f32 0.0, %v3236
      %v3238 = vpop.f32.mrb[0].mxu0
      %3239 = vmatprep.mubr.bf16.mxu0 0
      %3240 = vmatmul.mubr.bf16.gmra.mrb[0].mxu0 %v1095
      %v3241 = vpop.f32.mrb[0].mxu0
      %v3242 = vadd.f32 0.0, %v3241
      %v3243 = vpop.f32.mrb[0].mxu0
      %v3244 = vpop.f32.mrb[0].mxu0
      %v3245 = vadd.f32 0.0, %v3244
      %v3246 = vpop.f32.mrb[0].mxu0
      %3247 = vmatprep.mubr.bf16.mxu0 0
      %3248 = vmatmul.mubr.bf16.gmra.mrb[0].mxu0 %v1098
      %v3249 = vpop.f32.mrb[0].mxu0
      %v3250 = vadd.f32 0.0, %v3249
      %v3251 = vpop.f32.mrb[0].mxu0
      %v3252 = vpop.f32.mrb[0].mxu0
      %v3253 = vadd.f32 0.0, %v3252
      %v3254 = vpop.f32.mrb[0].mxu0
      %3255 = vmatprep.mubr.bf16.mxu0 0
      %3256 = vmatmul.mubr.bf16.gmra.mrb[0].mxu0 %v1101
      %v3257 = vpop.f32.mrb[0].mxu0
      %v3258 = vadd.f32 0.0, %v3257
      %v3259 = vpop.f32.mrb[0].mxu0
      %v3260 = vpop.f32.mrb[0].mxu0
      %v3261 = vadd.f32 0.0, %v3260
      %v3262 = vpop.f32.mrb[0].mxu0
      %3263 = vmatprep.mubr.bf16.mxu0 0
      %3264 = vmatmul.mubr.bf16.gmra.mrb[0].mxu0 %v1104
      %v3265 = vpop.f32.mrb[0].mxu0
      %v3266 = vadd.f32 0.0, %v3265
      %v3267 = vpop.f32.mrb[0].mxu0
      %v3268 = vpop.f32.mrb[0].mxu0
      %v3269 = vadd.f32 0.0, %v3268
      %v3270 = vpop.f32.mrb[0].mxu0
      %3271 = vmatprep.mubr.bf16.mxu0 0
      %3272 = vmatmul.mubr.bf16.gmra.mrb[0].mxu0 %v1107
      %v3273 = vpop.f32.mrb[0].mxu0
      %v3274 = vadd.f32 0.0, %v3273
      %v3275 = vpop.f32.mrb[0].mxu0
      %v3276 = vpop.f32.mrb[0].mxu0
      %v3277 = vadd.f32 0.0, %v3276
      %v3278 = vpop.f32.mrb[0].mxu0
      %3279 = vmatprep.mubr.bf16.mxu0 0
      %3280 = vmatmul.mubr.bf16.gmra.mrb[0].mxu0 %v1110
      %v3281 = vpop.f32.mrb[0].mxu0
      %v3282 = vadd.f32 0.0, %v3281
      %v3283 = vpop.f32.mrb[0].mxu0
      %v3284 = vpop.f32.mrb[0].mxu0
      %v3285 = vadd.f32 0.0, %v3284
      %v3286 = vpop.f32.mrb[0].mxu0
      %3287 = vmatprep.mubr.bf16.mxu0 0
      %3288 = vmatmul.mubr.bf16.gmra.mrb[0].mxu0 %v1113
      %v3289 = vpop.f32.mrb[0].mxu0
      %v3290 = vadd.f32 0.0, %v3289
      %v3291 = vpop.f32.mrb[0].mxu0
      %v3292 = vpop.f32.mrb[0].mxu0
      %v3293 = vadd.f32 0.0, %v3292
      %v3294 = vpop.f32.mrb[0].mxu0
      %3295 = vmatprep.mubr.bf16.mxu0 0
      %3296 = vmatmul.mubr.bf16.gmra.mrb[0].mxu0 %v1116
      %v3297 = vpop.f32.mrb[0].mxu0
      %v3298 = vadd.f32 0.0, %v3297
      %v3299 = vpop.f32.mrb[0].mxu0
      %v3300 = vpop.f32.mrb[0].mxu0
      %v3301 = vadd.f32 0.0, %v3300
      %v3302 = vpop.f32.mrb[0].mxu0
      %3303 = vmatprep.mubr.bf16.mxu0 0
      %3304 = vmatmul.mubr.bf16.gmra.mrb[0].mxu0 %v1119
      %v3305 = vpop.f32.mrb[0].mxu0
      %v3306 = vadd.f32 0.0, %v3305
      %v3307 = vpop.f32.mrb[0].mxu0
      %v3308 = vpop.f32.mrb[0].mxu0
      %v3309 = vadd.f32 0.0, %v3308
      %v3310 = vpop.f32.mrb[0].mxu0
      %3311 = vdwg.mxu0
      %v3312 = vpack.c.bf16 %v3189, %v3186
      %v3313 = vpack.c.bf16 %v3197, %v3194
      %v3314 = vpack.c.bf16 %v3205, %v3202
      %v3315 = vpack.c.bf16 %v3213, %v3210
      %v3316 = vpack.c.bf16 %v3221, %v3218
      %v3317 = vpack.c.bf16 %v3229, %v3226
      %v3318 = vpack.c.bf16 %v3237, %v3234
      %v3319 = vpack.c.bf16 %v3245, %v3242
      %v3320 = vpack.c.bf16 %v3253, %v3250
      %v3321 = vpack.c.bf16 %v3261, %v3258
      %v3322 = vpack.c.bf16 %v3269, %v3266
      %v3323 = vpack.c.bf16 %v3277, %v3274
      %v3324 = vpack.c.bf16 %v3285, %v3282
      %v3325 = vpack.c.bf16 %v3293, %v3290
      %v3326 = vpack.c.bf16 %v3301, %v3298
      %v3327 = vpack.c.bf16 %v3309, %v3306
      %v3344 = vunpack.c.l.b16 %v3312
      %v3345 = vunpack.c.h.b16 %v3312
      %v3346 = vunpack.c.l.b16 %v3313
      %v3347 = vunpack.c.h.b16 %v3313
      %v3348 = vunpack.c.l.b16 %v3314
      %v3349 = vunpack.c.h.b16 %v3314
      %v3350 = vunpack.c.l.b16 %v3315
      %v3351 = vunpack.c.h.b16 %v3315
      %v3352 = vunpack.c.l.b16 %v3316
      %v3353 = vunpack.c.h.b16 %v3316
      %v3354 = vunpack.c.l.b16 %v3317
      %v3355 = vunpack.c.h.b16 %v3317
      %v3356 = vunpack.c.l.b16 %v3318
      %v3357 = vunpack.c.h.b16 %v3318
      %v3358 = vunpack.c.l.b16 %v3319
      %v3359 = vunpack.c.h.b16 %v3319
      %v3360 = vunpack.c.l.b16 %v3320
      %v3361 = vunpack.c.h.b16 %v3320
      %v3362 = vunpack.c.l.b16 %v3321
      %v3363 = vunpack.c.h.b16 %v3321
      %v3364 = vunpack.c.l.b16 %v3322
      %v3365 = vunpack.c.h.b16 %v3322
      %v3366 = vunpack.c.l.b16 %v3323
      %v3367 = vunpack.c.h.b16 %v3323
      %v3368 = vunpack.c.l.b16 %v3324
      %v3369 = vunpack.c.h.b16 %v3324
      %v3370 = vunpack.c.l.b16 %v3325
      %v3371 = vunpack.c.h.b16 %v3325
      %v3372 = vunpack.c.l.b16 %v3326
      %v3373 = vunpack.c.h.b16 %v3326
      %v3374 = vunpack.c.l.b16 %v3327
      %v3375 = vunpack.c.h.b16 %v3327
      %v3376 = vpack.c.b16 %v3344, %v3344
      %v3377 = vpack.c.b16 %v3345, %v3345
      %v3378 = vpack.c.b16 %v3346, %v3346
      %v3379 = vpack.c.b16 %v3347, %v3347
      %v3380 = vpack.c.b16 %v3348, %v3348
      %v3381 = vpack.c.b16 %v3349, %v3349
      %v3382 = vpack.c.b16 %v3350, %v3350
      %v3383 = vpack.c.b16 %v3351, %v3351
      %v3384 = vpack.c.b16 %v3352, %v3352
      %v3385 = vpack.c.b16 %v3353, %v3353
      %v3386 = vpack.c.b16 %v3354, %v3354
      %v3387 = vpack.c.b16 %v3355, %v3355
      %v3388 = vpack.c.b16 %v3356, %v3356
      %v3389 = vpack.c.b16 %v3357, %v3357
      %v3390 = vpack.c.b16 %v3358, %v3358
      %v3391 = vpack.c.b16 %v3359, %v3359
      %v3392 = vpack.c.b16 %v3360, %v3360
      %v3393 = vpack.c.b16 %v3361, %v3361
      %v3394 = vpack.c.b16 %v3362, %v3362
      %v3395 = vpack.c.b16 %v3363, %v3363
      %v3396 = vpack.c.b16 %v3364, %v3364
      %v3397 = vpack.c.b16 %v3365, %v3365
      %v3398 = vpack.c.b16 %v3366, %v3366
      %v3399 = vpack.c.b16 %v3367, %v3367
      %v3400 = vpack.c.b16 %v3368, %v3368
      %v3401 = vpack.c.b16 %v3369, %v3369
      %v3402 = vpack.c.b16 %v3370, %v3370
      %v3403 = vpack.c.b16 %v3371, %v3371
      %v3404 = vpack.c.b16 %v3372, %v3372
      %v3405 = vpack.c.b16 %v3373, %v3373
      %v3406 = vpack.c.b16 %v3374, %v3374
      %v3407 = vpack.c.b16 %v3375, %v3375
      %s3440 = scalar_lea.vmem %s374, 256
      %3441 = vst.msk [vmem:[%s3440] sm:$0xf] %vm1410, %v3376
      %3442 = vst.msk [vmem:[%s3440 + $0x4] sm:$0xf] %vm1410, %v3377
      %3443 = vst.msk [vmem:[%s3440 + $0x8] sm:$0xf] %vm1410, %v3378
      %3444 = vst.msk [vmem:[%s3440 + $0xc] sm:$0xf] %vm1410, %v3379
      %3445 = vst.msk [vmem:[%s3440 + $0x10] sm:$0xf] %vm1410, %v3380
      %3446 = vst.msk [vmem:[%s3440 + $0x14] sm:$0xf] %vm1410, %v3381
      %3447 = vst.msk [vmem:[%s3440 + $0x18] sm:$0xf] %vm1410, %v3382
      %3448 = vst.msk [vmem:[%s3440 + $0x1c] sm:$0xf] %vm1410, %v3383
      %3449 = vst.msk [vmem:[%s3440 + $0x20] sm:$0xf] %vm1410, %v3384
      %3450 = vst.msk [vmem:[%s3440 + $0x24] sm:$0xf] %vm1410, %v3385
      %3451 = vst.msk [vmem:[%s3440 + $0x28] sm:$0xf] %vm1410, %v3386
      %3452 = vst.msk [vmem:[%s3440 + $0x2c] sm:$0xf] %vm1410, %v3387
      %3453 = vst.msk [vmem:[%s3440 + $0x30] sm:$0xf] %vm1410, %v3388
      %3454 = vst.msk [vmem:[%s3440 + $0x34] sm:$0xf] %vm1410, %v3389
      %3455 = vst.msk [vmem:[%s3440 + $0x38] sm:$0xf] %vm1410, %v3390
      %3456 = vst.msk [vmem:[%s3440 + $0x3c] sm:$0xf] %vm1410, %v3391
      %3457 = vst.msk [vmem:[%s3440 + $0x40] sm:$0xf] %vm1410, %v3392
      %3458 = vst.msk [vmem:[%s3440 + $0x44] sm:$0xf] %vm1410, %v3393
      %3459 = vst.msk [vmem:[%s3440 + $0x48] sm:$0xf] %vm1410, %v3394
      %3460 = vst.msk [vmem:[%s3440 + $0x4c] sm:$0xf] %vm1410, %v3395
      %3461 = vst.msk [vmem:[%s3440 + $0x50] sm:$0xf] %vm1410, %v3396
      %3462 = vst.msk [vmem:[%s3440 + $0x54] sm:$0xf] %vm1410, %v3397
      %3463 = vst.msk [vmem:[%s3440 + $0x58] sm:$0xf] %vm1410, %v3398
      %3464 = vst.msk [vmem:[%s3440 + $0x5c] sm:$0xf] %vm1410, %v3399
      %3465 = vst.msk [vmem:[%s3440 + $0x60] sm:$0xf] %vm1410, %v3400
      %3466 = vst.msk [vmem:[%s3440 + $0x64] sm:$0xf] %vm1410, %v3401
      %3467 = vst.msk [vmem:[%s3440 + $0x68] sm:$0xf] %vm1410, %v3402
      %3468 = vst.msk [vmem:[%s3440 + $0x6c] sm:$0xf] %vm1410, %v3403
      %3469 = vst.msk [vmem:[%s3440 + $0x70] sm:$0xf] %vm1410, %v3404
      %3470 = vst.msk [vmem:[%s3440 + $0x74] sm:$0xf] %vm1410, %v3405
      %3471 = vst.msk [vmem:[%s3440 + $0x78] sm:$0xf] %vm1410, %v3406
      %3472 = vst.msk [vmem:[%s3440 + $0x7c] sm:$0xf] %vm1410, %v3407
      %s3473 = scalar_lea.vmem %s6, 32
      %v3474 = vld [vmem:[%s3473] sm:$0xf]
      %v3475 = vld [vmem:[%s3473 + $0x4] sm:$0xf]
      %v3476 = vld [vmem:[%s3473 + $0x8] sm:$0xf]
      %v3477 = vld [vmem:[%s3473 + $0xc] sm:$0xf]
      %v3482 = vunpack.c.l.b16 %v3474
      %v3483 = vunpack.c.l.b16 %v3475
      %v3484 = vunpack.c.l.b16 %v3476
      %v3485 = vunpack.c.l.b16 %v3477
      %v3486 = vpack.c.b16 %v3483, %v3482
      %v3487 = vpack.c.b16 %v3485, %v3484
      %3490 = vmatprep.subr.bf16.mxu0 0
      %3491 = vmatpush1.bf16.msra.mxu0 %v3486
      %3492 = vmatprep.subr.bf16.mxu0 0
      %3493 = vmatpush1.bf16.msra.mxu0 %v3487
      %3494 = vmatprep.subr.bf16.mxu0 0
      %3495 = vmatpush1.bf16.msra.mxu0 0
      %3496 = vmatprep.subr.bf16.mxu0 0
      %3497 = vmatpush1.bf16.msra.mxu0 0
      %3498 = vmatprep.subr.bf16.mxu0 0
      %3499 = vmatpush1.bf16.msra.mxu0 0
      %3500 = vmatprep.subr.bf16.mxu0 0
      %3501 = vmatpush1.bf16.msra.mxu0 0
      %3502 = vmatprep.subr.bf16.mxu0 0
      %3503 = vmatpush1.bf16.msra.mxu0 0
      %3504 = vmatprep.subr.bf16.mxu0 0
      %3505 = vmatpush1.bf16.msra.mxu0 0
      %3506 = vmatprep.subr.bf16.mxu0 0
      %3507 = vmatpush1.bf16.msra.mxu0 0
      %3508 = vmatprep.subr.bf16.mxu0 0
      %3509 = vmatpush1.bf16.msra.mxu0 0
      %3510 = vmatprep.subr.bf16.mxu0 0
      %3511 = vmatpush1.bf16.msra.mxu0 0
      %3512 = vmatprep.subr.bf16.mxu0 0
      %3513 = vmatpush1.bf16.msra.mxu0 0
      %3514 = vmatprep.subr.bf16.mxu0 0
      %3515 = vmatpush1.bf16.msra.mxu0 0
      %3516 = vmatprep.subr.bf16.mxu0 0
      %3517 = vmatpush1.bf16.msra.mxu0 0
      %3518 = vmatprep.subr.bf16.mxu0 0
      %3519 = vmatpush1.bf16.msra.mxu0 0
      %3520 = vmatprep.subr.bf16.mxu0 0
      %3521 = vmatpush1.bf16.msra.mxu0 0
      %3522 = vmatprep.mubr.bf16.mxu0 0
      %3523 = vmatmul.mubr.bf16.gmra.mrb[0].mxu0 %v1074
      %v3524 = vpop.f32.mrb[0].mxu0
      %v3525 = vadd.f32 0.0, %v3524
      %v3526 = vpop.f32.mrb[0].mxu0
      %v3527 = vpop.f32.mrb[0].mxu0
      %v3528 = vadd.f32 0.0, %v3527
      %v3529 = vpop.f32.mrb[0].mxu0
      %3530 = vmatprep.mubr.bf16.mxu0 0
      %3531 = vmatmul.mubr.bf16.gmra.mrb[0].mxu0 %v1077
      %v3532 = vpop.f32.mrb[0].mxu0
      %v3533 = vadd.f32 0.0, %v3532
      %v3534 = vpop.f32.mrb[0].mxu0
      %v3535 = vpop.f32.mrb[0].mxu0
      %v3536 = vadd.f32 0.0, %v3535
      %v3537 = vpop.f32.mrb[0].mxu0
      %3538 = vmatprep.mubr.bf16.mxu0 0
      %3539 = vmatmul.mubr.bf16.gmra.mrb[0].mxu0 %v1080
      %v3540 = vpop.f32.mrb[0].mxu0
      %v3541 = vadd.f32 0.0, %v3540
      %v3542 = vpop.f32.mrb[0].mxu0
      %v3543 = vpop.f32.mrb[0].mxu0
      %v3544 = vadd.f32 0.0, %v3543
      %v3545 = vpop.f32.mrb[0].mxu0
      %3546 = vmatprep.mubr.bf16.mxu0 0
      %3547 = vmatmul.mubr.bf16.gmra.mrb[0].mxu0 %v1083
      %v3548 = vpop.f32.mrb[0].mxu0
      %v3549 = vadd.f32 0.0, %v3548
      %v3550 = vpop.f32.mrb[0].mxu0
      %v3551 = vpop.f32.mrb[0].mxu0
      %v3552 = vadd.f32 0.0, %v3551
      %v3553 = vpop.f32.mrb[0].mxu0
      %3554 = vmatprep.mubr.bf16.mxu0 0
      %3555 = vmatmul.mubr.bf16.gmra.mrb[0].mxu0 %v1086
      %v3556 = vpop.f32.mrb[0].mxu0
      %v3557 = vadd.f32 0.0, %v3556
      %v3558 = vpop.f32.mrb[0].mxu0
      %v3559 = vpop.f32.mrb[0].mxu0
      %v3560 = vadd.f32 0.0, %v3559
      %v3561 = vpop.f32.mrb[0].mxu0
      %3562 = vmatprep.mubr.bf16.mxu0 0
      %3563 = vmatmul.mubr.bf16.gmra.mrb[0].mxu0 %v1089
      %v3564 = vpop.f32.mrb[0].mxu0
      %v3565 = vadd.f32 0.0, %v3564
      %v3566 = vpop.f32.mrb[0].mxu0
      %v3567 = vpop.f32.mrb[0].mxu0
      %v3568 = vadd.f32 0.0, %v3567
      %v3569 = vpop.f32.mrb[0].mxu0
      %3570 = vmatprep.mubr.bf16.mxu0 0
      %3571 = vmatmul.mubr.bf16.gmra.mrb[0].mxu0 %v1092
      %v3572 = vpop.f32.mrb[0].mxu0
      %v3573 = vadd.f32 0.0, %v3572
      %v3574 = vpop.f32.mrb[0].mxu0
      %v3575 = vpop.f32.mrb[0].mxu0
      %v3576 = vadd.f32 0.0, %v3575
      %v3577 = vpop.f32.mrb[0].mxu0
      %3578 = vmatprep.mubr.bf16.mxu0 0
      %3579 = vmatmul.mubr.bf16.gmra.mrb[0].mxu0 %v1095
      %v3580 = vpop.f32.mrb[0].mxu0
      %v3581 = vadd.f32 0.0, %v3580
      %v3582 = vpop.f32.mrb[0].mxu0
      %v3583 = vpop.f32.mrb[0].mxu0
      %v3584 = vadd.f32 0.0, %v3583
      %v3585 = vpop.f32.mrb[0].mxu0
      %3586 = vmatprep.mubr.bf16.mxu0 0
      %3587 = vmatmul.mubr.bf16.gmra.mrb[0].mxu0 %v1098
      %v3588 = vpop.f32.mrb[0].mxu0
      %v3589 = vadd.f32 0.0, %v3588
      %v3590 = vpop.f32.mrb[0].mxu0
      %v3591 = vpop.f32.mrb[0].mxu0
      %v3592 = vadd.f32 0.0, %v3591
      %v3593 = vpop.f32.mrb[0].mxu0
      %3594 = vmatprep.mubr.bf16.mxu0 0
      %3595 = vmatmul.mubr.bf16.gmra.mrb[0].mxu0 %v1101
      %v3596 = vpop.f32.mrb[0].mxu0
      %v3597 = vadd.f32 0.0, %v3596
      %v3598 = vpop.f32.mrb[0].mxu0
      %v3599 = vpop.f32.mrb[0].mxu0
      %v3600 = vadd.f32 0.0, %v3599
      %v3601 = vpop.f32.mrb[0].mxu0
      %3602 = vmatprep.mubr.bf16.mxu0 0
      %3603 = vmatmul.mubr.bf16.gmra.mrb[0].mxu0 %v1104
      %v3604 = vpop.f32.mrb[0].mxu0
      %v3605 = vadd.f32 0.0, %v3604
      %v3606 = vpop.f32.mrb[0].mxu0
      %v3607 = vpop.f32.mrb[0].mxu0
      %v3608 = vadd.f32 0.0, %v3607
      %v3609 = vpop.f32.mrb[0].mxu0
      %3610 = vmatprep.mubr.bf16.mxu0 0
      %3611 = vmatmul.mubr.bf16.gmra.mrb[0].mxu0 %v1107
      %v3612 = vpop.f32.mrb[0].mxu0
      %v3613 = vadd.f32 0.0, %v3612
      %v3614 = vpop.f32.mrb[0].mxu0
      %v3615 = vpop.f32.mrb[0].mxu0
      %v3616 = vadd.f32 0.0, %v3615
      %v3617 = vpop.f32.mrb[0].mxu0
      %3618 = vmatprep.mubr.bf16.mxu0 0
      %3619 = vmatmul.mubr.bf16.gmra.mrb[0].mxu0 %v1110
      %v3620 = vpop.f32.mrb[0].mxu0
      %v3621 = vadd.f32 0.0, %v3620
      %v3622 = vpop.f32.mrb[0].mxu0
      %v3623 = vpop.f32.mrb[0].mxu0
      %v3624 = vadd.f32 0.0, %v3623
      %v3625 = vpop.f32.mrb[0].mxu0
      %3626 = vmatprep.mubr.bf16.mxu0 0
      %3627 = vmatmul.mubr.bf16.gmra.mrb[0].mxu0 %v1113
      %v3628 = vpop.f32.mrb[0].mxu0
      %v3629 = vadd.f32 0.0, %v3628
      %v3630 = vpop.f32.mrb[0].mxu0
      %v3631 = vpop.f32.mrb[0].mxu0
      %v3632 = vadd.f32 0.0, %v3631
      %v3633 = vpop.f32.mrb[0].mxu0
      %3634 = vmatprep.mubr.bf16.mxu0 0
      %3635 = vmatmul.mubr.bf16.gmra.mrb[0].mxu0 %v1116
      %v3636 = vpop.f32.mrb[0].mxu0
      %v3637 = vadd.f32 0.0, %v3636
      %v3638 = vpop.f32.mrb[0].mxu0
      %v3639 = vpop.f32.mrb[0].mxu0
      %v3640 = vadd.f32 0.0, %v3639
      %v3641 = vpop.f32.mrb[0].mxu0
      %3642 = vmatprep.mubr.bf16.mxu0 0
      %3643 = vmatmul.mubr.bf16.gmra.mrb[0].mxu0 %v1119
      %v3644 = vpop.f32.mrb[0].mxu0
      %v3645 = vadd.f32 0.0, %v3644
      %v3646 = vpop.f32.mrb[0].mxu0
      %v3647 = vpop.f32.mrb[0].mxu0
      %v3648 = vadd.f32 0.0, %v3647
      %v3649 = vpop.f32.mrb[0].mxu0
      %3650 = vdwg.mxu0
      %v3651 = vpack.c.bf16 %v3528, %v3525
      %v3652 = vpack.c.bf16 %v3536, %v3533
      %v3653 = vpack.c.bf16 %v3544, %v3541
      %v3654 = vpack.c.bf16 %v3552, %v3549
      %v3655 = vpack.c.bf16 %v3560, %v3557
      %v3656 = vpack.c.bf16 %v3568, %v3565
      %v3657 = vpack.c.bf16 %v3576, %v3573
      %v3658 = vpack.c.bf16 %v3584, %v3581
      %v3659 = vpack.c.bf16 %v3592, %v3589
      %v3660 = vpack.c.bf16 %v3600, %v3597
      %v3661 = vpack.c.bf16 %v3608, %v3605
      %v3662 = vpack.c.bf16 %v3616, %v3613
      %v3663 = vpack.c.bf16 %v3624, %v3621
      %v3664 = vpack.c.bf16 %v3632, %v3629
      %v3665 = vpack.c.bf16 %v3640, %v3637
      %v3666 = vpack.c.bf16 %v3648, %v3645
      %v3683 = vunpack.c.l.b16 %v3651
      %v3684 = vunpack.c.h.b16 %v3651
      %v3685 = vunpack.c.l.b16 %v3652
      %v3686 = vunpack.c.h.b16 %v3652
      %v3687 = vunpack.c.l.b16 %v3653
      %v3688 = vunpack.c.h.b16 %v3653
      %v3689 = vunpack.c.l.b16 %v3654
      %v3690 = vunpack.c.h.b16 %v3654
      %v3691 = vunpack.c.l.b16 %v3655
      %v3692 = vunpack.c.h.b16 %v3655
      %v3693 = vunpack.c.l.b16 %v3656
      %v3694 = vunpack.c.h.b16 %v3656
      %v3695 = vunpack.c.l.b16 %v3657
      %v3696 = vunpack.c.h.b16 %v3657
      %v3697 = vunpack.c.l.b16 %v3658
      %v3698 = vunpack.c.h.b16 %v3658
      %v3699 = vunpack.c.l.b16 %v3659
      %v3700 = vunpack.c.h.b16 %v3659
      %v3701 = vunpack.c.l.b16 %v3660
      %v3702 = vunpack.c.h.b16 %v3660
      %v3703 = vunpack.c.l.b16 %v3661
      %v3704 = vunpack.c.h.b16 %v3661
      %v3705 = vunpack.c.l.b16 %v3662
      %v3706 = vunpack.c.h.b16 %v3662
      %v3707 = vunpack.c.l.b16 %v3663
      %v3708 = vunpack.c.h.b16 %v3663
      %v3709 = vunpack.c.l.b16 %v3664
      %v3710 = vunpack.c.h.b16 %v3664
      %v3711 = vunpack.c.l.b16 %v3665
      %v3712 = vunpack.c.h.b16 %v3665
      %v3713 = vunpack.c.l.b16 %v3666
      %v3714 = vunpack.c.h.b16 %v3666
      %v3715 = vpack.c.b16 %v3683, %v3683
      %v3716 = vpack.c.b16 %v3684, %v3684
      %v3717 = vpack.c.b16 %v3685, %v3685
      %v3718 = vpack.c.b16 %v3686, %v3686
      %v3719 = vpack.c.b16 %v3687, %v3687
      %v3720 = vpack.c.b16 %v3688, %v3688
      %v3721 = vpack.c.b16 %v3689, %v3689
      %v3722 = vpack.c.b16 %v3690, %v3690
      %v3723 = vpack.c.b16 %v3691, %v3691
      %v3724 = vpack.c.b16 %v3692, %v3692
      %v3725 = vpack.c.b16 %v3693, %v3693
      %v3726 = vpack.c.b16 %v3694, %v3694
      %v3727 = vpack.c.b16 %v3695, %v3695
      %v3728 = vpack.c.b16 %v3696, %v3696
      %v3729 = vpack.c.b16 %v3697, %v3697
      %v3730 = vpack.c.b16 %v3698, %v3698
      %v3731 = vpack.c.b16 %v3699, %v3699
      %v3732 = vpack.c.b16 %v3700, %v3700
      %v3733 = vpack.c.b16 %v3701, %v3701
      %v3734 = vpack.c.b16 %v3702, %v3702
      %v3735 = vpack.c.b16 %v3703, %v3703
      %v3736 = vpack.c.b16 %v3704, %v3704
      %v3737 = vpack.c.b16 %v3705, %v3705
      %v3738 = vpack.c.b16 %v3706, %v3706
      %v3739 = vpack.c.b16 %v3707, %v3707
      %v3740 = vpack.c.b16 %v3708, %v3708
      %v3741 = vpack.c.b16 %v3709, %v3709
      %v3742 = vpack.c.b16 %v3710, %v3710
      %v3743 = vpack.c.b16 %v3711, %v3711
      %v3744 = vpack.c.b16 %v3712, %v3712
      %v3745 = vpack.c.b16 %v3713, %v3713
      %v3746 = vpack.c.b16 %v3714, %v3714
      %s3779 = scalar_lea.vmem %s379, 256
      %3780 = vst.msk [vmem:[%s3779] sm:$0xf] %vm1410, %v3715
      %3781 = vst.msk [vmem:[%s3779 + $0x4] sm:$0xf] %vm1410, %v3716
      %3782 = vst.msk [vmem:[%s3779 + $0x8] sm:$0xf] %vm1410, %v3717
      %3783 = vst.msk [vmem:[%s3779 + $0xc] sm:$0xf] %vm1410, %v3718
      %3784 = vst.msk [vmem:[%s3779 + $0x10] sm:$0xf] %vm1410, %v3719
      %3785 = vst.msk [vmem:[%s3779 + $0x14] sm:$0xf] %vm1410, %v3720
      %3786 = vst.msk [vmem:[%s3779 + $0x18] sm:$0xf] %vm1410, %v3721
      %3787 = vst.msk [vmem:[%s3779 + $0x1c] sm:$0xf] %vm1410, %v3722
      %3788 = vst.msk [vmem:[%s3779 + $0x20] sm:$0xf] %vm1410, %v3723
      %3789 = vst.msk [vmem:[%s3779 + $0x24] sm:$0xf] %vm1410, %v3724
      %3790 = vst.msk [vmem:[%s3779 + $0x28] sm:$0xf] %vm1410, %v3725
      %3791 = vst.msk [vmem:[%s3779 + $0x2c] sm:$0xf] %vm1410, %v3726
      %3792 = vst.msk [vmem:[%s3779 + $0x30] sm:$0xf] %vm1410, %v3727
      %3793 = vst.msk [vmem:[%s3779 + $0x34] sm:$0xf] %vm1410, %v3728
      %3794 = vst.msk [vmem:[%s3779 + $0x38] sm:$0xf] %vm1410, %v3729
      %3795 = vst.msk [vmem:[%s3779 + $0x3c] sm:$0xf] %vm1410, %v3730
      %3796 = vst.msk [vmem:[%s3779 + $0x40] sm:$0xf] %vm1410, %v3731
      %3797 = vst.msk [vmem:[%s3779 + $0x44] sm:$0xf] %vm1410, %v3732
      %3798 = vst.msk [vmem:[%s3779 + $0x48] sm:$0xf] %vm1410, %v3733
      %3799 = vst.msk [vmem:[%s3779 + $0x4c] sm:$0xf] %vm1410, %v3734
      %3800 = vst.msk [vmem:[%s3779 + $0x50] sm:$0xf] %vm1410, %v3735
      %3801 = vst.msk [vmem:[%s3779 + $0x54] sm:$0xf] %vm1410, %v3736
      %3802 = vst.msk [vmem:[%s3779 + $0x58] sm:$0xf] %vm1410, %v3737
      %3803 = vst.msk [vmem:[%s3779 + $0x5c] sm:$0xf] %vm1410, %v3738
      %3804 = vst.msk [vmem:[%s3779 + $0x60] sm:$0xf] %vm1410, %v3739
      %3805 = vst.msk [vmem:[%s3779 + $0x64] sm:$0xf] %vm1410, %v3740
      %3806 = vst.msk [vmem:[%s3779 + $0x68] sm:$0xf] %vm1410, %v3741
      %3807 = vst.msk [vmem:[%s3779 + $0x6c] sm:$0xf] %vm1410, %v3742
      %3808 = vst.msk [vmem:[%s3779 + $0x70] sm:$0xf] %vm1410, %v3743
      %3809 = vst.msk [vmem:[%s3779 + $0x74] sm:$0xf] %vm1410, %v3744
      %3810 = vst.msk [vmem:[%s3779 + $0x78] sm:$0xf] %vm1410, %v3745
      %3811 = vst.msk [vmem:[%s3779 + $0x7c] sm:$0xf] %vm1410, %v3746
      %s3812 = scalar_lea.vmem %s7, 32
      %v3813 = vld [vmem:[%s3812] sm:$0xf]
      %v3814 = vld [vmem:[%s3812 + $0x4] sm:$0xf]
      %v3815 = vld [vmem:[%s3812 + $0x8] sm:$0xf]
      %v3816 = vld [vmem:[%s3812 + $0xc] sm:$0xf]
      %v3821 = vunpack.c.l.b16 %v3813
      %v3822 = vunpack.c.l.b16 %v3814
      %v3823 = vunpack.c.l.b16 %v3815
      %v3824 = vunpack.c.l.b16 %v3816
      %v3825 = vpack.c.b16 %v3822, %v3821
      %v3826 = vpack.c.b16 %v3824, %v3823
      %3829 = vmatprep.subr.bf16.mxu0 0
      %3830 = vmatpush1.bf16.msra.mxu0 %v3825
      %3831 = vmatprep.subr.bf16.mxu0 0
      %3832 = vmatpush1.bf16.msra.mxu0 %v3826
      %3833 = vmatprep.subr.bf16.mxu0 0
      %3834 = vmatpush1.bf16.msra.mxu0 0
      %3835 = vmatprep.subr.bf16.mxu0 0
      %3836 = vmatpush1.bf16.msra.mxu0 0
      %3837 = vmatprep.subr.bf16.mxu0 0
      %3838 = vmatpush1.bf16.msra.mxu0 0
      %3839 = vmatprep.subr.bf16.mxu0 0
      %3840 = vmatpush1.bf16.msra.mxu0 0
      %3841 = vmatprep.subr.bf16.mxu0 0
      %3842 = vmatpush1.bf16.msra.mxu0 0
      %3843 = vmatprep.subr.bf16.mxu0 0
      %3844 = vmatpush1.bf16.msra.mxu0 0
      %3845 = vmatprep.subr.bf16.mxu0 0
      %3846 = vmatpush1.bf16.msra.mxu0 0
      %3847 = vmatprep.subr.bf16.mxu0 0
      %3848 = vmatpush1.bf16.msra.mxu0 0
      %3849 = vmatprep.subr.bf16.mxu0 0
      %3850 = vmatpush1.bf16.msra.mxu0 0
      %3851 = vmatprep.subr.bf16.mxu0 0
      %3852 = vmatpush1.bf16.msra.mxu0 0
      %3853 = vmatprep.subr.bf16.mxu0 0
      %3854 = vmatpush1.bf16.msra.mxu0 0
      %3855 = vmatprep.subr.bf16.mxu0 0
      %3856 = vmatpush1.bf16.msra.mxu0 0
      %3857 = vmatprep.subr.bf16.mxu0 0
      %3858 = vmatpush1.bf16.msra.mxu0 0
      %3859 = vmatprep.subr.bf16.mxu0 0
      %3860 = vmatpush1.bf16.msra.mxu0 0
      %3861 = vmatprep.mubr.bf16.mxu0 0
      %3862 = vmatmul.mubr.bf16.gmra.mrb[0].mxu0 %v1074
      %v3863 = vpop.f32.mrb[0].mxu0
      %v3864 = vadd.f32 0.0, %v3863
      %v3865 = vpop.f32.mrb[0].mxu0
      %v3866 = vpop.f32.mrb[0].mxu0
      %v3867 = vadd.f32 0.0, %v3866
      %v3868 = vpop.f32.mrb[0].mxu0
      %3869 = vmatprep.mubr.bf16.mxu0 0
      %3870 = vmatmul.mubr.bf16.gmra.mrb[0].mxu0 %v1077
      %v3871 = vpop.f32.mrb[0].mxu0
      %v3872 = vadd.f32 0.0, %v3871
      %v3873 = vpop.f32.mrb[0].mxu0
      %v3874 = vpop.f32.mrb[0].mxu0
      %v3875 = vadd.f32 0.0, %v3874
      %v3876 = vpop.f32.mrb[0].mxu0
      %3877 = vmatprep.mubr.bf16.mxu0 0
      %3878 = vmatmul.mubr.bf16.gmra.mrb[0].mxu0 %v1080
      %v3879 = vpop.f32.mrb[0].mxu0
      %v3880 = vadd.f32 0.0, %v3879
      %v3881 = vpop.f32.mrb[0].mxu0
      %v3882 = vpop.f32.mrb[0].mxu0
      %v3883 = vadd.f32 0.0, %v3882
      %v3884 = vpop.f32.mrb[0].mxu0
      %3885 = vmatprep.mubr.bf16.mxu0 0
      %3886 = vmatmul.mubr.bf16.gmra.mrb[0].mxu0 %v1083
      %v3887 = vpop.f32.mrb[0].mxu0
      %v3888 = vadd.f32 0.0, %v3887
      %v3889 = vpop.f32.mrb[0].mxu0
      %v3890 = vpop.f32.mrb[0].mxu0
      %v3891 = vadd.f32 0.0, %v3890
      %v3892 = vpop.f32.mrb[0].mxu0
      %3893 = vmatprep.mubr.bf16.mxu0 0
      %3894 = vmatmul.mubr.bf16.gmra.mrb[0].mxu0 %v1086
      %v3895 = vpop.f32.mrb[0].mxu0
      %v3896 = vadd.f32 0.0, %v3895
      %v3897 = vpop.f32.mrb[0].mxu0
      %v3898 = vpop.f32.mrb[0].mxu0
      %v3899 = vadd.f32 0.0, %v3898
      %v3900 = vpop.f32.mrb[0].mxu0
      %3901 = vmatprep.mubr.bf16.mxu0 0
      %3902 = vmatmul.mubr.bf16.gmra.mrb[0].mxu0 %v1089
      %v3903 = vpop.f32.mrb[0].mxu0
      %v3904 = vadd.f32 0.0, %v3903
      %v3905 = vpop.f32.mrb[0].mxu0
      %v3906 = vpop.f32.mrb[0].mxu0
      %v3907 = vadd.f32 0.0, %v3906
      %v3908 = vpop.f32.mrb[0].mxu0
      %3909 = vmatprep.mubr.bf16.mxu0 0
      %3910 = vmatmul.mubr.bf16.gmra.mrb[0].mxu0 %v1092
      %v3911 = vpop.f32.mrb[0].mxu0
      %v3912 = vadd.f32 0.0, %v3911
      %v3913 = vpop.f32.mrb[0].mxu0
      %v3914 = vpop.f32.mrb[0].mxu0
      %v3915 = vadd.f32 0.0, %v3914
      %v3916 = vpop.f32.mrb[0].mxu0
      %3917 = vmatprep.mubr.bf16.mxu0 0
      %3918 = vmatmul.mubr.bf16.gmra.mrb[0].mxu0 %v1095
      %v3919 = vpop.f32.mrb[0].mxu0
      %v3920 = vadd.f32 0.0, %v3919
      %v3921 = vpop.f32.mrb[0].mxu0
      %v3922 = vpop.f32.mrb[0].mxu0
      %v3923 = vadd.f32 0.0, %v3922
      %v3924 = vpop.f32.mrb[0].mxu0
      %3925 = vmatprep.mubr.bf16.mxu0 0
      %3926 = vmatmul.mubr.bf16.gmra.mrb[0].mxu0 %v1098
      %v3927 = vpop.f32.mrb[0].mxu0
      %v3928 = vadd.f32 0.0, %v3927
      %v3929 = vpop.f32.mrb[0].mxu0
      %v3930 = vpop.f32.mrb[0].mxu0
      %v3931 = vadd.f32 0.0, %v3930
      %v3932 = vpop.f32.mrb[0].mxu0
      %3933 = vmatprep.mubr.bf16.mxu0 0
      %3934 = vmatmul.mubr.bf16.gmra.mrb[0].mxu0 %v1101
      %v3935 = vpop.f32.mrb[0].mxu0
      %v3936 = vadd.f32 0.0, %v3935
      %v3937 = vpop.f32.mrb[0].mxu0
      %v3938 = vpop.f32.mrb[0].mxu0
      %v3939 = vadd.f32 0.0, %v3938
      %v3940 = vpop.f32.mrb[0].mxu0
      %3941 = vmatprep.mubr.bf16.mxu0 0
      %3942 = vmatmul.mubr.bf16.gmra.mrb[0].mxu0 %v1104
      %v3943 = vpop.f32.mrb[0].mxu0
      %v3944 = vadd.f32 0.0, %v3943
      %v3945 = vpop.f32.mrb[0].mxu0
      %v3946 = vpop.f32.mrb[0].mxu0
      %v3947 = vadd.f32 0.0, %v3946
      %v3948 = vpop.f32.mrb[0].mxu0
      %3949 = vmatprep.mubr.bf16.mxu0 0
      %3950 = vmatmul.mubr.bf16.gmra.mrb[0].mxu0 %v1107
      %v3951 = vpop.f32.mrb[0].mxu0
      %v3952 = vadd.f32 0.0, %v3951
      %v3953 = vpop.f32.mrb[0].mxu0
      %v3954 = vpop.f32.mrb[0].mxu0
      %v3955 = vadd.f32 0.0, %v3954
      %v3956 = vpop.f32.mrb[0].mxu0
      %3957 = vmatprep.mubr.bf16.mxu0 0
      %3958 = vmatmul.mubr.bf16.gmra.mrb[0].mxu0 %v1110
      %v3959 = vpop.f32.mrb[0].mxu0
      %v3960 = vadd.f32 0.0, %v3959
      %v3961 = vpop.f32.mrb[0].mxu0
      %v3962 = vpop.f32.mrb[0].mxu0
      %v3963 = vadd.f32 0.0, %v3962
      %v3964 = vpop.f32.mrb[0].mxu0
      %3965 = vmatprep.mubr.bf16.mxu0 0
      %3966 = vmatmul.mubr.bf16.gmra.mrb[0].mxu0 %v1113
      %v3967 = vpop.f32.mrb[0].mxu0
      %v3968 = vadd.f32 0.0, %v3967
      %v3969 = vpop.f32.mrb[0].mxu0
      %v3970 = vpop.f32.mrb[0].mxu0
      %v3971 = vadd.f32 0.0, %v3970
      %v3972 = vpop.f32.mrb[0].mxu0
      %3973 = vmatprep.mubr.bf16.mxu0 0
      %3974 = vmatmul.mubr.bf16.gmra.mrb[0].mxu0 %v1116
      %v3975 = vpop.f32.mrb[0].mxu0
      %v3976 = vadd.f32 0.0, %v3975
      %v3977 = vpop.f32.mrb[0].mxu0
      %v3978 = vpop.f32.mrb[0].mxu0
      %v3979 = vadd.f32 0.0, %v3978
      %v3980 = vpop.f32.mrb[0].mxu0
      %3981 = vmatprep.mubr.bf16.mxu0 0
      %3982 = vmatmul.mubr.bf16.gmra.mrb[0].mxu0 %v1119
      %v3983 = vpop.f32.mrb[0].mxu0
      %v3984 = vadd.f32 0.0, %v3983
      %v3985 = vpop.f32.mrb[0].mxu0
      %v3986 = vpop.f32.mrb[0].mxu0
      %v3987 = vadd.f32 0.0, %v3986
      %v3988 = vpop.f32.mrb[0].mxu0
      %3989 = vdwg.mxu0
      %v3990 = vpack.c.bf16 %v3867, %v3864
      %v3991 = vpack.c.bf16 %v3875, %v3872
      %v3992 = vpack.c.bf16 %v3883, %v3880
      %v3993 = vpack.c.bf16 %v3891, %v3888
      %v3994 = vpack.c.bf16 %v3899, %v3896
      %v3995 = vpack.c.bf16 %v3907, %v3904
      %v3996 = vpack.c.bf16 %v3915, %v3912
      %v3997 = vpack.c.bf16 %v3923, %v3920
      %v3998 = vpack.c.bf16 %v3931, %v3928
      %v3999 = vpack.c.bf16 %v3939, %v3936
      %v4000 = vpack.c.bf16 %v3947, %v3944
      %v4001 = vpack.c.bf16 %v3955, %v3952
      %v4002 = vpack.c.bf16 %v3963, %v3960
      %v4003 = vpack.c.bf16 %v3971, %v3968
      %v4004 = vpack.c.bf16 %v3979, %v3976
      %v4005 = vpack.c.bf16 %v3987, %v3984
      %v4022 = vunpack.c.l.b16 %v3990
      %v4023 = vunpack.c.h.b16 %v3990
      %v4024 = vunpack.c.l.b16 %v3991
      %v4025 = vunpack.c.h.b16 %v3991
      %v4026 = vunpack.c.l.b16 %v3992
      %v4027 = vunpack.c.h.b16 %v3992
      %v4028 = vunpack.c.l.b16 %v3993
      %v4029 = vunpack.c.h.b16 %v3993
      %v4030 = vunpack.c.l.b16 %v3994
      %v4031 = vunpack.c.h.b16 %v3994
      %v4032 = vunpack.c.l.b16 %v3995
      %v4033 = vunpack.c.h.b16 %v3995
      %v4034 = vunpack.c.l.b16 %v3996
      %v4035 = vunpack.c.h.b16 %v3996
      %v4036 = vunpack.c.l.b16 %v3997
      %v4037 = vunpack.c.h.b16 %v3997
      %v4038 = vunpack.c.l.b16 %v3998
      %v4039 = vunpack.c.h.b16 %v3998
      %v4040 = vunpack.c.l.b16 %v3999
      %v4041 = vunpack.c.h.b16 %v3999
      %v4042 = vunpack.c.l.b16 %v4000
      %v4043 = vunpack.c.h.b16 %v4000
      %v4044 = vunpack.c.l.b16 %v4001
      %v4045 = vunpack.c.h.b16 %v4001
      %v4046 = vunpack.c.l.b16 %v4002
      %v4047 = vunpack.c.h.b16 %v4002
      %v4048 = vunpack.c.l.b16 %v4003
      %v4049 = vunpack.c.h.b16 %v4003
      %v4050 = vunpack.c.l.b16 %v4004
      %v4051 = vunpack.c.h.b16 %v4004
      %v4052 = vunpack.c.l.b16 %v4005
      %v4053 = vunpack.c.h.b16 %v4005
      %v4054 = vpack.c.b16 %v4022, %v4022
      %v4055 = vpack.c.b16 %v4023, %v4023
      %v4056 = vpack.c.b16 %v4024, %v4024
      %v4057 = vpack.c.b16 %v4025, %v4025
      %v4058 = vpack.c.b16 %v4026, %v4026
      %v4059 = vpack.c.b16 %v4027, %v4027
      %v4060 = vpack.c.b16 %v4028, %v4028
      %v4061 = vpack.c.b16 %v4029, %v4029
      %v4062 = vpack.c.b16 %v4030, %v4030
      %v4063 = vpack.c.b16 %v4031, %v4031
      %v4064 = vpack.c.b16 %v4032, %v4032
      %v4065 = vpack.c.b16 %v4033, %v4033
      %v4066 = vpack.c.b16 %v4034, %v4034
      %v4067 = vpack.c.b16 %v4035, %v4035
      %v4068 = vpack.c.b16 %v4036, %v4036
      %v4069 = vpack.c.b16 %v4037, %v4037
      %v4070 = vpack.c.b16 %v4038, %v4038
      %v4071 = vpack.c.b16 %v4039, %v4039
      %v4072 = vpack.c.b16 %v4040, %v4040
      %v4073 = vpack.c.b16 %v4041, %v4041
      %v4074 = vpack.c.b16 %v4042, %v4042
      %v4075 = vpack.c.b16 %v4043, %v4043
      %v4076 = vpack.c.b16 %v4044, %v4044
      %v4077 = vpack.c.b16 %v4045, %v4045
      %v4078 = vpack.c.b16 %v4046, %v4046
      %v4079 = vpack.c.b16 %v4047, %v4047
      %v4080 = vpack.c.b16 %v4048, %v4048
      %v4081 = vpack.c.b16 %v4049, %v4049
      %v4082 = vpack.c.b16 %v4050, %v4050
      %v4083 = vpack.c.b16 %v4051, %v4051
      %v4084 = vpack.c.b16 %v4052, %v4052
      %v4085 = vpack.c.b16 %v4053, %v4053
      %s4118 = scalar_lea.vmem %s384, 256
      %4119 = vst.msk [vmem:[%s4118] sm:$0xf] %vm1410, %v4054
      %4120 = vst.msk [vmem:[%s4118 + $0x4] sm:$0xf] %vm1410, %v4055
      %4121 = vst.msk [vmem:[%s4118 + $0x8] sm:$0xf] %vm1410, %v4056
      %4122 = vst.msk [vmem:[%s4118 + $0xc] sm:$0xf] %vm1410, %v4057
      %4123 = vst.msk [vmem:[%s4118 + $0x10] sm:$0xf] %vm1410, %v4058
      %4124 = vst.msk [vmem:[%s4118 + $0x14] sm:$0xf] %vm1410, %v4059
      %4125 = vst.msk [vmem:[%s4118 + $0x18] sm:$0xf] %vm1410, %v4060
      %4126 = vst.msk [vmem:[%s4118 + $0x1c] sm:$0xf] %vm1410, %v4061
      %4127 = vst.msk [vmem:[%s4118 + $0x20] sm:$0xf] %vm1410, %v4062
      %4128 = vst.msk [vmem:[%s4118 + $0x24] sm:$0xf] %vm1410, %v4063
      %4129 = vst.msk [vmem:[%s4118 + $0x28] sm:$0xf] %vm1410, %v4064
      %4130 = vst.msk [vmem:[%s4118 + $0x2c] sm:$0xf] %vm1410, %v4065
      %4131 = vst.msk [vmem:[%s4118 + $0x30] sm:$0xf] %vm1410, %v4066
      %4132 = vst.msk [vmem:[%s4118 + $0x34] sm:$0xf] %vm1410, %v4067
      %4133 = vst.msk [vmem:[%s4118 + $0x38] sm:$0xf] %vm1410, %v4068
      %4134 = vst.msk [vmem:[%s4118 + $0x3c] sm:$0xf] %vm1410, %v4069
      %4135 = vst.msk [vmem:[%s4118 + $0x40] sm:$0xf] %vm1410, %v4070
      %4136 = vst.msk [vmem:[%s4118 + $0x44] sm:$0xf] %vm1410, %v4071
      %4137 = vst.msk [vmem:[%s4118 + $0x48] sm:$0xf] %vm1410, %v4072
      %4138 = vst.msk [vmem:[%s4118 + $0x4c] sm:$0xf] %vm1410, %v4073
      %4139 = vst.msk [vmem:[%s4118 + $0x50] sm:$0xf] %vm1410, %v4074
      %4140 = vst.msk [vmem:[%s4118 + $0x54] sm:$0xf] %vm1410, %v4075
      %4141 = vst.msk [vmem:[%s4118 + $0x58] sm:$0xf] %vm1410, %v4076
      %4142 = vst.msk [vmem:[%s4118 + $0x5c] sm:$0xf] %vm1410, %v4077
      %4143 = vst.msk [vmem:[%s4118 + $0x60] sm:$0xf] %vm1410, %v4078
      %4144 = vst.msk [vmem:[%s4118 + $0x64] sm:$0xf] %vm1410, %v4079
      %4145 = vst.msk [vmem:[%s4118 + $0x68] sm:$0xf] %vm1410, %v4080
      %4146 = vst.msk [vmem:[%s4118 + $0x6c] sm:$0xf] %vm1410, %v4081
      %4147 = vst.msk [vmem:[%s4118 + $0x70] sm:$0xf] %vm1410, %v4082
      %4148 = vst.msk [vmem:[%s4118 + $0x74] sm:$0xf] %vm1410, %v4083
      %4149 = vst.msk [vmem:[%s4118 + $0x78] sm:$0xf] %vm1410, %v4084
      %4150 = vst.msk [vmem:[%s4118 + $0x7c] sm:$0xf] %vm1410, %v4085
      %s4151 = scalar_lea.vmem %s5, 48
      %v4152 = vld [vmem:[%s4151] sm:$0xf]
      %v4153 = vld [vmem:[%s4151 + $0x4] sm:$0xf]
      %v4154 = vld [vmem:[%s4151 + $0x8] sm:$0xf]
      %v4155 = vld [vmem:[%s4151 + $0xc] sm:$0xf]
      %v4160 = vunpack.c.l.b16 %v4152
      %v4161 = vunpack.c.l.b16 %v4153
      %v4162 = vunpack.c.l.b16 %v4154
      %v4163 = vunpack.c.l.b16 %v4155
      %v4164 = vpack.c.b16 %v4161, %v4160
      %v4165 = vpack.c.b16 %v4163, %v4162
      %4168 = vmatprep.subr.bf16.mxu0 0
      %4169 = vmatpush1.bf16.msra.mxu0 %v4164
      %4170 = vmatprep.subr.bf16.mxu0 0
      %4171 = vmatpush1.bf16.msra.mxu0 %v4165
      %4172 = vmatprep.subr.bf16.mxu0 0
      %4173 = vmatpush1.bf16.msra.mxu0 0
      %4174 = vmatprep.subr.bf16.mxu0 0
      %4175 = vmatpush1.bf16.msra.mxu0 0
      %4176 = vmatprep.subr.bf16.mxu0 0
      %4177 = vmatpush1.bf16.msra.mxu0 0
      %4178 = vmatprep.subr.bf16.mxu0 0
      %4179 = vmatpush1.bf16.msra.mxu0 0
      %4180 = vmatprep.subr.bf16.mxu0 0
      %4181 = vmatpush1.bf16.msra.mxu0 0
      %4182 = vmatprep.subr.bf16.mxu0 0
      %4183 = vmatpush1.bf16.msra.mxu0 0
      %4184 = vmatprep.subr.bf16.mxu0 0
      %4185 = vmatpush1.bf16.msra.mxu0 0
      %4186 = vmatprep.subr.bf16.mxu0 0
      %4187 = vmatpush1.bf16.msra.mxu0 0
      %4188 = vmatprep.subr.bf16.mxu0 0
      %4189 = vmatpush1.bf16.msra.mxu0 0
      %4190 = vmatprep.subr.bf16.mxu0 0
      %4191 = vmatpush1.bf16.msra.mxu0 0
      %4192 = vmatprep.subr.bf16.mxu0 0
      %4193 = vmatpush1.bf16.msra.mxu0 0
      %4194 = vmatprep.subr.bf16.mxu0 0
      %4195 = vmatpush1.bf16.msra.mxu0 0
      %4196 = vmatprep.subr.bf16.mxu0 0
      %4197 = vmatpush1.bf16.msra.mxu0 0
      %4198 = vmatprep.subr.bf16.mxu0 0
      %4199 = vmatpush1.bf16.msra.mxu0 0
      %4200 = vmatprep.mubr.bf16.mxu0 0
      %4201 = vmatmul.mubr.bf16.gmra.mrb[0].mxu0 %v1074
      %v4202 = vpop.f32.mrb[0].mxu0
      %v4203 = vadd.f32 0.0, %v4202
      %v4204 = vpop.f32.mrb[0].mxu0
      %v4205 = vpop.f32.mrb[0].mxu0
      %v4206 = vadd.f32 0.0, %v4205
      %v4207 = vpop.f32.mrb[0].mxu0
      %4208 = vmatprep.mubr.bf16.mxu0 0
      %4209 = vmatmul.mubr.bf16.gmra.mrb[0].mxu0 %v1077
      %v4210 = vpop.f32.mrb[0].mxu0
      %v4211 = vadd.f32 0.0, %v4210
      %v4212 = vpop.f32.mrb[0].mxu0
      %v4213 = vpop.f32.mrb[0].mxu0
      %v4214 = vadd.f32 0.0, %v4213
      %v4215 = vpop.f32.mrb[0].mxu0
      %4216 = vmatprep.mubr.bf16.mxu0 0
      %4217 = vmatmul.mubr.bf16.gmra.mrb[0].mxu0 %v1080
      %v4218 = vpop.f32.mrb[0].mxu0
      %v4219 = vadd.f32 0.0, %v4218
      %v4220 = vpop.f32.mrb[0].mxu0
      %v4221 = vpop.f32.mrb[0].mxu0
      %v4222 = vadd.f32 0.0, %v4221
      %v4223 = vpop.f32.mrb[0].mxu0
      %4224 = vmatprep.mubr.bf16.mxu0 0
      %4225 = vmatmul.mubr.bf16.gmra.mrb[0].mxu0 %v1083
      %v4226 = vpop.f32.mrb[0].mxu0
      %v4227 = vadd.f32 0.0, %v4226
      %v4228 = vpop.f32.mrb[0].mxu0
      %v4229 = vpop.f32.mrb[0].mxu0
      %v4230 = vadd.f32 0.0, %v4229
      %v4231 = vpop.f32.mrb[0].mxu0
      %4232 = vmatprep.mubr.bf16.mxu0 0
      %4233 = vmatmul.mubr.bf16.gmra.mrb[0].mxu0 %v1086
      %v4234 = vpop.f32.mrb[0].mxu0
      %v4235 = vadd.f32 0.0, %v4234
      %v4236 = vpop.f32.mrb[0].mxu0
      %v4237 = vpop.f32.mrb[0].mxu0
      %v4238 = vadd.f32 0.0, %v4237
      %v4239 = vpop.f32.mrb[0].mxu0
      %4240 = vmatprep.mubr.bf16.mxu0 0
      %4241 = vmatmul.mubr.bf16.gmra.mrb[0].mxu0 %v1089
      %v4242 = vpop.f32.mrb[0].mxu0
      %v4243 = vadd.f32 0.0, %v4242
      %v4244 = vpop.f32.mrb[0].mxu0
      %v4245 = vpop.f32.mrb[0].mxu0
      %v4246 = vadd.f32 0.0, %v4245
      %v4247 = vpop.f32.mrb[0].mxu0
      %4248 = vmatprep.mubr.bf16.mxu0 0
      %4249 = vmatmul.mubr.bf16.gmra.mrb[0].mxu0 %v1092
      %v4250 = vpop.f32.mrb[0].mxu0
      %v4251 = vadd.f32 0.0, %v4250
      %v4252 = vpop.f32.mrb[0].mxu0
      %v4253 = vpop.f32.mrb[0].mxu0
      %v4254 = vadd.f32 0.0, %v4253
      %v4255 = vpop.f32.mrb[0].mxu0
      %4256 = vmatprep.mubr.bf16.mxu0 0
      %4257 = vmatmul.mubr.bf16.gmra.mrb[0].mxu0 %v1095
      %v4258 = vpop.f32.mrb[0].mxu0
      %v4259 = vadd.f32 0.0, %v4258
      %v4260 = vpop.f32.mrb[0].mxu0
      %v4261 = vpop.f32.mrb[0].mxu0
      %v4262 = vadd.f32 0.0, %v4261
      %v4263 = vpop.f32.mrb[0].mxu0
      %4264 = vmatprep.mubr.bf16.mxu0 0
      %4265 = vmatmul.mubr.bf16.gmra.mrb[0].mxu0 %v1098
      %v4266 = vpop.f32.mrb[0].mxu0
      %v4267 = vadd.f32 0.0, %v4266
      %v4268 = vpop.f32.mrb[0].mxu0
      %v4269 = vpop.f32.mrb[0].mxu0
      %v4270 = vadd.f32 0.0, %v4269
      %v4271 = vpop.f32.mrb[0].mxu0
      %4272 = vmatprep.mubr.bf16.mxu0 0
      %4273 = vmatmul.mubr.bf16.gmra.mrb[0].mxu0 %v1101
      %v4274 = vpop.f32.mrb[0].mxu0
      %v4275 = vadd.f32 0.0, %v4274
      %v4276 = vpop.f32.mrb[0].mxu0
      %v4277 = vpop.f32.mrb[0].mxu0
      %v4278 = vadd.f32 0.0, %v4277
      %v4279 = vpop.f32.mrb[0].mxu0
      %4280 = vmatprep.mubr.bf16.mxu0 0
      %4281 = vmatmul.mubr.bf16.gmra.mrb[0].mxu0 %v1104
      %v4282 = vpop.f32.mrb[0].mxu0
      %v4283 = vadd.f32 0.0, %v4282
      %v4284 = vpop.f32.mrb[0].mxu0
      %v4285 = vpop.f32.mrb[0].mxu0
      %v4286 = vadd.f32 0.0, %v4285
      %v4287 = vpop.f32.mrb[0].mxu0
      %4288 = vmatprep.mubr.bf16.mxu0 0
      %4289 = vmatmul.mubr.bf16.gmra.mrb[0].mxu0 %v1107
      %v4290 = vpop.f32.mrb[0].mxu0
      %v4291 = vadd.f32 0.0, %v4290
      %v4292 = vpop.f32.mrb[0].mxu0
      %v4293 = vpop.f32.mrb[0].mxu0
      %v4294 = vadd.f32 0.0, %v4293
      %v4295 = vpop.f32.mrb[0].mxu0
      %4296 = vmatprep.mubr.bf16.mxu0 0
      %4297 = vmatmul.mubr.bf16.gmra.mrb[0].mxu0 %v1110
      %v4298 = vpop.f32.mrb[0].mxu0
      %v4299 = vadd.f32 0.0, %v4298
      %v4300 = vpop.f32.mrb[0].mxu0
      %v4301 = vpop.f32.mrb[0].mxu0
      %v4302 = vadd.f32 0.0, %v4301
      %v4303 = vpop.f32.mrb[0].mxu0
      %4304 = vmatprep.mubr.bf16.mxu0 0
      %4305 = vmatmul.mubr.bf16.gmra.mrb[0].mxu0 %v1113
      %v4306 = vpop.f32.mrb[0].mxu0
      %v4307 = vadd.f32 0.0, %v4306
      %v4308 = vpop.f32.mrb[0].mxu0
      %v4309 = vpop.f32.mrb[0].mxu0
      %v4310 = vadd.f32 0.0, %v4309
      %v4311 = vpop.f32.mrb[0].mxu0
      %4312 = vmatprep.mubr.bf16.mxu0 0
      %4313 = vmatmul.mubr.bf16.gmra.mrb[0].mxu0 %v1116
      %v4314 = vpop.f32.mrb[0].mxu0
      %v4315 = vadd.f32 0.0, %v4314
      %v4316 = vpop.f32.mrb[0].mxu0
      %v4317 = vpop.f32.mrb[0].mxu0
      %v4318 = vadd.f32 0.0, %v4317
      %v4319 = vpop.f32.mrb[0].mxu0
      %4320 = vmatprep.mubr.bf16.mxu0 0
      %4321 = vmatmul.mubr.bf16.gmra.mrb[0].mxu0 %v1119
      %v4322 = vpop.f32.mrb[0].mxu0
      %v4323 = vadd.f32 0.0, %v4322
      %v4324 = vpop.f32.mrb[0].mxu0
      %v4325 = vpop.f32.mrb[0].mxu0
      %v4326 = vadd.f32 0.0, %v4325
      %v4327 = vpop.f32.mrb[0].mxu0
      %4328 = vdwg.mxu0
      %v4329 = vpack.c.bf16 %v4206, %v4203
      %v4330 = vpack.c.bf16 %v4214, %v4211
      %v4331 = vpack.c.bf16 %v4222, %v4219
      %v4332 = vpack.c.bf16 %v4230, %v4227
      %v4333 = vpack.c.bf16 %v4238, %v4235
      %v4334 = vpack.c.bf16 %v4246, %v4243
      %v4335 = vpack.c.bf16 %v4254, %v4251
      %v4336 = vpack.c.bf16 %v4262, %v4259
      %v4337 = vpack.c.bf16 %v4270, %v4267
      %v4338 = vpack.c.bf16 %v4278, %v4275
      %v4339 = vpack.c.bf16 %v4286, %v4283
      %v4340 = vpack.c.bf16 %v4294, %v4291
      %v4341 = vpack.c.bf16 %v4302, %v4299
      %v4342 = vpack.c.bf16 %v4310, %v4307
      %v4343 = vpack.c.bf16 %v4318, %v4315
      %v4344 = vpack.c.bf16 %v4326, %v4323
      %v4361 = vunpack.c.l.b16 %v4329
      %v4362 = vunpack.c.h.b16 %v4329
      %v4363 = vunpack.c.l.b16 %v4330
      %v4364 = vunpack.c.h.b16 %v4330
      %v4365 = vunpack.c.l.b16 %v4331
      %v4366 = vunpack.c.h.b16 %v4331
      %v4367 = vunpack.c.l.b16 %v4332
      %v4368 = vunpack.c.h.b16 %v4332
      %v4369 = vunpack.c.l.b16 %v4333
      %v4370 = vunpack.c.h.b16 %v4333
      %v4371 = vunpack.c.l.b16 %v4334
      %v4372 = vunpack.c.h.b16 %v4334
      %v4373 = vunpack.c.l.b16 %v4335
      %v4374 = vunpack.c.h.b16 %v4335
      %v4375 = vunpack.c.l.b16 %v4336
      %v4376 = vunpack.c.h.b16 %v4336
      %v4377 = vunpack.c.l.b16 %v4337
      %v4378 = vunpack.c.h.b16 %v4337
      %v4379 = vunpack.c.l.b16 %v4338
      %v4380 = vunpack.c.h.b16 %v4338
      %v4381 = vunpack.c.l.b16 %v4339
      %v4382 = vunpack.c.h.b16 %v4339
      %v4383 = vunpack.c.l.b16 %v4340
      %v4384 = vunpack.c.h.b16 %v4340
      %v4385 = vunpack.c.l.b16 %v4341
      %v4386 = vunpack.c.h.b16 %v4341
      %v4387 = vunpack.c.l.b16 %v4342
      %v4388 = vunpack.c.h.b16 %v4342
      %v4389 = vunpack.c.l.b16 %v4343
      %v4390 = vunpack.c.h.b16 %v4343
      %v4391 = vunpack.c.l.b16 %v4344
      %v4392 = vunpack.c.h.b16 %v4344
      %v4393 = vpack.c.b16 %v4361, %v4361
      %v4394 = vpack.c.b16 %v4362, %v4362
      %v4395 = vpack.c.b16 %v4363, %v4363
      %v4396 = vpack.c.b16 %v4364, %v4364
      %v4397 = vpack.c.b16 %v4365, %v4365
      %v4398 = vpack.c.b16 %v4366, %v4366
      %v4399 = vpack.c.b16 %v4367, %v4367
      %v4400 = vpack.c.b16 %v4368, %v4368
      %v4401 = vpack.c.b16 %v4369, %v4369
      %v4402 = vpack.c.b16 %v4370, %v4370
      %v4403 = vpack.c.b16 %v4371, %v4371
      %v4404 = vpack.c.b16 %v4372, %v4372
      %v4405 = vpack.c.b16 %v4373, %v4373
      %v4406 = vpack.c.b16 %v4374, %v4374
      %v4407 = vpack.c.b16 %v4375, %v4375
      %v4408 = vpack.c.b16 %v4376, %v4376
      %v4409 = vpack.c.b16 %v4377, %v4377
      %v4410 = vpack.c.b16 %v4378, %v4378
      %v4411 = vpack.c.b16 %v4379, %v4379
      %v4412 = vpack.c.b16 %v4380, %v4380
      %v4413 = vpack.c.b16 %v4381, %v4381
      %v4414 = vpack.c.b16 %v4382, %v4382
      %v4415 = vpack.c.b16 %v4383, %v4383
      %v4416 = vpack.c.b16 %v4384, %v4384
      %v4417 = vpack.c.b16 %v4385, %v4385
      %v4418 = vpack.c.b16 %v4386, %v4386
      %v4419 = vpack.c.b16 %v4387, %v4387
      %v4420 = vpack.c.b16 %v4388, %v4388
      %v4421 = vpack.c.b16 %v4389, %v4389
      %v4422 = vpack.c.b16 %v4390, %v4390
      %v4423 = vpack.c.b16 %v4391, %v4391
      %v4424 = vpack.c.b16 %v4392, %v4392
      %s4457 = scalar_lea.vmem %s374, 384
      %4458 = vst.msk [vmem:[%s4457] sm:$0xf] %vm1410, %v4393
      %4459 = vst.msk [vmem:[%s4457 + $0x4] sm:$0xf] %vm1410, %v4394
      %4460 = vst.msk [vmem:[%s4457 + $0x8] sm:$0xf] %vm1410, %v4395
      %4461 = vst.msk [vmem:[%s4457 + $0xc] sm:$0xf] %vm1410, %v4396
      %4462 = vst.msk [vmem:[%s4457 + $0x10] sm:$0xf] %vm1410, %v4397
      %4463 = vst.msk [vmem:[%s4457 + $0x14] sm:$0xf] %vm1410, %v4398
      %4464 = vst.msk [vmem:[%s4457 + $0x18] sm:$0xf] %vm1410, %v4399
      %4465 = vst.msk [vmem:[%s4457 + $0x1c] sm:$0xf] %vm1410, %v4400
      %4466 = vst.msk [vmem:[%s4457 + $0x20] sm:$0xf] %vm1410, %v4401
      %4467 = vst.msk [vmem:[%s4457 + $0x24] sm:$0xf] %vm1410, %v4402
      %4468 = vst.msk [vmem:[%s4457 + $0x28] sm:$0xf] %vm1410, %v4403
      %4469 = vst.msk [vmem:[%s4457 + $0x2c] sm:$0xf] %vm1410, %v4404
      %4470 = vst.msk [vmem:[%s4457 + $0x30] sm:$0xf] %vm1410, %v4405
      %4471 = vst.msk [vmem:[%s4457 + $0x34] sm:$0xf] %vm1410, %v4406
      %4472 = vst.msk [vmem:[%s4457 + $0x38] sm:$0xf] %vm1410, %v4407
      %4473 = vst.msk [vmem:[%s4457 + $0x3c] sm:$0xf] %vm1410, %v4408
      %4474 = vst.msk [vmem:[%s4457 + $0x40] sm:$0xf] %vm1410, %v4409
      %4475 = vst.msk [vmem:[%s4457 + $0x44] sm:$0xf] %vm1410, %v4410
      %4476 = vst.msk [vmem:[%s4457 + $0x48] sm:$0xf] %vm1410, %v4411
      %4477 = vst.msk [vmem:[%s4457 + $0x4c] sm:$0xf] %vm1410, %v4412
      %4478 = vst.msk [vmem:[%s4457 + $0x50] sm:$0xf] %vm1410, %v4413
      %4479 = vst.msk [vmem:[%s4457 + $0x54] sm:$0xf] %vm1410, %v4414
      %4480 = vst.msk [vmem:[%s4457 + $0x58] sm:$0xf] %vm1410, %v4415
      %4481 = vst.msk [vmem:[%s4457 + $0x5c] sm:$0xf] %vm1410, %v4416
      %4482 = vst.msk [vmem:[%s4457 + $0x60] sm:$0xf] %vm1410, %v4417
      %4483 = vst.msk [vmem:[%s4457 + $0x64] sm:$0xf] %vm1410, %v4418
      %4484 = vst.msk [vmem:[%s4457 + $0x68] sm:$0xf] %vm1410, %v4419
      %4485 = vst.msk [vmem:[%s4457 + $0x6c] sm:$0xf] %vm1410, %v4420
      %4486 = vst.msk [vmem:[%s4457 + $0x70] sm:$0xf] %vm1410, %v4421
      %4487 = vst.msk [vmem:[%s4457 + $0x74] sm:$0xf] %vm1410, %v4422
      %4488 = vst.msk [vmem:[%s4457 + $0x78] sm:$0xf] %vm1410, %v4423
      %4489 = vst.msk [vmem:[%s4457 + $0x7c] sm:$0xf] %vm1410, %v4424
      %s4490 = scalar_lea.vmem %s6, 48
      %v4491 = vld [vmem:[%s4490] sm:$0xf]
      %v4492 = vld [vmem:[%s4490 + $0x4] sm:$0xf]
      %v4493 = vld [vmem:[%s4490 + $0x8] sm:$0xf]
      %v4494 = vld [vmem:[%s4490 + $0xc] sm:$0xf]
      %v4499 = vunpack.c.l.b16 %v4491
      %v4500 = vunpack.c.l.b16 %v4492
      %v4501 = vunpack.c.l.b16 %v4493
      %v4502 = vunpack.c.l.b16 %v4494
      %v4503 = vpack.c.b16 %v4500, %v4499
      %v4504 = vpack.c.b16 %v4502, %v4501
      %4507 = vmatprep.subr.bf16.mxu0 0
      %4508 = vmatpush1.bf16.msra.mxu0 %v4503
      %4509 = vmatprep.subr.bf16.mxu0 0
      %4510 = vmatpush1.bf16.msra.mxu0 %v4504
      %4511 = vmatprep.subr.bf16.mxu0 0
      %4512 = vmatpush1.bf16.msra.mxu0 0
      %4513 = vmatprep.subr.bf16.mxu0 0
      %4514 = vmatpush1.bf16.msra.mxu0 0
      %4515 = vmatprep.subr.bf16.mxu0 0
      %4516 = vmatpush1.bf16.msra.mxu0 0
      %4517 = vmatprep.subr.bf16.mxu0 0
      %4518 = vmatpush1.bf16.msra.mxu0 0
      %4519 = vmatprep.subr.bf16.mxu0 0
      %4520 = vmatpush1.bf16.msra.mxu0 0
      %4521 = vmatprep.subr.bf16.mxu0 0
      %4522 = vmatpush1.bf16.msra.mxu0 0
      %4523 = vmatprep.subr.bf16.mxu0 0
      %4524 = vmatpush1.bf16.msra.mxu0 0
      %4525 = vmatprep.subr.bf16.mxu0 0
      %4526 = vmatpush1.bf16.msra.mxu0 0
      %4527 = vmatprep.subr.bf16.mxu0 0
      %4528 = vmatpush1.bf16.msra.mxu0 0
      %4529 = vmatprep.subr.bf16.mxu0 0
      %4530 = vmatpush1.bf16.msra.mxu0 0
      %4531 = vmatprep.subr.bf16.mxu0 0
      %4532 = vmatpush1.bf16.msra.mxu0 0
      %4533 = vmatprep.subr.bf16.mxu0 0
      %4534 = vmatpush1.bf16.msra.mxu0 0
      %4535 = vmatprep.subr.bf16.mxu0 0
      %4536 = vmatpush1.bf16.msra.mxu0 0
      %4537 = vmatprep.subr.bf16.mxu0 0
      %4538 = vmatpush1.bf16.msra.mxu0 0
      %4539 = vmatprep.mubr.bf16.mxu0 0
      %4540 = vmatmul.mubr.bf16.gmra.mrb[0].mxu0 %v1074
      %v4541 = vpop.f32.mrb[0].mxu0
      %v4542 = vadd.f32 0.0, %v4541
      %v4543 = vpop.f32.mrb[0].mxu0
      %v4544 = vpop.f32.mrb[0].mxu0
      %v4545 = vadd.f32 0.0, %v4544
      %v4546 = vpop.f32.mrb[0].mxu0
      %4547 = vmatprep.mubr.bf16.mxu0 0
      %4548 = vmatmul.mubr.bf16.gmra.mrb[0].mxu0 %v1077
      %v4549 = vpop.f32.mrb[0].mxu0
      %v4550 = vadd.f32 0.0, %v4549
      %v4551 = vpop.f32.mrb[0].mxu0
      %v4552 = vpop.f32.mrb[0].mxu0
      %v4553 = vadd.f32 0.0, %v4552
      %v4554 = vpop.f32.mrb[0].mxu0
      %4555 = vmatprep.mubr.bf16.mxu0 0
      %4556 = vmatmul.mubr.bf16.gmra.mrb[0].mxu0 %v1080
      %v4557 = vpop.f32.mrb[0].mxu0
      %v4558 = vadd.f32 0.0, %v4557
      %v4559 = vpop.f32.mrb[0].mxu0
      %v4560 = vpop.f32.mrb[0].mxu0
      %v4561 = vadd.f32 0.0, %v4560
      %v4562 = vpop.f32.mrb[0].mxu0
      %4563 = vmatprep.mubr.bf16.mxu0 0
      %4564 = vmatmul.mubr.bf16.gmra.mrb[0].mxu0 %v1083
      %v4565 = vpop.f32.mrb[0].mxu0
      %v4566 = vadd.f32 0.0, %v4565
      %v4567 = vpop.f32.mrb[0].mxu0
      %v4568 = vpop.f32.mrb[0].mxu0
      %v4569 = vadd.f32 0.0, %v4568
      %v4570 = vpop.f32.mrb[0].mxu0
      %4571 = vmatprep.mubr.bf16.mxu0 0
      %4572 = vmatmul.mubr.bf16.gmra.mrb[0].mxu0 %v1086
      %v4573 = vpop.f32.mrb[0].mxu0
      %v4574 = vadd.f32 0.0, %v4573
      %v4575 = vpop.f32.mrb[0].mxu0
      %v4576 = vpop.f32.mrb[0].mxu0
      %v4577 = vadd.f32 0.0, %v4576
      %v4578 = vpop.f32.mrb[0].mxu0
      %4579 = vmatprep.mubr.bf16.mxu0 0
      %4580 = vmatmul.mubr.bf16.gmra.mrb[0].mxu0 %v1089
      %v4581 = vpop.f32.mrb[0].mxu0
      %v4582 = vadd.f32 0.0, %v4581
      %v4583 = vpop.f32.mrb[0].mxu0
      %v4584 = vpop.f32.mrb[0].mxu0
      %v4585 = vadd.f32 0.0, %v4584
      %v4586 = vpop.f32.mrb[0].mxu0
      %4587 = vmatprep.mubr.bf16.mxu0 0
      %4588 = vmatmul.mubr.bf16.gmra.mrb[0].mxu0 %v1092
      %v4589 = vpop.f32.mrb[0].mxu0
      %v4590 = vadd.f32 0.0, %v4589
      %v4591 = vpop.f32.mrb[0].mxu0
      %v4592 = vpop.f32.mrb[0].mxu0
      %v4593 = vadd.f32 0.0, %v4592
      %v4594 = vpop.f32.mrb[0].mxu0
      %4595 = vmatprep.mubr.bf16.mxu0 0
      %4596 = vmatmul.mubr.bf16.gmra.mrb[0].mxu0 %v1095
      %v4597 = vpop.f32.mrb[0].mxu0
      %v4598 = vadd.f32 0.0, %v4597
      %v4599 = vpop.f32.mrb[0].mxu0
      %v4600 = vpop.f32.mrb[0].mxu0
      %v4601 = vadd.f32 0.0, %v4600
      %v4602 = vpop.f32.mrb[0].mxu0
      %4603 = vmatprep.mubr.bf16.mxu0 0
      %4604 = vmatmul.mubr.bf16.gmra.mrb[0].mxu0 %v1098
      %v4605 = vpop.f32.mrb[0].mxu0
      %v4606 = vadd.f32 0.0, %v4605
      %v4607 = vpop.f32.mrb[0].mxu0
      %v4608 = vpop.f32.mrb[0].mxu0
      %v4609 = vadd.f32 0.0, %v4608
      %v4610 = vpop.f32.mrb[0].mxu0
      %4611 = vmatprep.mubr.bf16.mxu0 0
      %4612 = vmatmul.mubr.bf16.gmra.mrb[0].mxu0 %v1101
      %v4613 = vpop.f32.mrb[0].mxu0
      %v4614 = vadd.f32 0.0, %v4613
      %v4615 = vpop.f32.mrb[0].mxu0
      %v4616 = vpop.f32.mrb[0].mxu0
      %v4617 = vadd.f32 0.0, %v4616
      %v4618 = vpop.f32.mrb[0].mxu0
      %4619 = vmatprep.mubr.bf16.mxu0 0
      %4620 = vmatmul.mubr.bf16.gmra.mrb[0].mxu0 %v1104
      %v4621 = vpop.f32.mrb[0].mxu0
      %v4622 = vadd.f32 0.0, %v4621
      %v4623 = vpop.f32.mrb[0].mxu0
      %v4624 = vpop.f32.mrb[0].mxu0
      %v4625 = vadd.f32 0.0, %v4624
      %v4626 = vpop.f32.mrb[0].mxu0
      %4627 = vmatprep.mubr.bf16.mxu0 0
      %4628 = vmatmul.mubr.bf16.gmra.mrb[0].mxu0 %v1107
      %v4629 = vpop.f32.mrb[0].mxu0
      %v4630 = vadd.f32 0.0, %v4629
      %v4631 = vpop.f32.mrb[0].mxu0
      %v4632 = vpop.f32.mrb[0].mxu0
      %v4633 = vadd.f32 0.0, %v4632
      %v4634 = vpop.f32.mrb[0].mxu0
      %4635 = vmatprep.mubr.bf16.mxu0 0
      %4636 = vmatmul.mubr.bf16.gmra.mrb[0].mxu0 %v1110
      %v4637 = vpop.f32.mrb[0].mxu0
      %v4638 = vadd.f32 0.0, %v4637
      %v4639 = vpop.f32.mrb[0].mxu0
      %v4640 = vpop.f32.mrb[0].mxu0
      %v4641 = vadd.f32 0.0, %v4640
      %v4642 = vpop.f32.mrb[0].mxu0
      %4643 = vmatprep.mubr.bf16.mxu0 0
      %4644 = vmatmul.mubr.bf16.gmra.mrb[0].mxu0 %v1113
      %v4645 = vpop.f32.mrb[0].mxu0
      %v4646 = vadd.f32 0.0, %v4645
      %v4647 = vpop.f32.mrb[0].mxu0
      %v4648 = vpop.f32.mrb[0].mxu0
      %v4649 = vadd.f32 0.0, %v4648
      %v4650 = vpop.f32.mrb[0].mxu0
      %4651 = vmatprep.mubr.bf16.mxu0 0
      %4652 = vmatmul.mubr.bf16.gmra.mrb[0].mxu0 %v1116
      %v4653 = vpop.f32.mrb[0].mxu0
      %v4654 = vadd.f32 0.0, %v4653
      %v4655 = vpop.f32.mrb[0].mxu0
      %v4656 = vpop.f32.mrb[0].mxu0
      %v4657 = vadd.f32 0.0, %v4656
      %v4658 = vpop.f32.mrb[0].mxu0
      %4659 = vmatprep.mubr.bf16.mxu0 0
      %4660 = vmatmul.mubr.bf16.gmra.mrb[0].mxu0 %v1119
      %v4661 = vpop.f32.mrb[0].mxu0
      %v4662 = vadd.f32 0.0, %v4661
      %v4663 = vpop.f32.mrb[0].mxu0
      %v4664 = vpop.f32.mrb[0].mxu0
      %v4665 = vadd.f32 0.0, %v4664
      %v4666 = vpop.f32.mrb[0].mxu0
      %4667 = vdwg.mxu0
      %v4668 = vpack.c.bf16 %v4545, %v4542
      %v4669 = vpack.c.bf16 %v4553, %v4550
      %v4670 = vpack.c.bf16 %v4561, %v4558
      %v4671 = vpack.c.bf16 %v4569, %v4566
      %v4672 = vpack.c.bf16 %v4577, %v4574
      %v4673 = vpack.c.bf16 %v4585, %v4582
      %v4674 = vpack.c.bf16 %v4593, %v4590
      %v4675 = vpack.c.bf16 %v4601, %v4598
      %v4676 = vpack.c.bf16 %v4609, %v4606
      %v4677 = vpack.c.bf16 %v4617, %v4614
      %v4678 = vpack.c.bf16 %v4625, %v4622
      %v4679 = vpack.c.bf16 %v4633, %v4630
      %v4680 = vpack.c.bf16 %v4641, %v4638
      %v4681 = vpack.c.bf16 %v4649, %v4646
      %v4682 = vpack.c.bf16 %v4657, %v4654
      %v4683 = vpack.c.bf16 %v4665, %v4662
      %v4700 = vunpack.c.l.b16 %v4668
      %v4701 = vunpack.c.h.b16 %v4668
      %v4702 = vunpack.c.l.b16 %v4669
      %v4703 = vunpack.c.h.b16 %v4669
      %v4704 = vunpack.c.l.b16 %v4670
      %v4705 = vunpack.c.h.b16 %v4670
      %v4706 = vunpack.c.l.b16 %v4671
      %v4707 = vunpack.c.h.b16 %v4671
      %v4708 = vunpack.c.l.b16 %v4672
      %v4709 = vunpack.c.h.b16 %v4672
      %v4710 = vunpack.c.l.b16 %v4673
      %v4711 = vunpack.c.h.b16 %v4673
      %v4712 = vunpack.c.l.b16 %v4674
      %v4713 = vunpack.c.h.b16 %v4674
      %v4714 = vunpack.c.l.b16 %v4675
      %v4715 = vunpack.c.h.b16 %v4675
      %v4716 = vunpack.c.l.b16 %v4676
      %v4717 = vunpack.c.h.b16 %v4676
      %v4718 = vunpack.c.l.b16 %v4677
      %v4719 = vunpack.c.h.b16 %v4677
      %v4720 = vunpack.c.l.b16 %v4678
      %v4721 = vunpack.c.h.b16 %v4678
      %v4722 = vunpack.c.l.b16 %v4679
      %v4723 = vunpack.c.h.b16 %v4679
      %v4724 = vunpack.c.l.b16 %v4680
      %v4725 = vunpack.c.h.b16 %v4680
      %v4726 = vunpack.c.l.b16 %v4681
      %v4727 = vunpack.c.h.b16 %v4681
      %v4728 = vunpack.c.l.b16 %v4682
      %v4729 = vunpack.c.h.b16 %v4682
      %v4730 = vunpack.c.l.b16 %v4683
      %v4731 = vunpack.c.h.b16 %v4683
      %v4732 = vpack.c.b16 %v4700, %v4700
      %v4733 = vpack.c.b16 %v4701, %v4701
      %v4734 = vpack.c.b16 %v4702, %v4702
      %v4735 = vpack.c.b16 %v4703, %v4703
      %v4736 = vpack.c.b16 %v4704, %v4704
      %v4737 = vpack.c.b16 %v4705, %v4705
      %v4738 = vpack.c.b16 %v4706, %v4706
      %v4739 = vpack.c.b16 %v4707, %v4707
      %v4740 = vpack.c.b16 %v4708, %v4708
      %v4741 = vpack.c.b16 %v4709, %v4709
      %v4742 = vpack.c.b16 %v4710, %v4710
      %v4743 = vpack.c.b16 %v4711, %v4711
      %v4744 = vpack.c.b16 %v4712, %v4712
      %v4745 = vpack.c.b16 %v4713, %v4713
      %v4746 = vpack.c.b16 %v4714, %v4714
      %v4747 = vpack.c.b16 %v4715, %v4715
      %v4748 = vpack.c.b16 %v4716, %v4716
      %v4749 = vpack.c.b16 %v4717, %v4717
      %v4750 = vpack.c.b16 %v4718, %v4718
      %v4751 = vpack.c.b16 %v4719, %v4719
      %v4752 = vpack.c.b16 %v4720, %v4720
      %v4753 = vpack.c.b16 %v4721, %v4721
      %v4754 = vpack.c.b16 %v4722, %v4722
      %v4755 = vpack.c.b16 %v4723, %v4723
      %v4756 = vpack.c.b16 %v4724, %v4724
      %v4757 = vpack.c.b16 %v4725, %v4725
      %v4758 = vpack.c.b16 %v4726, %v4726
      %v4759 = vpack.c.b16 %v4727, %v4727
      %v4760 = vpack.c.b16 %v4728, %v4728
      %v4761 = vpack.c.b16 %v4729, %v4729
      %v4762 = vpack.c.b16 %v4730, %v4730
      %v4763 = vpack.c.b16 %v4731, %v4731
      %s4796 = scalar_lea.vmem %s379, 384
      %4797 = vst.msk [vmem:[%s4796] sm:$0xf] %vm1410, %v4732
      %4798 = vst.msk [vmem:[%s4796 + $0x4] sm:$0xf] %vm1410, %v4733
      %4799 = vst.msk [vmem:[%s4796 + $0x8] sm:$0xf] %vm1410, %v4734
      %4800 = vst.msk [vmem:[%s4796 + $0xc] sm:$0xf] %vm1410, %v4735
      %4801 = vst.msk [vmem:[%s4796 + $0x10] sm:$0xf] %vm1410, %v4736
      %4802 = vst.msk [vmem:[%s4796 + $0x14] sm:$0xf] %vm1410, %v4737
      %4803 = vst.msk [vmem:[%s4796 + $0x18] sm:$0xf] %vm1410, %v4738
      %4804 = vst.msk [vmem:[%s4796 + $0x1c] sm:$0xf] %vm1410, %v4739
      %4805 = vst.msk [vmem:[%s4796 + $0x20] sm:$0xf] %vm1410, %v4740
      %4806 = vst.msk [vmem:[%s4796 + $0x24] sm:$0xf] %vm1410, %v4741
      %4807 = vst.msk [vmem:[%s4796 + $0x28] sm:$0xf] %vm1410, %v4742
      %4808 = vst.msk [vmem:[%s4796 + $0x2c] sm:$0xf] %vm1410, %v4743
      %4809 = vst.msk [vmem:[%s4796 + $0x30] sm:$0xf] %vm1410, %v4744
      %4810 = vst.msk [vmem:[%s4796 + $0x34] sm:$0xf] %vm1410, %v4745
      %4811 = vst.msk [vmem:[%s4796 + $0x38] sm:$0xf] %vm1410, %v4746
      %4812 = vst.msk [vmem:[%s4796 + $0x3c] sm:$0xf] %vm1410, %v4747
      %4813 = vst.msk [vmem:[%s4796 + $0x40] sm:$0xf] %vm1410, %v4748
      %4814 = vst.msk [vmem:[%s4796 + $0x44] sm:$0xf] %vm1410, %v4749
      %4815 = vst.msk [vmem:[%s4796 + $0x48] sm:$0xf] %vm1410, %v4750
      %4816 = vst.msk [vmem:[%s4796 + $0x4c] sm:$0xf] %vm1410, %v4751
      %4817 = vst.msk [vmem:[%s4796 + $0x50] sm:$0xf] %vm1410, %v4752
      %4818 = vst.msk [vmem:[%s4796 + $0x54] sm:$0xf] %vm1410, %v4753
      %4819 = vst.msk [vmem:[%s4796 + $0x58] sm:$0xf] %vm1410, %v4754
      %4820 = vst.msk [vmem:[%s4796 + $0x5c] sm:$0xf] %vm1410, %v4755
      %4821 = vst.msk [vmem:[%s4796 + $0x60] sm:$0xf] %vm1410, %v4756
      %4822 = vst.msk [vmem:[%s4796 + $0x64] sm:$0xf] %vm1410, %v4757
      %4823 = vst.msk [vmem:[%s4796 + $0x68] sm:$0xf] %vm1410, %v4758
      %4824 = vst.msk [vmem:[%s4796 + $0x6c] sm:$0xf] %vm1410, %v4759
      %4825 = vst.msk [vmem:[%s4796 + $0x70] sm:$0xf] %vm1410, %v4760
      %4826 = vst.msk [vmem:[%s4796 + $0x74] sm:$0xf] %vm1410, %v4761
      %4827 = vst.msk [vmem:[%s4796 + $0x78] sm:$0xf] %vm1410, %v4762
      %4828 = vst.msk [vmem:[%s4796 + $0x7c] sm:$0xf] %vm1410, %v4763
      %s4829 = scalar_lea.vmem %s7, 48
      %v4830 = vld [vmem:[%s4829] sm:$0xf]
      %v4831 = vld [vmem:[%s4829 + $0x4] sm:$0xf]
      %v4832 = vld [vmem:[%s4829 + $0x8] sm:$0xf]
      %v4833 = vld [vmem:[%s4829 + $0xc] sm:$0xf]
      %v4838 = vunpack.c.l.b16 %v4830
      %v4839 = vunpack.c.l.b16 %v4831
      %v4840 = vunpack.c.l.b16 %v4832
      %v4841 = vunpack.c.l.b16 %v4833
      %v4842 = vpack.c.b16 %v4839, %v4838
      %v4843 = vpack.c.b16 %v4841, %v4840
      %4846 = vmatprep.subr.bf16.mxu0 0
      %4847 = vmatpush1.bf16.msra.mxu0 %v4842
      %4848 = vmatprep.subr.bf16.mxu0 0
      %4849 = vmatpush1.bf16.msra.mxu0 %v4843
      %4850 = vmatprep.subr.bf16.mxu0 0
      %4851 = vmatpush1.bf16.msra.mxu0 0
      %4852 = vmatprep.subr.bf16.mxu0 0
      %4853 = vmatpush1.bf16.msra.mxu0 0
      %4854 = vmatprep.subr.bf16.mxu0 0
      %4855 = vmatpush1.bf16.msra.mxu0 0
      %4856 = vmatprep.subr.bf16.mxu0 0
      %4857 = vmatpush1.bf16.msra.mxu0 0
      %4858 = vmatprep.subr.bf16.mxu0 0
      %4859 = vmatpush1.bf16.msra.mxu0 0
      %4860 = vmatprep.subr.bf16.mxu0 0
      %4861 = vmatpush1.bf16.msra.mxu0 0
      %4862 = vmatprep.subr.bf16.mxu0 0
      %4863 = vmatpush1.bf16.msra.mxu0 0
      %4864 = vmatprep.subr.bf16.mxu0 0
      %4865 = vmatpush1.bf16.msra.mxu0 0
      %4866 = vmatprep.subr.bf16.mxu0 0
      %4867 = vmatpush1.bf16.msra.mxu0 0
      %4868 = vmatprep.subr.bf16.mxu0 0
      %4869 = vmatpush1.bf16.msra.mxu0 0
      %4870 = vmatprep.subr.bf16.mxu0 0
      %4871 = vmatpush1.bf16.msra.mxu0 0
      %4872 = vmatprep.subr.bf16.mxu0 0
      %4873 = vmatpush1.bf16.msra.mxu0 0
      %4874 = vmatprep.subr.bf16.mxu0 0
      %4875 = vmatpush1.bf16.msra.mxu0 0
      %4876 = vmatprep.subr.bf16.mxu0 0
      %4877 = vmatpush1.bf16.msra.mxu0 0
      %4878 = vmatprep.mubr.bf16.mxu0 0
      %4879 = vmatmul.mubr.bf16.gmra.mrb[0].mxu0 %v1074
      %v4880 = vpop.f32.mrb[0].mxu0
      %v4881 = vadd.f32 0.0, %v4880
      %v4882 = vpop.f32.mrb[0].mxu0
      %v4883 = vpop.f32.mrb[0].mxu0
      %v4884 = vadd.f32 0.0, %v4883
      %v4885 = vpop.f32.mrb[0].mxu0
      %4886 = vmatprep.mubr.bf16.mxu0 0
      %4887 = vmatmul.mubr.bf16.gmra.mrb[0].mxu0 %v1077
      %v4888 = vpop.f32.mrb[0].mxu0
      %v4889 = vadd.f32 0.0, %v4888
      %v4890 = vpop.f32.mrb[0].mxu0
      %v4891 = vpop.f32.mrb[0].mxu0
      %v4892 = vadd.f32 0.0, %v4891
      %v4893 = vpop.f32.mrb[0].mxu0
      %4894 = vmatprep.mubr.bf16.mxu0 0
      %4895 = vmatmul.mubr.bf16.gmra.mrb[0].mxu0 %v1080
      %v4896 = vpop.f32.mrb[0].mxu0
      %v4897 = vadd.f32 0.0, %v4896
      %v4898 = vpop.f32.mrb[0].mxu0
      %v4899 = vpop.f32.mrb[0].mxu0
      %v4900 = vadd.f32 0.0, %v4899
      %v4901 = vpop.f32.mrb[0].mxu0
      %4902 = vmatprep.mubr.bf16.mxu0 0
      %4903 = vmatmul.mubr.bf16.gmra.mrb[0].mxu0 %v1083
      %v4904 = vpop.f32.mrb[0].mxu0
      %v4905 = vadd.f32 0.0, %v4904
      %v4906 = vpop.f32.mrb[0].mxu0
      %v4907 = vpop.f32.mrb[0].mxu0
      %v4908 = vadd.f32 0.0, %v4907
      %v4909 = vpop.f32.mrb[0].mxu0
      %4910 = vmatprep.mubr.bf16.mxu0 0
      %4911 = vmatmul.mubr.bf16.gmra.mrb[0].mxu0 %v1086
      %v4912 = vpop.f32.mrb[0].mxu0
      %v4913 = vadd.f32 0.0, %v4912
      %v4914 = vpop.f32.mrb[0].mxu0
      %v4915 = vpop.f32.mrb[0].mxu0
      %v4916 = vadd.f32 0.0, %v4915
      %v4917 = vpop.f32.mrb[0].mxu0
      %4918 = vmatprep.mubr.bf16.mxu0 0
      %4919 = vmatmul.mubr.bf16.gmra.mrb[0].mxu0 %v1089
      %v4920 = vpop.f32.mrb[0].mxu0
      %v4921 = vadd.f32 0.0, %v4920
      %v4922 = vpop.f32.mrb[0].mxu0
      %v4923 = vpop.f32.mrb[0].mxu0
      %v4924 = vadd.f32 0.0, %v4923
      %v4925 = vpop.f32.mrb[0].mxu0
      %4926 = vmatprep.mubr.bf16.mxu0 0
      %4927 = vmatmul.mubr.bf16.gmra.mrb[0].mxu0 %v1092
      %v4928 = vpop.f32.mrb[0].mxu0
      %v4929 = vadd.f32 0.0, %v4928
      %v4930 = vpop.f32.mrb[0].mxu0
      %v4931 = vpop.f32.mrb[0].mxu0
      %v4932 = vadd.f32 0.0, %v4931
      %v4933 = vpop.f32.mrb[0].mxu0
      %4934 = vmatprep.mubr.bf16.mxu0 0
      %4935 = vmatmul.mubr.bf16.gmra.mrb[0].mxu0 %v1095
      %v4936 = vpop.f32.mrb[0].mxu0
      %v4937 = vadd.f32 0.0, %v4936
      %v4938 = vpop.f32.mrb[0].mxu0
      %v4939 = vpop.f32.mrb[0].mxu0
      %v4940 = vadd.f32 0.0, %v4939
      %v4941 = vpop.f32.mrb[0].mxu0
      %4942 = vmatprep.mubr.bf16.mxu0 0
      %4943 = vmatmul.mubr.bf16.gmra.mrb[0].mxu0 %v1098
      %v4944 = vpop.f32.mrb[0].mxu0
      %v4945 = vadd.f32 0.0, %v4944
      %v4946 = vpop.f32.mrb[0].mxu0
      %v4947 = vpop.f32.mrb[0].mxu0
      %v4948 = vadd.f32 0.0, %v4947
      %v4949 = vpop.f32.mrb[0].mxu0
      %4950 = vmatprep.mubr.bf16.mxu0 0
      %4951 = vmatmul.mubr.bf16.gmra.mrb[0].mxu0 %v1101
      %v4952 = vpop.f32.mrb[0].mxu0
      %v4953 = vadd.f32 0.0, %v4952
      %v4954 = vpop.f32.mrb[0].mxu0
      %v4955 = vpop.f32.mrb[0].mxu0
      %v4956 = vadd.f32 0.0, %v4955
      %v4957 = vpop.f32.mrb[0].mxu0
      %4958 = vmatprep.mubr.bf16.mxu0 0
      %4959 = vmatmul.mubr.bf16.gmra.mrb[0].mxu0 %v1104
      %v4960 = vpop.f32.mrb[0].mxu0
      %v4961 = vadd.f32 0.0, %v4960
      %v4962 = vpop.f32.mrb[0].mxu0
      %v4963 = vpop.f32.mrb[0].mxu0
      %v4964 = vadd.f32 0.0, %v4963
      %v4965 = vpop.f32.mrb[0].mxu0
      %4966 = vmatprep.mubr.bf16.mxu0 0
      %4967 = vmatmul.mubr.bf16.gmra.mrb[0].mxu0 %v1107
      %v4968 = vpop.f32.mrb[0].mxu0
      %v4969 = vadd.f32 0.0, %v4968
      %v4970 = vpop.f32.mrb[0].mxu0
      %v4971 = vpop.f32.mrb[0].mxu0
      %v4972 = vadd.f32 0.0, %v4971
      %v4973 = vpop.f32.mrb[0].mxu0
      %4974 = vmatprep.mubr.bf16.mxu0 0
      %4975 = vmatmul.mubr.bf16.gmra.mrb[0].mxu0 %v1110
      %v4976 = vpop.f32.mrb[0].mxu0
      %v4977 = vadd.f32 0.0, %v4976
      %v4978 = vpop.f32.mrb[0].mxu0
      %v4979 = vpop.f32.mrb[0].mxu0
      %v4980 = vadd.f32 0.0, %v4979
      %v4981 = vpop.f32.mrb[0].mxu0
      %4982 = vmatprep.mubr.bf16.mxu0 0
      %4983 = vmatmul.mubr.bf16.gmra.mrb[0].mxu0 %v1113
      %v4984 = vpop.f32.mrb[0].mxu0
      %v4985 = vadd.f32 0.0, %v4984
      %v4986 = vpop.f32.mrb[0].mxu0
      %v4987 = vpop.f32.mrb[0].mxu0
      %v4988 = vadd.f32 0.0, %v4987
      %v4989 = vpop.f32.mrb[0].mxu0
      %4990 = vmatprep.mubr.bf16.mxu0 0
      %4991 = vmatmul.mubr.bf16.gmra.mrb[0].mxu0 %v1116
      %v4992 = vpop.f32.mrb[0].mxu0
      %v4993 = vadd.f32 0.0, %v4992
      %v4994 = vpop.f32.mrb[0].mxu0
      %v4995 = vpop.f32.mrb[0].mxu0
      %v4996 = vadd.f32 0.0, %v4995
      %v4997 = vpop.f32.mrb[0].mxu0
      %4998 = vmatprep.mubr.bf16.mxu0 0
      %4999 = vmatmul.mubr.bf16.gmra.mrb[0].mxu0 %v1119
      %v5000 = vpop.f32.mrb[0].mxu0
      %v5001 = vadd.f32 0.0, %v5000
      %v5002 = vpop.f32.mrb[0].mxu0
      %v5003 = vpop.f32.mrb[0].mxu0
      %v5004 = vadd.f32 0.0, %v5003
      %v5005 = vpop.f32.mrb[0].mxu0
      %5006 = vdwg.mxu0
      %v5007 = vpack.c.bf16 %v4884, %v4881
      %v5008 = vpack.c.bf16 %v4892, %v4889
      %v5009 = vpack.c.bf16 %v4900, %v4897
      %v5010 = vpack.c.bf16 %v4908, %v4905
      %v5011 = vpack.c.bf16 %v4916, %v4913
      %v5012 = vpack.c.bf16 %v4924, %v4921
      %v5013 = vpack.c.bf16 %v4932, %v4929
      %v5014 = vpack.c.bf16 %v4940, %v4937
      %v5015 = vpack.c.bf16 %v4948, %v4945
      %v5016 = vpack.c.bf16 %v4956, %v4953
      %v5017 = vpack.c.bf16 %v4964, %v4961
      %v5018 = vpack.c.bf16 %v4972, %v4969
      %v5019 = vpack.c.bf16 %v4980, %v4977
      %v5020 = vpack.c.bf16 %v4988, %v4985
      %v5021 = vpack.c.bf16 %v4996, %v4993
      %v5022 = vpack.c.bf16 %v5004, %v5001
      %v5039 = vunpack.c.l.b16 %v5007
      %v5040 = vunpack.c.h.b16 %v5007
      %v5041 = vunpack.c.l.b16 %v5008
      %v5042 = vunpack.c.h.b16 %v5008
      %v5043 = vunpack.c.l.b16 %v5009
      %v5044 = vunpack.c.h.b16 %v5009
      %v5045 = vunpack.c.l.b16 %v5010
      %v5046 = vunpack.c.h.b16 %v5010
      %v5047 = vunpack.c.l.b16 %v5011
      %v5048 = vunpack.c.h.b16 %v5011
      %v5049 = vunpack.c.l.b16 %v5012
      %v5050 = vunpack.c.h.b16 %v5012
      %v5051 = vunpack.c.l.b16 %v5013
      %v5052 = vunpack.c.h.b16 %v5013
      %v5053 = vunpack.c.l.b16 %v5014
      %v5054 = vunpack.c.h.b16 %v5014
      %v5055 = vunpack.c.l.b16 %v5015
      %v5056 = vunpack.c.h.b16 %v5015
      %v5057 = vunpack.c.l.b16 %v5016
      %v5058 = vunpack.c.h.b16 %v5016
      %v5059 = vunpack.c.l.b16 %v5017
      %v5060 = vunpack.c.h.b16 %v5017
      %v5061 = vunpack.c.l.b16 %v5018
      %v5062 = vunpack.c.h.b16 %v5018
      %v5063 = vunpack.c.l.b16 %v5019
      %v5064 = vunpack.c.h.b16 %v5019
      %v5065 = vunpack.c.l.b16 %v5020
      %v5066 = vunpack.c.h.b16 %v5020
      %v5067 = vunpack.c.l.b16 %v5021
      %v5068 = vunpack.c.h.b16 %v5021
      %v5069 = vunpack.c.l.b16 %v5022
      %v5070 = vunpack.c.h.b16 %v5022
      %v5071 = vpack.c.b16 %v5039, %v5039
      %v5072 = vpack.c.b16 %v5040, %v5040
      %v5073 = vpack.c.b16 %v5041, %v5041
      %v5074 = vpack.c.b16 %v5042, %v5042
      %v5075 = vpack.c.b16 %v5043, %v5043
      %v5076 = vpack.c.b16 %v5044, %v5044
      %v5077 = vpack.c.b16 %v5045, %v5045
      %v5078 = vpack.c.b16 %v5046, %v5046
      %v5079 = vpack.c.b16 %v5047, %v5047
      %v5080 = vpack.c.b16 %v5048, %v5048
      %v5081 = vpack.c.b16 %v5049, %v5049
      %v5082 = vpack.c.b16 %v5050, %v5050
      %v5083 = vpack.c.b16 %v5051, %v5051
      %v5084 = vpack.c.b16 %v5052, %v5052
      %v5085 = vpack.c.b16 %v5053, %v5053
      %v5086 = vpack.c.b16 %v5054, %v5054
      %v5087 = vpack.c.b16 %v5055, %v5055
      %v5088 = vpack.c.b16 %v5056, %v5056
      %v5089 = vpack.c.b16 %v5057, %v5057
      %v5090 = vpack.c.b16 %v5058, %v5058
      %v5091 = vpack.c.b16 %v5059, %v5059
      %v5092 = vpack.c.b16 %v5060, %v5060
      %v5093 = vpack.c.b16 %v5061, %v5061
      %v5094 = vpack.c.b16 %v5062, %v5062
      %v5095 = vpack.c.b16 %v5063, %v5063
      %v5096 = vpack.c.b16 %v5064, %v5064
      %v5097 = vpack.c.b16 %v5065, %v5065
      %v5098 = vpack.c.b16 %v5066, %v5066
      %v5099 = vpack.c.b16 %v5067, %v5067
      %v5100 = vpack.c.b16 %v5068, %v5068
      %v5101 = vpack.c.b16 %v5069, %v5069
      %v5102 = vpack.c.b16 %v5070, %v5070
      %s5135 = scalar_lea.vmem %s384, 384
      %5136 = vst.msk [vmem:[%s5135] sm:$0xf] %vm1410, %v5071
      %5137 = vst.msk [vmem:[%s5135 + $0x4] sm:$0xf] %vm1410, %v5072
      %5138 = vst.msk [vmem:[%s5135 + $0x8] sm:$0xf] %vm1410, %v5073
      %5139 = vst.msk [vmem:[%s5135 + $0xc] sm:$0xf] %vm1410, %v5074
      %5140 = vst.msk [vmem:[%s5135 + $0x10] sm:$0xf] %vm1410, %v5075
      %5141 = vst.msk [vmem:[%s5135 + $0x14] sm:$0xf] %vm1410, %v5076
      %5142 = vst.msk [vmem:[%s5135 + $0x18] sm:$0xf] %vm1410, %v5077
      %5143 = vst.msk [vmem:[%s5135 + $0x1c] sm:$0xf] %vm1410, %v5078
      %5144 = vst.msk [vmem:[%s5135 + $0x20] sm:$0xf] %vm1410, %v5079
      %5145 = vst.msk [vmem:[%s5135 + $0x24] sm:$0xf] %vm1410, %v5080
      %5146 = vst.msk [vmem:[%s5135 + $0x28] sm:$0xf] %vm1410, %v5081
      %5147 = vst.msk [vmem:[%s5135 + $0x2c] sm:$0xf] %vm1410, %v5082
      %5148 = vst.msk [vmem:[%s5135 + $0x30] sm:$0xf] %vm1410, %v5083
      %5149 = vst.msk [vmem:[%s5135 + $0x34] sm:$0xf] %vm1410, %v5084
      %5150 = vst.msk [vmem:[%s5135 + $0x38] sm:$0xf] %vm1410, %v5085
      %5151 = vst.msk [vmem:[%s5135 + $0x3c] sm:$0xf] %vm1410, %v5086
      %5152 = vst.msk [vmem:[%s5135 + $0x40] sm:$0xf] %vm1410, %v5087
      %5153 = vst.msk [vmem:[%s5135 + $0x44] sm:$0xf] %vm1410, %v5088
      %5154 = vst.msk [vmem:[%s5135 + $0x48] sm:$0xf] %vm1410, %v5089
      %5155 = vst.msk [vmem:[%s5135 + $0x4c] sm:$0xf] %vm1410, %v5090
      %5156 = vst.msk [vmem:[%s5135 + $0x50] sm:$0xf] %vm1410, %v5091
      %5157 = vst.msk [vmem:[%s5135 + $0x54] sm:$0xf] %vm1410, %v5092
      %5158 = vst.msk [vmem:[%s5135 + $0x58] sm:$0xf] %vm1410, %v5093
      %5159 = vst.msk [vmem:[%s5135 + $0x5c] sm:$0xf] %vm1410, %v5094
      %5160 = vst.msk [vmem:[%s5135 + $0x60] sm:$0xf] %vm1410, %v5095
      %5161 = vst.msk [vmem:[%s5135 + $0x64] sm:$0xf] %vm1410, %v5096
      %5162 = vst.msk [vmem:[%s5135 + $0x68] sm:$0xf] %vm1410, %v5097
      %5163 = vst.msk [vmem:[%s5135 + $0x6c] sm:$0xf] %vm1410, %v5098
      %5164 = vst.msk [vmem:[%s5135 + $0x70] sm:$0xf] %vm1410, %v5099
      %5165 = vst.msk [vmem:[%s5135 + $0x74] sm:$0xf] %vm1410, %v5100
      %5166 = vst.msk [vmem:[%s5135 + $0x78] sm:$0xf] %vm1410, %v5101
      %5167 = vst.msk [vmem:[%s5135 + $0x7c] sm:$0xf] %vm1410, %v5102
      %p5168 = scmp.lt.s32.totalorder %s22, 1
      %s5169 = scalar_select %p5168, %s22, 1
      %s5170 = smul.addr %s5169, 128
      %s5171 = smul.addr %s5170, 4
      %s5172 = scalar_lea.vmem %s8, %s5171
      %p5173 = scmp.lt.s32.totalorder %s22, 1
      %s5174 = scalar_select %p5173, %s22, 1
      %s5175 = smul.addr %s5174, 128
      %s5176 = smul.addr %s5175, 4
      %s5177 = scalar_lea.vmem %s9, %s5176
      %p5178 = scmp.lt.s32.totalorder %s22, 1
      %s5179 = scalar_select %p5178, %s22, 1
      %s5180 = smul.addr %s5179, 128
      %s5181 = smul.addr %s5180, 4
      %s5182 = scalar_lea.vmem %s10, %s5181
      // Predicated region
      $region53: #{tpu_custom_call.1} parent=51 // pred_check
        %p5183 = pneg %p213
      $region54: #{tpu_custom_call.1} parent=51 // pred_check_branch
        %5185 = sbr.rel (%p5183) target = $region56
      $region55: #{tpu_custom_call.1} parent=51 // pred_region
        _
      $region56: #{tpu_custom_call.1} parent=51 // pred_fallthru
        _
      // Predicated region
      $region57: #{tpu_custom_call.1} parent=51 // pred_check
        %p5186 = pneg %p239
      $region58: #{tpu_custom_call.1} parent=51 // pred_check_branch
        %5188 = sbr.rel (%p5186) target = $region60
      $region59: #{tpu_custom_call.1} parent=51 // pred_region
        _
      $region60: #{tpu_custom_call.1} parent=51 // pred_fallthru
        _
      // Predicated region
      $region61: #{tpu_custom_call.1} parent=51 // pred_check
        %p5189 = pneg %p265
      $region62: #{tpu_custom_call.1} parent=51 // pred_check_branch
        %5191 = sbr.rel (%p5189) target = $region64
      $region63: #{tpu_custom_call.1} parent=51 // pred_region
        _
      $region64: #{tpu_custom_call.1} parent=51 // pred_fallthru
        _
    $region52: #{tpu_custom_call.1} parent=5 // pred_fallthru
      _
    %p5192 = scmp.le.s32.totalorder 2, %s17
    // Predicated region
    $region65: #{tpu_custom_call.1} parent=5 // pred_check
      %p5193 = pneg %p5192
    $region66: #{tpu_custom_call.1} parent=5 // pred_check_branch
      %5195 = sbr.rel (%p5193) target = $region68
    $region67: #{tpu_custom_call.1} parent=5 // pred_region
      %s5196 = ssub.s32 %s17, 2
      // Predicated region
      $region69: #{tpu_custom_call.1} parent=67 // pred_check
        %p5197 = pneg %p219
      $region70: #{tpu_custom_call.1} parent=67 // pred_check_branch
        %5199 = sbr.rel (%p5197) target = $region72
      $region71: #{tpu_custom_call.1} parent=67 // pred_region
        %p5200 = scmp.lt.s32.totalorder %s23, 1
        %s5201 = scalar_select %p5200, %s23, 1
        %s5202 = smul.addr %s5201, 128
        %s5203 = smul.addr %s5202, 4
        %s5204 = scalar_lea.vmem %s8, %s5203
      $region72: #{tpu_custom_call.1} parent=67 // pred_fallthru
        _
      // Predicated region
      $region73: #{tpu_custom_call.1} parent=67 // pred_check
        %p5205 = pneg %p245
      $region74: #{tpu_custom_call.1} parent=67 // pred_check_branch
        %5207 = sbr.rel (%p5205) target = $region76
      $region75: #{tpu_custom_call.1} parent=67 // pred_region
        %p5208 = scmp.lt.s32.totalorder %s23, 1
        %s5209 = scalar_select %p5208, %s23, 1
        %s5210 = smul.addr %s5209, 128
        %s5211 = smul.addr %s5210, 4
        %s5212 = scalar_lea.vmem %s9, %s5211
      $region76: #{tpu_custom_call.1} parent=67 // pred_fallthru
        _
      // Predicated region
      $region77: #{tpu_custom_call.1} parent=67 // pred_check
        %p5213 = pneg %p271
      $region78: #{tpu_custom_call.1} parent=67 // pred_check_branch
        %5215 = sbr.rel (%p5213) target = $region80
      $region79: #{tpu_custom_call.1} parent=67 // pred_region
        %p5216 = scmp.lt.s32.totalorder %s23, 1
        %s5217 = scalar_select %p5216, %s23, 1
        %s5218 = smul.addr %s5217, 128
        %s5219 = smul.addr %s5218, 4
        %s5220 = scalar_lea.vmem %s10, %s5219
      $region80: #{tpu_custom_call.1} parent=67 // pred_fallthru
        _
    $region68: #{tpu_custom_call.1} parent=5 // pred_fallthru
      _
  $region6: #{tpu_custom_call.1} parent=0 // loop_footer
    %s21 = sadd.s32 1, %s17
  $region7: #{tpu_custom_call.1} parent=0 // loop_footer_branch
    %16 = sbr.rel target = $region3
  $region8: #{tpu_custom_call.1} parent=0 // loop_exit
    _

</llo_original>
